<compile_context>
chip_gen: v7x
topology: tpu7x:2x2x1
jax: 0.10.0
libtpu: 0.0.40
codegen_flags: <defaults>
</compile_context>

<pallas_src>
import jax
import jax.numpy as jnp
import numpy as np
from jax.experimental import pallas as pl
from jax.experimental.pallas import tpu as pltpu


# ------------------------------- helpers (ref) -------------------------------
def _softmax(x, axis):
  m = jnp.max(x, axis=axis, keepdims=True)
  e = jnp.exp(x - m)
  return e / jnp.sum(e, axis=axis, keepdims=True)


def _sigmoid(x):
  return 1.0 / (1.0 + jnp.exp(-x))


# --------------------------------- kernel ------------------------------------
def _ocn_kernel(o_ref, q_ref, oadd_ref, qadd_ref, pairmask_ref,
                tri1_ref, tri2_ref, tri3_ref, va_ref,
                wc_ref, wg01_ref, wg2_ref, wp_ref, wf_ref,
                mrg_b_ref, wg_b_ref, wp_b_ref, wf_b_ref,
                out_ref):
  f32 = jnp.float32
  o = o_ref[0]                                   # (C, Lo, H)
  q = q_ref[0]                                   # (C, Lq, H)
  oadd = oadd_ref[0]                             # (C, Lo, 1) additive mask
  qadd = qadd_ref[0]                             # (C, Lq, 1) additive mask
  pairmask = pairmask_ref[...]                   # (C*Lo, C*Lo) 1.0 iff i != j
  C, Lo, H = o.shape
  Lq = q.shape[1]
  CLo = C * Lo

  tri1, tri2, tri3 = tri1_ref[...], tri2_ref[...], tri3_ref[...]
  va = va_ref[...]
  wc_cat, wg01, wg2 = wc_ref[...], wg01_ref[...], wg2_ref[...]
  wp, wf_cat = wp_ref[...], wf_ref[...]
  mrg_b, wg_b, wp_b, wf_b = (mrg_b_ref[...], wg_b_ref[...],
                             wp_b_ref[...], wf_b_ref[...])

  def dot32(a, b):
    return jnp.dot(a, b, preferred_element_type=f32)

  def bmm(eq, a, b):
    return jnp.einsum(eq, a, b, preferred_element_type=f32)

  def softmax_last(x):
    m = jnp.max(x, axis=-1, keepdims=True)
    e = jnp.exp(x - m)
    return e * pl.reciprocal(jnp.sum(e, axis=-1, keepdims=True), approx=True)

  o2 = o.reshape(CLo, H)
  oaddf = oadd.reshape(CLo, 1)                   # (CLo, 1)

  # ---- stage 1: all C*(C-1) option-vs-option comparisons as ONE cross -------
  # ST[(i,k),(j,l)] = (W3*o[i,k]).o[j,l] + W1.o[j,l] + oadd[j,l]
  # (the W2 / self-mask terms are row-constant and cancel under the per-block
  #  softmax over l, so they are dropped exactly; the rank-1 column term is
  #  folded into the matmul via one extra contraction lane.)
  p1f = jnp.sum(o2 * tri1[0:1, :], axis=-1, keepdims=True)          # (CLo, 1)
  lhs1 = jnp.concatenate([o2 * tri1[2:3, :], jnp.ones((CLo, 1), f32)], axis=-1)
  rhs1 = jnp.concatenate([o2, p1f + oaddf], axis=-1)
  ST = bmm("kh,lh->kl", lhs1, rhs1)                                  # (CLo, CLo)

  # per-(i,j)-block softmax over the l ("other option") axis
  m_full = jnp.concatenate(
      [jnp.broadcast_to(
          jnp.max(ST[:, j * Lo:(j + 1) * Lo], axis=-1, keepdims=True), (CLo, Lo))
       for j in range(C)], axis=-1)
  e1 = jnp.exp(ST - m_full)
  d_full = jnp.concatenate(
      [jnp.broadcast_to(
          jnp.sum(e1[:, j * Lo:(j + 1) * Lo], axis=-1, keepdims=True), (CLo, Lo))
       for j in range(C)], axis=-1)
  attT = e1 * pl.reciprocal(d_full, approx=True) * pairmask          # zero i==j
  olk_sum2 = dot32(attT, o2)                     # (CLo, H) = sum_{j!=i} olk_ij

  # ---- merge: Wc_self + sum_j Wc(...) fused into one (64,96)@(96,32) --------
  mrg_in = jnp.concatenate([o2, olk_sum2, o2 * olk_sum2], axis=-1)   # (CLo, 3H)
  OCK2 = jnp.tanh(dot32(mrg_in, wc_cat) + mrg_b)                     # (CLo, H)
  OCK = OCK2.reshape(C, Lo, H)

  # attention-pooled question + gate
  aq = jnp.sum(q * va, axis=-1, keepdims=True) + qadd                # (C, Lq, 1)
  aqm = jnp.max(aq, axis=1, keepdims=True)
  ae = jnp.exp(aq - aqm)
  Aq = ae * pl.reciprocal(jnp.sum(ae, axis=1, keepdims=True), approx=True)
  Qv = jnp.sum(q * Aq, axis=1)                                       # (C, H)
  qterm = dot32(Qv, wg2)                                             # (C, H)

  gpre = (dot32(jnp.concatenate([o2, OCK2], axis=-1), wg01) + wg_b
          ).reshape(C, Lo, H) + qterm[:, None, :]
  G = pl.reciprocal(1.0 + jnp.exp(-gpre), approx=True)               # sigmoid
  merged = OCK + G * (o - OCK)                                       # (C, Lo, H)
  m2 = merged.reshape(CLo, H)

  # ---- co-attention (question re-reads the merged option) -------------------
  p1q = jnp.sum(q * tri2[0:1, :], axis=-1, keepdims=True)            # (C, Lq, 1)
  p2m = jnp.sum(merged * tri2[1:2, :], axis=-1, keepdims=True)       # (C, Lo, 1)
  lhs2 = jnp.concatenate([q * tri2[2:3, :], jnp.ones((C, Lq, 1), f32)], axis=-1)
  rhs2 = jnp.concatenate([merged, p2m + oadd], axis=-1)
  A2 = bmm("clh,ckh->clk", lhs2, rhs2) + (p1q + qadd)                # (C, Lq, Lo)

  OA = bmm("clk,ckh->clh", softmax_last(A2), merged)                 # (C, Lq, H)
  APKT = softmax_last(jnp.swapaxes(A2, 1, 2))                        # (C, Lo, Lq)
  POAA = bmm("ckl,clh->ckh", APKT,
             jnp.concatenate([q, OA], axis=-1))                      # (C, Lo, 2H)

  OPK2 = jnp.maximum(
      dot32(jnp.concatenate([m2, POAA.reshape(CLo, 2 * H)], axis=-1), wp)
      + wp_b, 0.0)                                                   # (CLo, H)
  OPK = OPK2.reshape(C, Lo, H)

  # ---- self-attention --------------------------------------------------------
  ps1 = jnp.sum(OPK * tri3[0:1, :], axis=-1, keepdims=True)          # (C, Lo, 1)
  lhs3 = jnp.concatenate([OPK, jnp.ones((C, Lo, 1), f32)], axis=-1)
  rhs3 = jnp.concatenate([OPK * tri3[2:3, :], ps1 + oadd], axis=-1)
  A3T = bmm("ckh,clh->ckl", lhs3, rhs3)                              # (C, Lo, Lo)
  OSK2 = bmm("ckl,clh->ckh", softmax_last(A3T), OPK).reshape(CLo, H)

  # (OPK - OSK) term folded into wf_cat in the wrapper
  fin = jnp.maximum(
      dot32(jnp.concatenate([OPK2, OSK2, OPK2 * OSK2], axis=-1), wf_cat)
      + wf_b, 0.0)                                                   # (CLo, H)

  # torch.max(candidates, dim=2): max over the option sequence -> (C, H)
  out_ref[0] = jnp.max(fin.reshape(C, Lo, H), axis=1)


def option_compare_cell(encoded_o, encoded_q, option_mask, question_mask, params):
  B, C, Lo, H = encoded_o.shape
  f32 = jnp.float32

  wcs, wc, wg, wf = params["wcs_w"], params["wc_w"], params["wg_w"], params["wf_w"]

  # ---- wrapper-side weight folds (done once, zero kernel cost) --------------
  wc_cat = jnp.concatenate(
      [wcs + (C - 1) * wc[:H], -wc[:H], wc[H:]], axis=0)             # (3H, H)
  wf_cat = jnp.concatenate(
      [wf[:H] + wf[2 * H:3 * H], wf[H:2 * H] - wf[2 * H:3 * H], wf[3 * H:]],
      axis=0)                                                        # (3H, H)
  mrg_b = params["wcs_b"] + (C - 1) * params["wc_b"]                 # (1, H)

  # additive masks in "keepdims" form; the pair mask zeroes i==j blocks
  oadd = ((1.0 - option_mask) * -10000.0).astype(f32)[..., None]     # (B,C,Lo,1)
  qadd = ((1.0 - question_mask) * -10000.0).astype(f32)[..., None]   # (B,C,Lq,1)
  pairmask = 1.0 - jnp.kron(jnp.eye(C, dtype=f32),
                            jnp.ones((Lo, Lo), f32))                 # (CLo, CLo)

  weights = (params["tri1_w"], params["tri2_w"], params["tri3_w"], params["va_w"],
             wc_cat, wg[:2 * H], wg[2 * H:], params["wp_w"], wf_cat,
             mrg_b, params["wg_b"], params["wp_b"], params["wf_b"])

  def batched(x):
    nd = x.ndim
    return pl.BlockSpec((1,) + tuple(x.shape[1:]),
                        lambda b, _n=nd: (b,) + (0,) * (_n - 1))

  def replicated(x):
    nd = x.ndim
    return pl.BlockSpec(tuple(x.shape), lambda b, _n=nd: (0,) * _n)

  batched_inputs = (encoded_o, encoded_q, oadd, qadd)
  in_specs = ([batched(x) for x in batched_inputs]
              + [replicated(pairmask)]
              + [replicated(w) for w in weights])

  return pl.pallas_call(
      _ocn_kernel,
      out_shape=jax.ShapeDtypeStruct((B, C, H), jnp.float32),
      grid=(B,),
      in_specs=in_specs,
      out_specs=pl.BlockSpec((1, C, H), lambda b: (b, 0, 0)),
      compiler_params=pltpu.CompilerParams(dimension_semantics=("parallel",)),
  )(*batched_inputs, pairmask, *weights)


# ----------------------- deterministic parameter init -----------------------
def init_params(key, H):
  ks = iter(jax.random.split(key, 24))

  def nrm(shape, scale):
    return (scale * jax.random.normal(next(ks), shape)).astype(jnp.float32)

  p = {}
  for name in ("tri1", "tri2", "tri3"):
    p[name + "_w"] = nrm((3, H), 1.0 / (H ** 0.5))
    p[name + "_b"] = nrm((1, 2), 0.05)
  p["wcs_w"] = nrm((H, H), 1.0 / (H ** 0.5));            p["wcs_b"] = nrm((1, H), 0.05)
  p["wc_w"] = nrm((2 * H, H), 1.0 / ((2 * H) ** 0.5));   p["wc_b"] = nrm((1, H), 0.05)
  p["va_w"] = nrm((1, H), 1.0 / (H ** 0.5));             p["va_b"] = nrm((1, 1), 0.05)
  p["wg_w"] = nrm((3 * H, H), 1.0 / ((3 * H) ** 0.5));   p["wg_b"] = nrm((1, H), 0.05)
  p["wp_w"] = nrm((3 * H, H), 1.0 / ((3 * H) ** 0.5));   p["wp_b"] = nrm((1, H), 0.05)
  p["wf_w"] = nrm((4 * H, H), 1.0 / ((4 * H) ** 0.5));   p["wf_b"] = nrm((1, H), 0.05)
  return p


# ----------------------- plain-JAX reference (mirrors torch) ----------------
def _ref_trilinear(u, u_add, v, v_add, tw, tb):
  part1 = jnp.einsum("bld,d->bl", u, tw[0])[..., None] + tb[0, 0]
  part2 = (jnp.einsum("bld,d->bl", v, tw[1]) + tb[0, 1])[:, None, :]
  part3 = jnp.einsum("blk,bkd->bld", u * tw[2][None, None, :],
                     jnp.swapaxes(v, 1, 2))
  return part1 + part2 + part3 + u_add[:, :, None] + v_add[:, None, :]


def ref_forward(o, q, omask, qmask, p):
  B, C, Lo, H = o.shape
  o_add = (1.0 - omask) * -10000.0
  q_add = (1.0 - qmask) * -10000.0
  outs = []
  for i in range(C):
    o_i, q_i = o[:, i], q[:, i]
    om_i, qm_i = o_add[:, i], q_add[:, i]
    proj = o_i @ p["wcs_w"] + p["wcs_b"]
    for j in range(C):
      if j == i:
        continue
      A = _ref_trilinear(o[:, j], o_add[:, j], o_i, om_i, p["tri1_w"], p["tri1_b"])
      att = _softmax(A, axis=1)
      olk = jnp.einsum("blh,blk->bkh", o[:, j], att)
      OLK = jnp.concatenate([o_i - olk, o_i * olk], axis=-1)
      proj = proj + OLK @ p["wc_w"] + p["wc_b"]
    OCK = jnp.tanh(proj)
    aq = jnp.einsum("blh,h->bl", q_i, p["va_w"][0])[..., None] + p["va_b"] + qm_i[..., None]
    Aq = _softmax(aq, axis=1)
    Qv = jnp.einsum("blh,blo->boh", q_i, Aq)
    Qb = jnp.broadcast_to(Qv, (B, Lo, H))
    G = _sigmoid(jnp.concatenate([o_i, OCK, Qb], axis=-1) @ p["wg_w"] + p["wg_b"])
    merged = G * o_i + (1.0 - G) * OCK
    A2 = _ref_trilinear(q_i, qm_i, merged, om_i, p["tri2_w"], p["tri2_b"])
    ACK = _softmax(A2, axis=2)
    OA = jnp.einsum("blk,bkh->blh", ACK, merged)
    APK = _softmax(A2, axis=1)
    dOA = jnp.concatenate([q_i, OA], axis=-1)
    POAA = jnp.einsum("blh,blk->bkh", dOA, APK)
    OPK = jnp.maximum(jnp.concatenate([merged, POAA], axis=-1) @ p["wp_w"] + p["wp_b"], 0.0)
    A3 = _ref_trilinear(OPK, om_i, OPK, om_i, p["tri3_w"], p["tri3_b"])
    att3 = _softmax(A3, axis=1)
    OSK = jnp.einsum("blh,blk->bkh", OPK, att3)
    OFK = jnp.concatenate([OPK, OSK, OPK - OSK, OPK * OSK], axis=-1)
    fin = jnp.maximum(OFK @ p["wf_w"] + p["wf_b"], 0.0)
    outs.append(jnp.max(fin, axis=1))
  return jnp.stack(outs, axis=1)


if __name__ == "__main__":
  B, C, Lo, Lq, H = 2, 4, 16, 8, 32
  key = jax.random.PRNGKey(0)
  kp, ko, kq = jax.random.split(key, 3)
  params = init_params(kp, H)

  encoded_o = jax.random.normal(ko, (B, C, Lo, H), jnp.float32)
  encoded_q = jax.random.normal(kq, (B, C, Lq, H), jnp.float32)
  o_lens = jnp.array([[12, 16, 10, 14], [16, 8, 16, 11]], jnp.int32)
  q_lens = jnp.array([[6, 8, 5, 8], [8, 7, 4, 8]], jnp.int32)
  option_mask = (jnp.arange(Lo)[None, None, :] < o_lens[..., None]).astype(jnp.float32)
  question_mask = (jnp.arange(Lq)[None, None, :] < q_lens[..., None]).astype(jnp.float32)

  out = jax.jit(option_compare_cell)(encoded_o, encoded_q, option_mask,
                                     question_mask, params)
  out = jax.block_until_ready(out)
  assert out.shape == (B, C, H), out.shape

  ref = ref_forward(encoded_o, encoded_q, option_mask, question_mask, params)
  np.testing.assert_allclose(np.asarray(out), np.asarray(ref), rtol=2e-2, atol=2e-2)
  print("KERNEL_OK")
</pallas_src>

<mosaic_0001>
module attributes {stable_mosaic.version = 11 : i64} {
  func.func @_ocn_kernel(%arg0: i32, %arg1: memref<1x4x16x32xf32, #tpu.memory_space<vmem>>, %arg2: memref<1x4x8x32xf32, #tpu.memory_space<vmem>>, %arg3: memref<1x4x16x1xf32, #tpu.memory_space<vmem>>, %arg4: memref<1x4x8x1xf32, #tpu.memory_space<vmem>>, %arg5: memref<64x64xf32, #tpu.memory_space<vmem>>, %arg6: memref<3x32xf32, #tpu.memory_space<vmem>>, %arg7: memref<3x32xf32, #tpu.memory_space<vmem>>, %arg8: memref<3x32xf32, #tpu.memory_space<vmem>>, %arg9: memref<1x32xf32, #tpu.memory_space<vmem>>, %arg10: memref<96x32xf32, #tpu.memory_space<vmem>>, %arg11: memref<64x32xf32, #tpu.memory_space<vmem>>, %arg12: memref<32x32xf32, #tpu.memory_space<vmem>>, %arg13: memref<96x32xf32, #tpu.memory_space<vmem>>, %arg14: memref<96x32xf32, #tpu.memory_space<vmem>>, %arg15: memref<1x32xf32, #tpu.memory_space<vmem>>, %arg16: memref<1x32xf32, #tpu.memory_space<vmem>>, %arg17: memref<1x32xf32, #tpu.memory_space<vmem>>, %arg18: memref<1x32xf32, #tpu.memory_space<vmem>>, %arg19: memref<1x4x32xf32, #tpu.memory_space<vmem>>) attributes {dimension_semantics = [#tpu.dimension_semantics<parallel>], iteration_bounds = array<i64: 2>, scalar_prefetch = 0 : i64, scratch_operands = 0 : i64, tpu.core_type = #tpu.core_type<tc>, window_params = [{transform_indices = @transform_0, window_bounds = array<i64: 1, 4, 16, 32>}, {transform_indices = @transform_1, window_bounds = array<i64: 1, 4, 8, 32>}, {transform_indices = @transform_2, window_bounds = array<i64: 1, 4, 16, 1>}, {transform_indices = @transform_3, window_bounds = array<i64: 1, 4, 8, 1>}, {pipeline_mode = #tpu.pipeline_mode<synchronous>, transform_indices = @transform_4, window_bounds = array<i64: 64, 64>}, {pipeline_mode = #tpu.pipeline_mode<synchronous>, transform_indices = @transform_5, window_bounds = array<i64: 3, 32>}, {pipeline_mode = #tpu.pipeline_mode<synchronous>, transform_indices = @transform_6, window_bounds = array<i64: 3, 32>}, {pipeline_mode = #tpu.pipeline_mode<synchronous>, transform_indices = @transform_7, window_bounds = array<i64: 3, 32>}, {pipeline_mode = #tpu.pipeline_mode<synchronous>, transform_indices = @transform_8, window_bounds = array<i64: 1, 32>}, {pipeline_mode = #tpu.pipeline_mode<synchronous>, transform_indices = @transform_9, window_bounds = array<i64: 96, 32>}, {pipeline_mode = #tpu.pipeline_mode<synchronous>, transform_indices = @transform_10, window_bounds = array<i64: 64, 32>}, {pipeline_mode = #tpu.pipeline_mode<synchronous>, transform_indices = @transform_11, window_bounds = array<i64: 32, 32>}, {pipeline_mode = #tpu.pipeline_mode<synchronous>, transform_indices = @transform_12, window_bounds = array<i64: 96, 32>}, {pipeline_mode = #tpu.pipeline_mode<synchronous>, transform_indices = @transform_13, window_bounds = array<i64: 96, 32>}, {pipeline_mode = #tpu.pipeline_mode<synchronous>, transform_indices = @transform_14, window_bounds = array<i64: 1, 32>}, {pipeline_mode = #tpu.pipeline_mode<synchronous>, transform_indices = @transform_15, window_bounds = array<i64: 1, 32>}, {pipeline_mode = #tpu.pipeline_mode<synchronous>, transform_indices = @transform_16, window_bounds = array<i64: 1, 32>}, {pipeline_mode = #tpu.pipeline_mode<synchronous>, transform_indices = @transform_17, window_bounds = array<i64: 1, 32>}, {transform_indices = @transform_18, window_bounds = array<i64: 1, 4, 32>}]} {
    %c0 = arith.constant 0 : index
    %c0_0 = arith.constant 0 : index
    %c0_1 = arith.constant 0 : index
    %c0_2 = arith.constant 0 : index
    %0 = vector.load %arg1[%c0, %c0_0, %c0_1, %c0_2] : memref<1x4x16x32xf32, #tpu.memory_space<vmem>>, vector<1x4x16x32xf32>
    %1 = vector.shape_cast %0 : vector<1x4x16x32xf32> to vector<4x16x32xf32>
    %c0_3 = arith.constant 0 : index
    %c0_4 = arith.constant 0 : index
    %c0_5 = arith.constant 0 : index
    %c0_6 = arith.constant 0 : index
    %2 = vector.load %arg2[%c0_3, %c0_4, %c0_5, %c0_6] : memref<1x4x8x32xf32, #tpu.memory_space<vmem>>, vector<1x4x8x32xf32>
    %3 = vector.shape_cast %2 : vector<1x4x8x32xf32> to vector<4x8x32xf32>
    %c0_7 = arith.constant 0 : index
    %c0_8 = arith.constant 0 : index
    %c0_9 = arith.constant 0 : index
    %c0_10 = arith.constant 0 : index
    %4 = vector.load %arg3[%c0_7, %c0_8, %c0_9, %c0_10] : memref<1x4x16x1xf32, #tpu.memory_space<vmem>>, vector<1x4x16x1xf32>
    %5 = vector.shape_cast %4 : vector<1x4x16x1xf32> to vector<4x16x1xf32>
    %c0_11 = arith.constant 0 : index
    %c0_12 = arith.constant 0 : index
    %c0_13 = arith.constant 0 : index
    %c0_14 = arith.constant 0 : index
    %6 = vector.load %arg4[%c0_11, %c0_12, %c0_13, %c0_14] : memref<1x4x8x1xf32, #tpu.memory_space<vmem>>, vector<1x4x8x1xf32>
    %7 = vector.shape_cast %6 : vector<1x4x8x1xf32> to vector<4x8x1xf32>
    %c0_15 = arith.constant 0 : index
    %c0_16 = arith.constant 0 : index
    %8 = vector.load %arg5[%c0_15, %c0_16] : memref<64x64xf32, #tpu.memory_space<vmem>>, vector<64x64xf32>
    %c0_17 = arith.constant 0 : index
    %c0_18 = arith.constant 0 : index
    %9 = vector.load %arg6[%c0_17, %c0_18] : memref<3x32xf32, #tpu.memory_space<vmem>>, vector<3x32xf32>
    %c0_19 = arith.constant 0 : index
    %c0_20 = arith.constant 0 : index
    %10 = vector.load %arg7[%c0_19, %c0_20] : memref<3x32xf32, #tpu.memory_space<vmem>>, vector<3x32xf32>
    %c0_21 = arith.constant 0 : index
    %c0_22 = arith.constant 0 : index
    %11 = vector.load %arg8[%c0_21, %c0_22] : memref<3x32xf32, #tpu.memory_space<vmem>>, vector<3x32xf32>
    %c0_23 = arith.constant 0 : index
    %c0_24 = arith.constant 0 : index
    %12 = vector.load %arg9[%c0_23, %c0_24] : memref<1x32xf32, #tpu.memory_space<vmem>>, vector<1x32xf32>
    %c0_25 = arith.constant 0 : index
    %c0_26 = arith.constant 0 : index
    %13 = vector.load %arg10[%c0_25, %c0_26] : memref<96x32xf32, #tpu.memory_space<vmem>>, vector<96x32xf32>
    %c0_27 = arith.constant 0 : index
    %c0_28 = arith.constant 0 : index
    %14 = vector.load %arg11[%c0_27, %c0_28] : memref<64x32xf32, #tpu.memory_space<vmem>>, vector<64x32xf32>
    %c0_29 = arith.constant 0 : index
    %c0_30 = arith.constant 0 : index
    %15 = vector.load %arg12[%c0_29, %c0_30] : memref<32x32xf32, #tpu.memory_space<vmem>>, vector<32x32xf32>
    %c0_31 = arith.constant 0 : index
    %c0_32 = arith.constant 0 : index
    %16 = vector.load %arg13[%c0_31, %c0_32] : memref<96x32xf32, #tpu.memory_space<vmem>>, vector<96x32xf32>
    %c0_33 = arith.constant 0 : index
    %c0_34 = arith.constant 0 : index
    %17 = vector.load %arg14[%c0_33, %c0_34] : memref<96x32xf32, #tpu.memory_space<vmem>>, vector<96x32xf32>
    %c0_35 = arith.constant 0 : index
    %c0_36 = arith.constant 0 : index
    %18 = vector.load %arg15[%c0_35, %c0_36] : memref<1x32xf32, #tpu.memory_space<vmem>>, vector<1x32xf32>
    %c0_37 = arith.constant 0 : index
    %c0_38 = arith.constant 0 : index
    %19 = vector.load %arg16[%c0_37, %c0_38] : memref<1x32xf32, #tpu.memory_space<vmem>>, vector<1x32xf32>
    %c0_39 = arith.constant 0 : index
    %c0_40 = arith.constant 0 : index
    %20 = vector.load %arg17[%c0_39, %c0_40] : memref<1x32xf32, #tpu.memory_space<vmem>>, vector<1x32xf32>
    %c0_41 = arith.constant 0 : index
    %c0_42 = arith.constant 0 : index
    %21 = vector.load %arg18[%c0_41, %c0_42] : memref<1x32xf32, #tpu.memory_space<vmem>>, vector<1x32xf32>
    %22 = vector.shape_cast %1 : vector<4x16x32xf32> to vector<64x32xf32>
    %23 = vector.shape_cast %5 : vector<4x16x1xf32> to vector<64x1xf32>
    %24 = vector.extract_strided_slice %9 {offsets = [0, 0], sizes = [1, 32], strides = [1, 1]} : vector<3x32xf32> to vector<1x32xf32>
    %25 = vector.broadcast %24 : vector<1x32xf32> to vector<64x32xf32>
    %26 = arith.mulf %22, %25 : vector<64x32xf32>
    %cst = arith.constant dense<0.000000e+00> : vector<64xf32>
    %27 = vector.multi_reduction <add>, %26, %cst [1] : vector<64x32xf32> to vector<64xf32>
    %28 = vector.shape_cast %27 : vector<64xf32> to vector<64x1xf32>
    %29 = vector.extract_strided_slice %9 {offsets = [2, 0], sizes = [1, 32], strides = [1, 1]} : vector<3x32xf32> to vector<1x32xf32>
    %30 = vector.broadcast %29 : vector<1x32xf32> to vector<64x32xf32>
    %31 = arith.mulf %22, %30 : vector<64x32xf32>
    %cst_43 = arith.constant 1.000000e+00 : f32
    %32 = vector.broadcast %cst_43 : f32 to vector<64x1xf32>
    %33 = tpu.concatenate %31, %32 in 1 : vector<64x32xf32>, vector<64x1xf32> -> vector<64x33xf32>
    %34 = arith.addf %28, %23 : vector<64x1xf32>
    %35 = tpu.concatenate %22, %34 in 1 : vector<64x32xf32>, vector<64x1xf32> -> vector<64x33xf32>
    "tpu.trace_start"() <{level = 10 : i32, message = "kh,lh->kl"}> : () -> ()
    %cst_44 = arith.constant dense<0.000000e+00> : vector<64x64xf32>
    %36 = tpu.matmul %33, %35, %cst_44 {dimension_numbers = #tpu.dot_dimension_numbers<[1], [1], [0], [0], [0, 0, 1, 0], [], []>} : vector<64x33xf32>, vector<64x33xf32>, vector<64x64xf32> -> vector<64x64xf32>
    "tpu.trace_stop"() : () -> ()
    %37 = vector.extract_strided_slice %36 {offsets = [0, 0], sizes = [64, 16], strides = [1, 1]} : vector<64x64xf32> to vector<64x16xf32>
    %cst_45 = arith.constant dense<0xFF800000> : vector<64xf32>
    %38 = vector.multi_reduction <maximumf>, %37, %cst_45 [1] : vector<64x16xf32> to vector<64xf32>
    %39 = vector.shape_cast %38 : vector<64xf32> to vector<64x1xf32>
    %40 = vector.shape_cast %39 : vector<64x1xf32> to vector<64x1xf32>
    %41 = vector.broadcast %40 : vector<64x1xf32> to vector<64x16xf32>
    %42 = vector.extract_strided_slice %36 {offsets = [0, 16], sizes = [64, 16], strides = [1, 1]} : vector<64x64xf32> to vector<64x16xf32>
    %cst_46 = arith.constant dense<0xFF800000> : vector<64xf32>
    %43 = vector.multi_reduction <maximumf>, %42, %cst_46 [1] : vector<64x16xf32> to vector<64xf32>
    %44 = vector.shape_cast %43 : vector<64xf32> to vector<64x1xf32>
    %45 = vector.shape_cast %44 : vector<64x1xf32> to vector<64x1xf32>
    %46 = vector.broadcast %45 : vector<64x1xf32> to vector<64x16xf32>
    %47 = vector.extract_strided_slice %36 {offsets = [0, 32], sizes = [64, 16], strides = [1, 1]} : vector<64x64xf32> to vector<64x16xf32>
    %cst_47 = arith.constant dense<0xFF800000> : vector<64xf32>
    %48 = vector.multi_reduction <maximumf>, %47, %cst_47 [1] : vector<64x16xf32> to vector<64xf32>
    %49 = vector.shape_cast %48 : vector<64xf32> to vector<64x1xf32>
    %50 = vector.shape_cast %49 : vector<64x1xf32> to vector<64x1xf32>
    %51 = vector.broadcast %50 : vector<64x1xf32> to vector<64x16xf32>
    %52 = vector.extract_strided_slice %36 {offsets = [0, 48], sizes = [64, 16], strides = [1, 1]} : vector<64x64xf32> to vector<64x16xf32>
    %cst_48 = arith.constant dense<0xFF800000> : vector<64xf32>
    %53 = vector.multi_reduction <maximumf>, %52, %cst_48 [1] : vector<64x16xf32> to vector<64xf32>
    %54 = vector.shape_cast %53 : vector<64xf32> to vector<64x1xf32>
    %55 = vector.shape_cast %54 : vector<64x1xf32> to vector<64x1xf32>
    %56 = vector.broadcast %55 : vector<64x1xf32> to vector<64x16xf32>
    %57 = tpu.concatenate %41, %46, %51, %56 in 1 : vector<64x16xf32>, vector<64x16xf32>, vector<64x16xf32>, vector<64x16xf32> -> vector<64x64xf32>
    %58 = arith.subf %36, %57 : vector<64x64xf32>
    %59 = math.exp %58 : vector<64x64xf32>
    %60 = vector.extract_strided_slice %59 {offsets = [0, 0], sizes = [64, 16], strides = [1, 1]} : vector<64x64xf32> to vector<64x16xf32>
    %cst_49 = arith.constant dense<0.000000e+00> : vector<64xf32>
    %61 = vector.multi_reduction <add>, %60, %cst_49 [1] : vector<64x16xf32> to vector<64xf32>
    %62 = vector.shape_cast %61 : vector<64xf32> to vector<64x1xf32>
    %63 = vector.shape_cast %62 : vector<64x1xf32> to vector<64x1xf32>
    %64 = vector.broadcast %63 : vector<64x1xf32> to vector<64x16xf32>
    %65 = vector.extract_strided_slice %59 {offsets = [0, 16], sizes = [64, 16], strides = [1, 1]} : vector<64x64xf32> to vector<64x16xf32>
    %cst_50 = arith.constant dense<0.000000e+00> : vector<64xf32>
    %66 = vector.multi_reduction <add>, %65, %cst_50 [1] : vector<64x16xf32> to vector<64xf32>
    %67 = vector.shape_cast %66 : vector<64xf32> to vector<64x1xf32>
    %68 = vector.shape_cast %67 : vector<64x1xf32> to vector<64x1xf32>
    %69 = vector.broadcast %68 : vector<64x1xf32> to vector<64x16xf32>
    %70 = vector.extract_strided_slice %59 {offsets = [0, 32], sizes = [64, 16], strides = [1, 1]} : vector<64x64xf32> to vector<64x16xf32>
    %cst_51 = arith.constant dense<0.000000e+00> : vector<64xf32>
    %71 = vector.multi_reduction <add>, %70, %cst_51 [1] : vector<64x16xf32> to vector<64xf32>
    %72 = vector.shape_cast %71 : vector<64xf32> to vector<64x1xf32>
    %73 = vector.shape_cast %72 : vector<64x1xf32> to vector<64x1xf32>
    %74 = vector.broadcast %73 : vector<64x1xf32> to vector<64x16xf32>
    %75 = vector.extract_strided_slice %59 {offsets = [0, 48], sizes = [64, 16], strides = [1, 1]} : vector<64x64xf32> to vector<64x16xf32>
    %cst_52 = arith.constant dense<0.000000e+00> : vector<64xf32>
    %76 = vector.multi_reduction <add>, %75, %cst_52 [1] : vector<64x16xf32> to vector<64xf32>
    %77 = vector.shape_cast %76 : vector<64xf32> to vector<64x1xf32>
    %78 = vector.shape_cast %77 : vector<64x1xf32> to vector<64x1xf32>
    %79 = vector.broadcast %78 : vector<64x1xf32> to vector<64x16xf32>
    %80 = tpu.concatenate %64, %69, %74, %79 in 1 : vector<64x16xf32>, vector<64x16xf32>, vector<64x16xf32>, vector<64x16xf32> -> vector<64x64xf32>
    %81 = tpu.reciprocal %80 {approx = true} : vector<64x64xf32> -> vector<64x64xf32>
    %82 = arith.mulf %59, %81 : vector<64x64xf32>
    %83 = arith.mulf %82, %8 : vector<64x64xf32>
    %cst_53 = arith.constant dense<0.000000e+00> : vector<64x32xf32>
    %84 = tpu.matmul %83, %22, %cst_53 {dimension_numbers = #tpu.dot_dimension_numbers<[1], [0], [0], [1], [0, 0, 1, 1], [], []>} : vector<64x64xf32>, vector<64x32xf32>, vector<64x32xf32> -> vector<64x32xf32>
    %85 = arith.mulf %22, %84 : vector<64x32xf32>
    %86 = tpu.concatenate %22, %84, %85 in 1 : vector<64x32xf32>, vector<64x32xf32>, vector<64x32xf32> -> vector<64x96xf32>
    %cst_54 = arith.constant dense<0.000000e+00> : vector<64x32xf32>
    %87 = tpu.matmul %86, %13, %cst_54 {dimension_numbers = #tpu.dot_dimension_numbers<[1], [0], [0], [1], [0, 0, 1, 1], [], []>} : vector<64x96xf32>, vector<96x32xf32>, vector<64x32xf32> -> vector<64x32xf32>
    %88 = vector.broadcast %18 : vector<1x32xf32> to vector<64x32xf32>
    %89 = arith.addf %87, %88 : vector<64x32xf32>
    %90 = math.tanh %89 : vector<64x32xf32>
    %91 = vector.shape_cast %90 : vector<64x32xf32> to vector<4x16x32xf32>
    %92 = vector.shape_cast %12 : vector<1x32xf32> to vector<1x1x32xf32>
    %93 = vector.broadcast %92 : vector<1x1x32xf32> to vector<4x8x32xf32>
    %94 = arith.mulf %3, %93 : vector<4x8x32xf32>
    %cst_55 = arith.constant dense<0.000000e+00> : vector<4x8xf32>
    %95 = vector.multi_reduction <add>, %94, %cst_55 [2] : vector<4x8x32xf32> to vector<4x8xf32>
    %96 = vector.shape_cast %95 : vector<4x8xf32> to vector<4x8x1xf32>
    %97 = arith.addf %96, %7 : vector<4x8x1xf32>
    %cst_56 = arith.constant dense<0xFF800000> : vector<4x1xf32>
    %98 = vector.multi_reduction <maximumf>, %97, %cst_56 [1] : vector<4x8x1xf32> to vector<4x1xf32>
    %99 = vector.shape_cast %98 : vector<4x1xf32> to vector<4x1x1xf32>
    %100 = vector.broadcast %99 : vector<4x1x1xf32> to vector<4x8x1xf32>
    %101 = arith.subf %97, %100 : vector<4x8x1xf32>
    %102 = math.exp %101 : vector<4x8x1xf32>
    %cst_57 = arith.constant dense<0.000000e+00> : vector<4x1xf32>
    %103 = vector.multi_reduction <add>, %102, %cst_57 [1] : vector<4x8x1xf32> to vector<4x1xf32>
    %104 = vector.shape_cast %103 : vector<4x1xf32> to vector<4x1x1xf32>
    %105 = tpu.reciprocal %104 {approx = true} : vector<4x1x1xf32> -> vector<4x1x1xf32>
    %106 = vector.broadcast %105 : vector<4x1x1xf32> to vector<4x8x1xf32>
    %107 = arith.mulf %102, %106 : vector<4x8x1xf32>
    %108 = vector.broadcast %107 : vector<4x8x1xf32> to vector<4x8x32xf32>
    %109 = arith.mulf %3, %108 : vector<4x8x32xf32>
    %cst_58 = arith.constant dense<0.000000e+00> : vector<4x32xf32>
    %110 = vector.multi_reduction <add>, %109, %cst_58 [1] : vector<4x8x32xf32> to vector<4x32xf32>
    %cst_59 = arith.constant dense<0.000000e+00> : vector<4x32xf32>
    %111 = tpu.matmul %110, %15, %cst_59 {dimension_numbers = #tpu.dot_dimension_numbers<[1], [0], [0], [1], [0, 0, 1, 1], [], []>} : vector<4x32xf32>, vector<32x32xf32>, vector<4x32xf32> -> vector<4x32xf32>
    %112 = tpu.concatenate %22, %90 in 1 : vector<64x32xf32>, vector<64x32xf32> -> vector<64x64xf32>
    %cst_60 = arith.constant dense<0.000000e+00> : vector<64x32xf32>
    %113 = tpu.matmul %112, %14, %cst_60 {dimension_numbers = #tpu.dot_dimension_numbers<[1], [0], [0], [1], [0, 0, 1, 1], [], []>} : vector<64x64xf32>, vector<64x32xf32>, vector<64x32xf32> -> vector<64x32xf32>
    %114 = vector.broadcast %19 : vector<1x32xf32> to vector<64x32xf32>
    %115 = arith.addf %113, %114 : vector<64x32xf32>
    %116 = vector.shape_cast %115 : vector<64x32xf32> to vector<4x16x32xf32>
    %117 = vector.shape_cast %111 : vector<4x32xf32> to vector<4x1x32xf32>
    %118 = vector.broadcast %117 : vector<4x1x32xf32> to vector<4x16x32xf32>
    %119 = arith.addf %116, %118 : vector<4x16x32xf32>
    %cst_61 = arith.constant 0.000000e+00 : f32
    %120 = vector.broadcast %cst_61 : f32 to vector<4x16x32xf32>
    %121 = arith.subf %120, %119 : vector<4x16x32xf32>
    %122 = math.exp %121 : vector<4x16x32xf32>
    %cst_62 = arith.constant 1.000000e+00 : f32
    %123 = vector.broadcast %cst_62 : f32 to vector<4x16x32xf32>
    %124 = arith.addf %123, %122 : vector<4x16x32xf32>
    %125 = tpu.reciprocal %124 {approx = true} : vector<4x16x32xf32> -> vector<4x16x32xf32>
    %126 = arith.subf %1, %91 : vector<4x16x32xf32>
    %127 = arith.mulf %125, %126 : vector<4x16x32xf32>
    %128 = arith.addf %91, %127 : vector<4x16x32xf32>
    %129 = vector.shape_cast %128 : vector<4x16x32xf32> to vector<64x32xf32>
    %130 = vector.extract_strided_slice %10 {offsets = [0, 0], sizes = [1, 32], strides = [1, 1]} : vector<3x32xf32> to vector<1x32xf32>
    %131 = vector.shape_cast %130 : vector<1x32xf32> to vector<1x1x32xf32>
    %132 = vector.broadcast %131 : vector<1x1x32xf32> to vector<4x8x32xf32>
    %133 = arith.mulf %3, %132 : vector<4x8x32xf32>
    %cst_63 = arith.constant dense<0.000000e+00> : vector<4x8xf32>
    %134 = vector.multi_reduction <add>, %133, %cst_63 [2] : vector<4x8x32xf32> to vector<4x8xf32>
    %135 = vector.shape_cast %134 : vector<4x8xf32> to vector<4x8x1xf32>
    %136 = vector.extract_strided_slice %10 {offsets = [1, 0], sizes = [1, 32], strides = [1, 1]} : vector<3x32xf32> to vector<1x32xf32>
    %137 = vector.shape_cast %136 : vector<1x32xf32> to vector<1x1x32xf32>
    %138 = vector.broadcast %137 : vector<1x1x32xf32> to vector<4x16x32xf32>
    %139 = arith.mulf %128, %138 : vector<4x16x32xf32>
    %cst_64 = arith.constant dense<0.000000e+00> : vector<4x16xf32>
    %140 = vector.multi_reduction <add>, %139, %cst_64 [2] : vector<4x16x32xf32> to vector<4x16xf32>
    %141 = vector.shape_cast %140 : vector<4x16xf32> to vector<4x16x1xf32>
    %142 = vector.extract_strided_slice %10 {offsets = [2, 0], sizes = [1, 32], strides = [1, 1]} : vector<3x32xf32> to vector<1x32xf32>
    %143 = vector.shape_cast %142 : vector<1x32xf32> to vector<1x1x32xf32>
    %144 = vector.broadcast %143 : vector<1x1x32xf32> to vector<4x8x32xf32>
    %145 = arith.mulf %3, %144 : vector<4x8x32xf32>
    %cst_65 = arith.constant 1.000000e+00 : f32
    %146 = vector.broadcast %cst_65 : f32 to vector<4x8x1xf32>
    %147 = tpu.concatenate %145, %146 in 2 : vector<4x8x32xf32>, vector<4x8x1xf32> -> vector<4x8x33xf32>
    %148 = arith.addf %141, %5 : vector<4x16x1xf32>
    %149 = tpu.concatenate %128, %148 in 2 : vector<4x16x32xf32>, vector<4x16x1xf32> -> vector<4x16x33xf32>
    "tpu.trace_start"() <{level = 10 : i32, message = "clh,ckh->clk"}> : () -> ()
    %cst_66 = arith.constant dense<0.000000e+00> : vector<4x8x16xf32>
    %150 = tpu.matmul %147, %149, %cst_66 {dimension_numbers = #tpu.dot_dimension_numbers<[2], [2], [1], [1], [0, 0, 0, 1, 1, 1], [0], [0]>} : vector<4x8x33xf32>, vector<4x16x33xf32>, vector<4x8x16xf32> -> vector<4x8x16xf32>
    "tpu.trace_stop"() : () -> ()
    %151 = arith.addf %135, %7 : vector<4x8x1xf32>
    %152 = vector.broadcast %151 : vector<4x8x1xf32> to vector<4x8x16xf32>
    %153 = arith.addf %150, %152 : vector<4x8x16xf32>
    %cst_67 = arith.constant dense<0xFF800000> : vector<4x8xf32>
    %154 = vector.multi_reduction <maximumf>, %153, %cst_67 [2] : vector<4x8x16xf32> to vector<4x8xf32>
    %155 = vector.shape_cast %154 : vector<4x8xf32> to vector<4x8x1xf32>
    %156 = vector.broadcast %155 : vector<4x8x1xf32> to vector<4x8x16xf32>
    %157 = arith.subf %153, %156 : vector<4x8x16xf32>
    %158 = math.exp %157 : vector<4x8x16xf32>
    %cst_68 = arith.constant dense<0.000000e+00> : vector<4x8xf32>
    %159 = vector.multi_reduction <add>, %158, %cst_68 [2] : vector<4x8x16xf32> to vector<4x8xf32>
    %160 = vector.shape_cast %159 : vector<4x8xf32> to vector<4x8x1xf32>
    %161 = tpu.reciprocal %160 {approx = true} : vector<4x8x1xf32> -> vector<4x8x1xf32>
    %162 = vector.broadcast %161 : vector<4x8x1xf32> to vector<4x8x16xf32>
    %163 = arith.mulf %158, %162 : vector<4x8x16xf32>
    "tpu.trace_start"() <{level = 10 : i32, message = "clk,ckh->clh"}> : () -> ()
    %cst_69 = arith.constant dense<0.000000e+00> : vector<4x8x32xf32>
    %164 = tpu.matmul %163, %128, %cst_69 {dimension_numbers = #tpu.dot_dimension_numbers<[2], [1], [1], [2], [0, 0, 0, 1, 1, 2], [0], [0]>} : vector<4x8x16xf32>, vector<4x16x32xf32>, vector<4x8x32xf32> -> vector<4x8x32xf32>
    "tpu.trace_stop"() : () -> ()
    %165 = tpu.transpose %153, [0, 2, 1] : vector<4x8x16xf32> -> vector<4x16x8xf32>
    %cst_70 = arith.constant dense<0xFF800000> : vector<4x16xf32>
    %166 = vector.multi_reduction <maximumf>, %165, %cst_70 [2] : vector<4x16x8xf32> to vector<4x16xf32>
    %167 = vector.shape_cast %166 : vector<4x16xf32> to vector<4x16x1xf32>
    %168 = vector.broadcast %167 : vector<4x16x1xf32> to vector<4x16x8xf32>
    %169 = arith.subf %165, %168 : vector<4x16x8xf32>
    %170 = math.exp %169 : vector<4x16x8xf32>
    %cst_71 = arith.constant dense<0.000000e+00> : vector<4x16xf32>
    %171 = vector.multi_reduction <add>, %170, %cst_71 [2] : vector<4x16x8xf32> to vector<4x16xf32>
    %172 = vector.shape_cast %171 : vector<4x16xf32> to vector<4x16x1xf32>
    %173 = tpu.reciprocal %172 {approx = true} : vector<4x16x1xf32> -> vector<4x16x1xf32>
    %174 = vector.broadcast %173 : vector<4x16x1xf32> to vector<4x16x8xf32>
    %175 = arith.mulf %170, %174 : vector<4x16x8xf32>
    %176 = tpu.concatenate %3, %164 in 2 : vector<4x8x32xf32>, vector<4x8x32xf32> -> vector<4x8x64xf32>
    "tpu.trace_start"() <{level = 10 : i32, message = "ckl,clh->ckh"}> : () -> ()
    %cst_72 = arith.constant dense<0.000000e+00> : vector<4x16x64xf32>
    %177 = tpu.matmul %175, %176, %cst_72 {dimension_numbers = #tpu.dot_dimension_numbers<[2], [1], [1], [2], [0, 0, 0, 1, 1, 2], [0], [0]>} : vector<4x16x8xf32>, vector<4x8x64xf32>, vector<4x16x64xf32> -> vector<4x16x64xf32>
    "tpu.trace_stop"() : () -> ()
    %178 = vector.shape_cast %177 : vector<4x16x64xf32> to vector<64x64xf32>
    %179 = tpu.concatenate %129, %178 in 1 : vector<64x32xf32>, vector<64x64xf32> -> vector<64x96xf32>
    %cst_73 = arith.constant dense<0.000000e+00> : vector<64x32xf32>
    %180 = tpu.matmul %179, %16, %cst_73 {dimension_numbers = #tpu.dot_dimension_numbers<[1], [0], [0], [1], [0, 0, 1, 1], [], []>} : vector<64x96xf32>, vector<96x32xf32>, vector<64x32xf32> -> vector<64x32xf32>
    %181 = vector.broadcast %20 : vector<1x32xf32> to vector<64x32xf32>
    %182 = arith.addf %180, %181 : vector<64x32xf32>
    %cst_74 = arith.constant 0.000000e+00 : f32
    %183 = vector.broadcast %cst_74 : f32 to vector<64x32xf32>
    %184 = arith.maximumf %182, %183 : vector<64x32xf32>
    %185 = vector.shape_cast %184 : vector<64x32xf32> to vector<4x16x32xf32>
    %186 = vector.extract_strided_slice %11 {offsets = [0, 0], sizes = [1, 32], strides = [1, 1]} : vector<3x32xf32> to vector<1x32xf32>
    %187 = vector.shape_cast %186 : vector<1x32xf32> to vector<1x1x32xf32>
    %188 = vector.broadcast %187 : vector<1x1x32xf32> to vector<4x16x32xf32>
    %189 = arith.mulf %185, %188 : vector<4x16x32xf32>
    %cst_75 = arith.constant dense<0.000000e+00> : vector<4x16xf32>
    %190 = vector.multi_reduction <add>, %189, %cst_75 [2] : vector<4x16x32xf32> to vector<4x16xf32>
    %191 = vector.shape_cast %190 : vector<4x16xf32> to vector<4x16x1xf32>
    %cst_76 = arith.constant 1.000000e+00 : f32
    %192 = vector.broadcast %cst_76 : f32 to vector<4x16x1xf32>
    %193 = tpu.concatenate %185, %192 in 2 : vector<4x16x32xf32>, vector<4x16x1xf32> -> vector<4x16x33xf32>
    %194 = vector.extract_strided_slice %11 {offsets = [2, 0], sizes = [1, 32], strides = [1, 1]} : vector<3x32xf32> to vector<1x32xf32>
    %195 = vector.shape_cast %194 : vector<1x32xf32> to vector<1x1x32xf32>
    %196 = vector.broadcast %195 : vector<1x1x32xf32> to vector<4x16x32xf32>
    %197 = arith.mulf %185, %196 : vector<4x16x32xf32>
    %198 = arith.addf %191, %5 : vector<4x16x1xf32>
    %199 = tpu.concatenate %197, %198 in 2 : vector<4x16x32xf32>, vector<4x16x1xf32> -> vector<4x16x33xf32>
    "tpu.trace_start"() <{level = 10 : i32, message = "ckh,clh->ckl"}> : () -> ()
    %cst_77 = arith.constant dense<0.000000e+00> : vector<4x16x16xf32>
    %200 = tpu.matmul %193, %199, %cst_77 {dimension_numbers = #tpu.dot_dimension_numbers<[2], [2], [1], [1], [0, 0, 0, 1, 1, 1], [0], [0]>} : vector<4x16x33xf32>, vector<4x16x33xf32>, vector<4x16x16xf32> -> vector<4x16x16xf32>
    "tpu.trace_stop"() : () -> ()
    %cst_78 = arith.constant dense<0xFF800000> : vector<4x16xf32>
    %201 = vector.multi_reduction <maximumf>, %200, %cst_78 [2] : vector<4x16x16xf32> to vector<4x16xf32>
    %202 = vector.shape_cast %201 : vector<4x16xf32> to vector<4x16x1xf32>
    %203 = vector.broadcast %202 : vector<4x16x1xf32> to vector<4x16x16xf32>
    %204 = arith.subf %200, %203 : vector<4x16x16xf32>
    %205 = math.exp %204 : vector<4x16x16xf32>
    %cst_79 = arith.constant dense<0.000000e+00> : vector<4x16xf32>
    %206 = vector.multi_reduction <add>, %205, %cst_79 [2] : vector<4x16x16xf32> to vector<4x16xf32>
    %207 = vector.shape_cast %206 : vector<4x16xf32> to vector<4x16x1xf32>
    %208 = tpu.reciprocal %207 {approx = true} : vector<4x16x1xf32> -> vector<4x16x1xf32>
    %209 = vector.broadcast %208 : vector<4x16x1xf32> to vector<4x16x16xf32>
    %210 = arith.mulf %205, %209 : vector<4x16x16xf32>
    "tpu.trace_start"() <{level = 10 : i32, message = "ckl,clh->ckh"}> : () -> ()
    %cst_80 = arith.constant dense<0.000000e+00> : vector<4x16x32xf32>
    %211 = tpu.matmul %210, %185, %cst_80 {dimension_numbers = #tpu.dot_dimension_numbers<[2], [1], [1], [2], [0, 0, 0, 1, 1, 2], [0], [0]>} : vector<4x16x16xf32>, vector<4x16x32xf32>, vector<4x16x32xf32> -> vector<4x16x32xf32>
    "tpu.trace_stop"() : () -> ()
    %212 = vector.shape_cast %211 : vector<4x16x32xf32> to vector<64x32xf32>
    %213 = arith.mulf %184, %212 : vector<64x32xf32>
    %214 = tpu.concatenate %184, %212, %213 in 1 : vector<64x32xf32>, vector<64x32xf32>, vector<64x32xf32> -> vector<64x96xf32>
    %cst_81 = arith.constant dense<0.000000e+00> : vector<64x32xf32>
    %215 = tpu.matmul %214, %17, %cst_81 {dimension_numbers = #tpu.dot_dimension_numbers<[1], [0], [0], [1], [0, 0, 1, 1], [], []>} : vector<64x96xf32>, vector<96x32xf32>, vector<64x32xf32> -> vector<64x32xf32>
    %216 = vector.broadcast %21 : vector<1x32xf32> to vector<64x32xf32>
    %217 = arith.addf %215, %216 : vector<64x32xf32>
    %cst_82 = arith.constant 0.000000e+00 : f32
    %218 = vector.broadcast %cst_82 : f32 to vector<64x32xf32>
    %219 = arith.maximumf %217, %218 : vector<64x32xf32>
    %220 = vector.shape_cast %219 : vector<64x32xf32> to vector<4x16x32xf32>
    %cst_83 = arith.constant dense<0xFF800000> : vector<4x32xf32>
    %221 = vector.multi_reduction <maximumf>, %220, %cst_83 [1] : vector<4x16x32xf32> to vector<4x32xf32>
    %c0_84 = arith.constant 0 : index
    %c0_85 = arith.constant 0 : index
    %c0_86 = arith.constant 0 : index
    %222 = vector.load %arg19[%c0_84, %c0_85, %c0_86] : memref<1x4x32xf32, #tpu.memory_space<vmem>>, vector<1x4x32xf32>
    %223 = vector.shape_cast %222 : vector<1x4x32xf32> to vector<4x32xf32>
    %224 = vector.shape_cast %221 : vector<4x32xf32> to vector<1x4x32xf32>
    tpu.vector_store %arg19[%c0_84, %c0_85, %c0_86], %224 {strides = array<i32>} : memref<1x4x32xf32, #tpu.memory_space<vmem>>, vector<1x4x32xf32>,
    return
  }
  func.func @transform_0(%arg0: i32) -> (i32, i32, i32, i32) {
    %c0_i32 = arith.constant 0 : i32
    %c0_i32_0 = arith.constant 0 : i32
    %c0_i32_1 = arith.constant 0 : i32
    %c0_i32_2 = arith.constant 0 : i32
    return %arg0, %c0_i32, %c0_i32_0, %c0_i32_1 : i32, i32, i32, i32
  }
  func.func @transform_1(%arg0: i32) -> (i32, i32, i32, i32) {
    %c0_i32 = arith.constant 0 : i32
    %c0_i32_0 = arith.constant 0 : i32
    %c0_i32_1 = arith.constant 0 : i32
    %c0_i32_2 = arith.constant 0 : i32
    return %arg0, %c0_i32, %c0_i32_0, %c0_i32_1 : i32, i32, i32, i32
  }
  func.func @transform_2(%arg0: i32) -> (i32, i32, i32, i32) {
    %c0_i32 = arith.constant 0 : i32
    %c0_i32_0 = arith.constant 0 : i32
    %c0_i32_1 = arith.constant 0 : i32
    %c0_i32_2 = arith.constant 0 : i32
    return %arg0, %c0_i32, %c0_i32_0, %c0_i32_1 : i32, i32, i32, i32
  }
  func.func @transform_3(%arg0: i32) -> (i32, i32, i32, i32) {
    %c0_i32 = arith.constant 0 : i32
    %c0_i32_0 = arith.constant 0 : i32
    %c0_i32_1 = arith.constant 0 : i32
    %c0_i32_2 = arith.constant 0 : i32
    return %arg0, %c0_i32, %c0_i32_0, %c0_i32_1 : i32, i32, i32, i32
  }
  func.func @transform_4(%arg0: i32) -> (i32, i32) {
    %c0_i32 = arith.constant 0 : i32
    %c0_i32_0 = arith.constant 0 : i32
    %c0_i32_1 = arith.constant 0 : i32
    return %c0_i32, %c0_i32_0 : i32, i32
  }
  func.func @transform_5(%arg0: i32) -> (i32, i32) {
    %c0_i32 = arith.constant 0 : i32
    %c0_i32_0 = arith.constant 0 : i32
    %c0_i32_1 = arith.constant 0 : i32
    return %c0_i32, %c0_i32_0 : i32, i32
  }
  func.func @transform_6(%arg0: i32) -> (i32, i32) {
    %c0_i32 = arith.constant 0 : i32
    %c0_i32_0 = arith.constant 0 : i32
    %c0_i32_1 = arith.constant 0 : i32
    return %c0_i32, %c0_i32_0 : i32, i32
  }
  func.func @transform_7(%arg0: i32) -> (i32, i32) {
    %c0_i32 = arith.constant 0 : i32
    %c0_i32_0 = arith.constant 0 : i32
    %c0_i32_1 = arith.constant 0 : i32
    return %c0_i32, %c0_i32_0 : i32, i32
  }
  func.func @transform_8(%arg0: i32) -> (i32, i32) {
    %c0_i32 = arith.constant 0 : i32
    %c0_i32_0 = arith.constant 0 : i32
    %c0_i32_1 = arith.constant 0 : i32
    return %c0_i32, %c0_i32_0 : i32, i32
  }
  func.func @transform_9(%arg0: i32) -> (i32, i32) {
    %c0_i32 = arith.constant 0 : i32
    %c0_i32_0 = arith.constant 0 : i32
    %c0_i32_1 = arith.constant 0 : i32
    return %c0_i32, %c0_i32_0 : i32, i32
  }
  func.func @transform_10(%arg0: i32) -> (i32, i32) {
    %c0_i32 = arith.constant 0 : i32
    %c0_i32_0 = arith.constant 0 : i32
    %c0_i32_1 = arith.constant 0 : i32
    return %c0_i32, %c0_i32_0 : i32, i32
  }
  func.func @transform_11(%arg0: i32) -> (i32, i32) {
    %c0_i32 = arith.constant 0 : i32
    %c0_i32_0 = arith.constant 0 : i32
    %c0_i32_1 = arith.constant 0 : i32
    return %c0_i32, %c0_i32_0 : i32, i32
  }
  func.func @transform_12(%arg0: i32) -> (i32, i32) {
    %c0_i32 = arith.constant 0 : i32
    %c0_i32_0 = arith.constant 0 : i32
    %c0_i32_1 = arith.constant 0 : i32
    return %c0_i32, %c0_i32_0 : i32, i32
  }
  func.func @transform_13(%arg0: i32) -> (i32, i32) {
    %c0_i32 = arith.constant 0 : i32
    %c0_i32_0 = arith.constant 0 : i32
    %c0_i32_1 = arith.constant 0 : i32
    return %c0_i32, %c0_i32_0 : i32, i32
  }
  func.func @transform_14(%arg0: i32) -> (i32, i32) {
    %c0_i32 = arith.constant 0 : i32
    %c0_i32_0 = arith.constant 0 : i32
    %c0_i32_1 = arith.constant 0 : i32
    return %c0_i32, %c0_i32_0 : i32, i32
  }
  func.func @transform_15(%arg0: i32) -> (i32, i32) {
    %c0_i32 = arith.constant 0 : i32
    %c0_i32_0 = arith.constant 0 : i32
    %c0_i32_1 = arith.constant 0 : i32
    return %c0_i32, %c0_i32_0 : i32, i32
  }
  func.func @transform_16(%arg0: i32) -> (i32, i32) {
    %c0_i32 = arith.constant 0 : i32
    %c0_i32_0 = arith.constant 0 : i32
    %c0_i32_1 = arith.constant 0 : i32
    return %c0_i32, %c0_i32_0 : i32, i32
  }
  func.func @transform_17(%arg0: i32) -> (i32, i32) {
    %c0_i32 = arith.constant 0 : i32
    %c0_i32_0 = arith.constant 0 : i32
    %c0_i32_1 = arith.constant 0 : i32
    return %c0_i32, %c0_i32_0 : i32, i32
  }
  func.func @transform_18(%arg0: i32) -> (i32, i32, i32) {
    %c0_i32 = arith.constant 0 : i32
    %c0_i32_0 = arith.constant 0 : i32
    %c0_i32_1 = arith.constant 0 : i32
    return %arg0, %c0_i32, %c0_i32_0 : i32, i32, i32
  }
}

</mosaic_0001>

<llo_original>
// kernel: option_compare_cell.1
$region0: #{option_compare_cell.1}
  #allocation0 [shape = 'u32[]', space=smem, size = 0x4, offset = 0x4, fixed_abs, tag = 'smem constant byte address 0x4 - core index']
  #allocation1 [shape = 'u32[144,128]{1,0:T(1,128)}', space=vmem, size = 0x12000, scoped, tag = 'internal scratch']
  %s0 = inlined_call_operand.vmem [shape: f32[2,4,16,32], index: 0, kind: input, shape index: {}]
  %s1 = inlined_call_operand.vmem [shape: f32[2,4,8,32], index: 1, kind: input, shape index: {}]
  %s2 = inlined_call_operand.vmem [shape: f32[2,4,16,1], index: 2, kind: input, shape index: {}]
  %s3 = inlined_call_operand.vmem [shape: f32[2,4,8,1], index: 3, kind: input, shape index: {}]
  %s4 = inlined_call_operand.vmem [shape: f32[64,64], index: 4, kind: input, shape index: {}]
  %s5 = inlined_call_operand.vmem [shape: f32[3,32], index: 5, kind: input, shape index: {}]
  %s6 = inlined_call_operand.vmem [shape: f32[3,32], index: 6, kind: input, shape index: {}]
  %s7 = inlined_call_operand.vmem [shape: f32[3,32], index: 7, kind: input, shape index: {}]
  %s8 = inlined_call_operand.vmem [shape: f32[1,32], index: 8, kind: input, shape index: {}]
  %s9 = inlined_call_operand.vmem [shape: f32[96,32], index: 9, kind: input, shape index: {}]
  %s10 = inlined_call_operand.vmem [shape: f32[64,32], index: 10, kind: input, shape index: {}]
  %s11 = inlined_call_operand.vmem [shape: f32[32,32], index: 11, kind: input, shape index: {}]
  %s12 = inlined_call_operand.vmem [shape: f32[96,32], index: 12, kind: input, shape index: {}]
  %s13 = inlined_call_operand.vmem [shape: f32[96,32], index: 13, kind: input, shape index: {}]
  %s14 = inlined_call_operand.vmem [shape: f32[1,32], index: 14, kind: input, shape index: {}]
  %s15 = inlined_call_operand.vmem [shape: f32[1,32], index: 15, kind: input, shape index: {}]
  %s16 = inlined_call_operand.vmem [shape: f32[1,32], index: 16, kind: input, shape index: {}]
  %s17 = inlined_call_operand.vmem [shape: f32[1,32], index: 17, kind: input, shape index: {}]
  %s18 = inlined_call_operand.hbm [shape: f32[2,4,32], index: 18, kind: output, shape index: {}]
  %s19 = sld [smem:[#allocation0]]
  $region105: #{option_compare_cell.1} parent=0
    _
  %s21 = ssub.s32 1, %s19
  %s22 = scalar_select 0, %s21, %s19
  $region1: #{option_compare_cell.1} parent=0
    #allocation2 [shape = 'u8[4096]{0}', space=vmem, size = 0x1000, scoped, tag = 'output window, operand 0']
    #allocation3 [shape = 's32[2]{0}', space=sflag, size = 0x8, scoped, tag = 'scoped memory for option_compare_cell.1']
    %23 = vsyncpa [#allocation3], 0
    %s24 = scalar_lea.sflag [#allocation3], 1
    %25 = vsyncpa %s24, 0
    loop: start=0, step=1, limit=4
    $region2: #{option_compare_cell.1} parent=1 // loop_pre_header
      _
    $region3: #{option_compare_cell.1} parent=1 // loop_header
      %s27 = sphi 0, %s31
      %p28 = scmp.ge.s32.totalorder %s27, 4
      %s37 = sphi 0, %s39
      %s40 = sphi 0, %s37
      %s41 = sphi 0, %s40
      %s57 = sphi 0, %s41
      %s63 = sphi 0, %s65
      %s66 = sphi 0, %s63
      %s67 = sphi 0, %s66
      %s83 = sphi 0, %s67
      %s89 = sphi 0, %s91
      %s92 = sphi 0, %s89
      %s93 = sphi 0, %s92
      %s109 = sphi 0, %s93
      %s115 = sphi 0, %s117
      %s118 = sphi 0, %s115
      %s119 = sphi 0, %s118
      %s135 = sphi 0, %s119
      %s139 = sphi 0, %s139
      %s141 = sphi 0, %s139
      %s142 = sphi 0, %s141
      %s156 = sphi 0, %s142
      %s160 = sphi 0, %s160
      %s162 = sphi 0, %s160
      %s163 = sphi 0, %s162
      %s177 = sphi 0, %s163
      %s181 = sphi 0, %s181
      %s183 = sphi 0, %s181
      %s184 = sphi 0, %s183
      %s198 = sphi 0, %s184
      %s202 = sphi 0, %s202
      %s204 = sphi 0, %s202
      %s205 = sphi 0, %s204
      %s219 = sphi 0, %s205
      %s223 = sphi 0, %s223
      %s225 = sphi 0, %s223
      %s226 = sphi 0, %s225
      %s240 = sphi 0, %s226
      %s244 = sphi 0, %s244
      %s246 = sphi 0, %s244
      %s247 = sphi 0, %s246
      %s261 = sphi 0, %s247
      %s265 = sphi 0, %s265
      %s267 = sphi 0, %s265
      %s268 = sphi 0, %s267
      %s282 = sphi 0, %s268
      %s286 = sphi 0, %s286
      %s288 = sphi 0, %s286
      %s289 = sphi 0, %s288
      %s303 = sphi 0, %s289
      %s307 = sphi 0, %s307
      %s309 = sphi 0, %s307
      %s310 = sphi 0, %s309
      %s324 = sphi 0, %s310
      %s328 = sphi 0, %s328
      %s330 = sphi 0, %s328
      %s331 = sphi 0, %s330
      %s345 = sphi 0, %s331
      %s349 = sphi 0, %s349
      %s351 = sphi 0, %s349
      %s352 = sphi 0, %s351
      %s366 = sphi 0, %s352
      %s370 = sphi 0, %s370
      %s372 = sphi 0, %s370
      %s373 = sphi 0, %s372
      %s387 = sphi 0, %s373
      %s391 = sphi 0, %s391
      %s393 = sphi 0, %s391
      %s394 = sphi 0, %s393
      %s408 = sphi 0, %s394
      %s412 = sphi 0, %s412
      %s414 = sphi 0, %s412
      %s415 = sphi 0, %s414
      %s429 = sphi 0, %s415
      %s435 = sphi 0, %s437
      %s438 = sphi 0, %s435
      %s439 = sphi 0, %s438
      %s455 = sphi 0, %s439
    $region4: #{option_compare_cell.1} parent=1 // loop_header_branch
      %30 = sbr.rel (%p28) target = $region8
    $region5: #{option_compare_cell.1} parent=1 // loop_body
      %s32 = ssub.s32 %s27, 1
      %s33 = ssub.s32 %s27, 2
      %s34 = sadd.s32 %s27, 1
      %s35 = ssub.s32 %s27, %s34
      %p36 = scmp.eq.s32.totalorder %s35, 0
      %s38 = sadd.s32 %s37, 1
      %s39 = scalar_select %p36, %s37, %s38
      %p42 = pneg %p36
      %p43 = scmp.eq.s32.totalorder %s27, 1
      %p44 = por %p42, %p43
      %p45 = scmp.ne.s32.totalorder %s37, %s40
      %p46 = scmp.eq.s32.totalorder %s27, 0
      %p47 = por %p45, %p46
      %p48 = scmp.ne.s32.totalorder %s37, %s40
      %p49 = scmp.eq.s32.totalorder %s32, 1
      %p50 = por %p48, %p49
      %p51 = scmp.ne.s32.totalorder %s40, %s41
      %p52 = scmp.eq.s32.totalorder %s32, 0
      %p53 = por %p51, %p52
      %p54 = scmp.ne.s32.totalorder %s40, %s41
      %p55 = scmp.eq.s32.totalorder %s33, 1
      %p56 = por %p54, %p55
      %p58 = scmp.ne.s32.totalorder %s41, %s57
      %p59 = scmp.eq.s32.totalorder %s33, 0
      %p60 = por %p58, %p59
      %s61 = ssub.s32 %s27, %s34
      %p62 = scmp.eq.s32.totalorder %s61, 0
      %s64 = sadd.s32 %s63, 1
      %s65 = scalar_select %p62, %s63, %s64
      %p68 = pneg %p62
      %p69 = scmp.eq.s32.totalorder %s27, 1
      %p70 = por %p68, %p69
      %p71 = scmp.ne.s32.totalorder %s63, %s66
      %p72 = scmp.eq.s32.totalorder %s27, 0
      %p73 = por %p71, %p72
      %p74 = scmp.ne.s32.totalorder %s63, %s66
      %p75 = scmp.eq.s32.totalorder %s32, 1
      %p76 = por %p74, %p75
      %p77 = scmp.ne.s32.totalorder %s66, %s67
      %p78 = scmp.eq.s32.totalorder %s32, 0
      %p79 = por %p77, %p78
      %p80 = scmp.ne.s32.totalorder %s66, %s67
      %p81 = scmp.eq.s32.totalorder %s33, 1
      %p82 = por %p80, %p81
      %p84 = scmp.ne.s32.totalorder %s67, %s83
      %p85 = scmp.eq.s32.totalorder %s33, 0
      %p86 = por %p84, %p85
      %s87 = ssub.s32 %s27, %s34
      %p88 = scmp.eq.s32.totalorder %s87, 0
      %s90 = sadd.s32 %s89, 1
      %s91 = scalar_select %p88, %s89, %s90
      %p94 = pneg %p88
      %p95 = scmp.eq.s32.totalorder %s27, 1
      %p96 = por %p94, %p95
      %p97 = scmp.ne.s32.totalorder %s89, %s92
      %p98 = scmp.eq.s32.totalorder %s27, 0
      %p99 = por %p97, %p98
      %p100 = scmp.ne.s32.totalorder %s89, %s92
      %p101 = scmp.eq.s32.totalorder %s32, 1
      %p102 = por %p100, %p101
      %p103 = scmp.ne.s32.totalorder %s92, %s93
      %p104 = scmp.eq.s32.totalorder %s32, 0
      %p105 = por %p103, %p104
      %p106 = scmp.ne.s32.totalorder %s92, %s93
      %p107 = scmp.eq.s32.totalorder %s33, 1
      %p108 = por %p106, %p107
      %p110 = scmp.ne.s32.totalorder %s93, %s109
      %p111 = scmp.eq.s32.totalorder %s33, 0
      %p112 = por %p110, %p111
      %s113 = ssub.s32 %s27, %s34
      %p114 = scmp.eq.s32.totalorder %s113, 0
      %s116 = sadd.s32 %s115, 1
      %s117 = scalar_select %p114, %s115, %s116
      %p120 = pneg %p114
      %p121 = scmp.eq.s32.totalorder %s27, 1
      %p122 = por %p120, %p121
      %p123 = scmp.ne.s32.totalorder %s115, %s118
      %p124 = scmp.eq.s32.totalorder %s27, 0
      %p125 = por %p123, %p124
      %p126 = scmp.ne.s32.totalorder %s115, %s118
      %p127 = scmp.eq.s32.totalorder %s32, 1
      %p128 = por %p126, %p127
      %p129 = scmp.ne.s32.totalorder %s118, %s119
      %p130 = scmp.eq.s32.totalorder %s32, 0
      %p131 = por %p129, %p130
      %p132 = scmp.ne.s32.totalorder %s118, %s119
      %p133 = scmp.eq.s32.totalorder %s33, 1
      %p134 = por %p132, %p133
      %p136 = scmp.ne.s32.totalorder %s119, %s135
      %p137 = scmp.eq.s32.totalorder %s33, 0
      %p138 = por %p136, %p137
      %s140 = sadd.s32 %s139, 1
      %p143 = scmp.eq.s32.totalorder %s27, 1
      %p144 = scmp.ne.s32.totalorder %s139, %s141
      %p145 = scmp.eq.s32.totalorder %s27, 0
      %p146 = por %p144, %p145
      %p147 = scmp.ne.s32.totalorder %s139, %s141
      %p148 = scmp.eq.s32.totalorder %s32, 1
      %p149 = por %p147, %p148
      %p150 = scmp.ne.s32.totalorder %s141, %s142
      %p151 = scmp.eq.s32.totalorder %s32, 0
      %p152 = por %p150, %p151
      %p153 = scmp.ne.s32.totalorder %s141, %s142
      %p154 = scmp.eq.s32.totalorder %s33, 1
      %p155 = por %p153, %p154
      %p157 = scmp.ne.s32.totalorder %s142, %s156
      %p158 = scmp.eq.s32.totalorder %s33, 0
      %p159 = por %p157, %p158
      %s161 = sadd.s32 %s160, 1
      %p164 = scmp.eq.s32.totalorder %s27, 1
      %p165 = scmp.ne.s32.totalorder %s160, %s162
      %p166 = scmp.eq.s32.totalorder %s27, 0
      %p167 = por %p165, %p166
      %p168 = scmp.ne.s32.totalorder %s160, %s162
      %p169 = scmp.eq.s32.totalorder %s32, 1
      %p170 = por %p168, %p169
      %p171 = scmp.ne.s32.totalorder %s162, %s163
      %p172 = scmp.eq.s32.totalorder %s32, 0
      %p173 = por %p171, %p172
      %p174 = scmp.ne.s32.totalorder %s162, %s163
      %p175 = scmp.eq.s32.totalorder %s33, 1
      %p176 = por %p174, %p175
      %p178 = scmp.ne.s32.totalorder %s163, %s177
      %p179 = scmp.eq.s32.totalorder %s33, 0
      %p180 = por %p178, %p179
      %s182 = sadd.s32 %s181, 1
      %p185 = scmp.eq.s32.totalorder %s27, 1
      %p186 = scmp.ne.s32.totalorder %s181, %s183
      %p187 = scmp.eq.s32.totalorder %s27, 0
      %p188 = por %p186, %p187
      %p189 = scmp.ne.s32.totalorder %s181, %s183
      %p190 = scmp.eq.s32.totalorder %s32, 1
      %p191 = por %p189, %p190
      %p192 = scmp.ne.s32.totalorder %s183, %s184
      %p193 = scmp.eq.s32.totalorder %s32, 0
      %p194 = por %p192, %p193
      %p195 = scmp.ne.s32.totalorder %s183, %s184
      %p196 = scmp.eq.s32.totalorder %s33, 1
      %p197 = por %p195, %p196
      %p199 = scmp.ne.s32.totalorder %s184, %s198
      %p200 = scmp.eq.s32.totalorder %s33, 0
      %p201 = por %p199, %p200
      %s203 = sadd.s32 %s202, 1
      %p206 = scmp.eq.s32.totalorder %s27, 1
      %p207 = scmp.ne.s32.totalorder %s202, %s204
      %p208 = scmp.eq.s32.totalorder %s27, 0
      %p209 = por %p207, %p208
      %p210 = scmp.ne.s32.totalorder %s202, %s204
      %p211 = scmp.eq.s32.totalorder %s32, 1
      %p212 = por %p210, %p211
      %p213 = scmp.ne.s32.totalorder %s204, %s205
      %p214 = scmp.eq.s32.totalorder %s32, 0
      %p215 = por %p213, %p214
      %p216 = scmp.ne.s32.totalorder %s204, %s205
      %p217 = scmp.eq.s32.totalorder %s33, 1
      %p218 = por %p216, %p217
      %p220 = scmp.ne.s32.totalorder %s205, %s219
      %p221 = scmp.eq.s32.totalorder %s33, 0
      %p222 = por %p220, %p221
      %s224 = sadd.s32 %s223, 1
      %p227 = scmp.eq.s32.totalorder %s27, 1
      %p228 = scmp.ne.s32.totalorder %s223, %s225
      %p229 = scmp.eq.s32.totalorder %s27, 0
      %p230 = por %p228, %p229
      %p231 = scmp.ne.s32.totalorder %s223, %s225
      %p232 = scmp.eq.s32.totalorder %s32, 1
      %p233 = por %p231, %p232
      %p234 = scmp.ne.s32.totalorder %s225, %s226
      %p235 = scmp.eq.s32.totalorder %s32, 0
      %p236 = por %p234, %p235
      %p237 = scmp.ne.s32.totalorder %s225, %s226
      %p238 = scmp.eq.s32.totalorder %s33, 1
      %p239 = por %p237, %p238
      %p241 = scmp.ne.s32.totalorder %s226, %s240
      %p242 = scmp.eq.s32.totalorder %s33, 0
      %p243 = por %p241, %p242
      %s245 = sadd.s32 %s244, 1
      %p248 = scmp.eq.s32.totalorder %s27, 1
      %p249 = scmp.ne.s32.totalorder %s244, %s246
      %p250 = scmp.eq.s32.totalorder %s27, 0
      %p251 = por %p249, %p250
      %p252 = scmp.ne.s32.totalorder %s244, %s246
      %p253 = scmp.eq.s32.totalorder %s32, 1
      %p254 = por %p252, %p253
      %p255 = scmp.ne.s32.totalorder %s246, %s247
      %p256 = scmp.eq.s32.totalorder %s32, 0
      %p257 = por %p255, %p256
      %p258 = scmp.ne.s32.totalorder %s246, %s247
      %p259 = scmp.eq.s32.totalorder %s33, 1
      %p260 = por %p258, %p259
      %p262 = scmp.ne.s32.totalorder %s247, %s261
      %p263 = scmp.eq.s32.totalorder %s33, 0
      %p264 = por %p262, %p263
      %s266 = sadd.s32 %s265, 1
      %p269 = scmp.eq.s32.totalorder %s27, 1
      %p270 = scmp.ne.s32.totalorder %s265, %s267
      %p271 = scmp.eq.s32.totalorder %s27, 0
      %p272 = por %p270, %p271
      %p273 = scmp.ne.s32.totalorder %s265, %s267
      %p274 = scmp.eq.s32.totalorder %s32, 1
      %p275 = por %p273, %p274
      %p276 = scmp.ne.s32.totalorder %s267, %s268
      %p277 = scmp.eq.s32.totalorder %s32, 0
      %p278 = por %p276, %p277
      %p279 = scmp.ne.s32.totalorder %s267, %s268
      %p280 = scmp.eq.s32.totalorder %s33, 1
      %p281 = por %p279, %p280
      %p283 = scmp.ne.s32.totalorder %s268, %s282
      %p284 = scmp.eq.s32.totalorder %s33, 0
      %p285 = por %p283, %p284
      %s287 = sadd.s32 %s286, 1
      %p290 = scmp.eq.s32.totalorder %s27, 1
      %p291 = scmp.ne.s32.totalorder %s286, %s288
      %p292 = scmp.eq.s32.totalorder %s27, 0
      %p293 = por %p291, %p292
      %p294 = scmp.ne.s32.totalorder %s286, %s288
      %p295 = scmp.eq.s32.totalorder %s32, 1
      %p296 = por %p294, %p295
      %p297 = scmp.ne.s32.totalorder %s288, %s289
      %p298 = scmp.eq.s32.totalorder %s32, 0
      %p299 = por %p297, %p298
      %p300 = scmp.ne.s32.totalorder %s288, %s289
      %p301 = scmp.eq.s32.totalorder %s33, 1
      %p302 = por %p300, %p301
      %p304 = scmp.ne.s32.totalorder %s289, %s303
      %p305 = scmp.eq.s32.totalorder %s33, 0
      %p306 = por %p304, %p305
      %s308 = sadd.s32 %s307, 1
      %p311 = scmp.eq.s32.totalorder %s27, 1
      %p312 = scmp.ne.s32.totalorder %s307, %s309
      %p313 = scmp.eq.s32.totalorder %s27, 0
      %p314 = por %p312, %p313
      %p315 = scmp.ne.s32.totalorder %s307, %s309
      %p316 = scmp.eq.s32.totalorder %s32, 1
      %p317 = por %p315, %p316
      %p318 = scmp.ne.s32.totalorder %s309, %s310
      %p319 = scmp.eq.s32.totalorder %s32, 0
      %p320 = por %p318, %p319
      %p321 = scmp.ne.s32.totalorder %s309, %s310
      %p322 = scmp.eq.s32.totalorder %s33, 1
      %p323 = por %p321, %p322
      %p325 = scmp.ne.s32.totalorder %s310, %s324
      %p326 = scmp.eq.s32.totalorder %s33, 0
      %p327 = por %p325, %p326
      %s329 = sadd.s32 %s328, 1
      %p332 = scmp.eq.s32.totalorder %s27, 1
      %p333 = scmp.ne.s32.totalorder %s328, %s330
      %p334 = scmp.eq.s32.totalorder %s27, 0
      %p335 = por %p333, %p334
      %p336 = scmp.ne.s32.totalorder %s328, %s330
      %p337 = scmp.eq.s32.totalorder %s32, 1
      %p338 = por %p336, %p337
      %p339 = scmp.ne.s32.totalorder %s330, %s331
      %p340 = scmp.eq.s32.totalorder %s32, 0
      %p341 = por %p339, %p340
      %p342 = scmp.ne.s32.totalorder %s330, %s331
      %p343 = scmp.eq.s32.totalorder %s33, 1
      %p344 = por %p342, %p343
      %p346 = scmp.ne.s32.totalorder %s331, %s345
      %p347 = scmp.eq.s32.totalorder %s33, 0
      %p348 = por %p346, %p347
      %s350 = sadd.s32 %s349, 1
      %p353 = scmp.eq.s32.totalorder %s27, 1
      %p354 = scmp.ne.s32.totalorder %s349, %s351
      %p355 = scmp.eq.s32.totalorder %s27, 0
      %p356 = por %p354, %p355
      %p357 = scmp.ne.s32.totalorder %s349, %s351
      %p358 = scmp.eq.s32.totalorder %s32, 1
      %p359 = por %p357, %p358
      %p360 = scmp.ne.s32.totalorder %s351, %s352
      %p361 = scmp.eq.s32.totalorder %s32, 0
      %p362 = por %p360, %p361
      %p363 = scmp.ne.s32.totalorder %s351, %s352
      %p364 = scmp.eq.s32.totalorder %s33, 1
      %p365 = por %p363, %p364
      %p367 = scmp.ne.s32.totalorder %s352, %s366
      %p368 = scmp.eq.s32.totalorder %s33, 0
      %p369 = por %p367, %p368
      %s371 = sadd.s32 %s370, 1
      %p374 = scmp.eq.s32.totalorder %s27, 1
      %p375 = scmp.ne.s32.totalorder %s370, %s372
      %p376 = scmp.eq.s32.totalorder %s27, 0
      %p377 = por %p375, %p376
      %p378 = scmp.ne.s32.totalorder %s370, %s372
      %p379 = scmp.eq.s32.totalorder %s32, 1
      %p380 = por %p378, %p379
      %p381 = scmp.ne.s32.totalorder %s372, %s373
      %p382 = scmp.eq.s32.totalorder %s32, 0
      %p383 = por %p381, %p382
      %p384 = scmp.ne.s32.totalorder %s372, %s373
      %p385 = scmp.eq.s32.totalorder %s33, 1
      %p386 = por %p384, %p385
      %p388 = scmp.ne.s32.totalorder %s373, %s387
      %p389 = scmp.eq.s32.totalorder %s33, 0
      %p390 = por %p388, %p389
      %s392 = sadd.s32 %s391, 1
      %p395 = scmp.eq.s32.totalorder %s27, 1
      %p396 = scmp.ne.s32.totalorder %s391, %s393
      %p397 = scmp.eq.s32.totalorder %s27, 0
      %p398 = por %p396, %p397
      %p399 = scmp.ne.s32.totalorder %s391, %s393
      %p400 = scmp.eq.s32.totalorder %s32, 1
      %p401 = por %p399, %p400
      %p402 = scmp.ne.s32.totalorder %s393, %s394
      %p403 = scmp.eq.s32.totalorder %s32, 0
      %p404 = por %p402, %p403
      %p405 = scmp.ne.s32.totalorder %s393, %s394
      %p406 = scmp.eq.s32.totalorder %s33, 1
      %p407 = por %p405, %p406
      %p409 = scmp.ne.s32.totalorder %s394, %s408
      %p410 = scmp.eq.s32.totalorder %s33, 0
      %p411 = por %p409, %p410
      %s413 = sadd.s32 %s412, 1
      %p416 = scmp.eq.s32.totalorder %s27, 1
      %p417 = scmp.ne.s32.totalorder %s412, %s414
      %p418 = scmp.eq.s32.totalorder %s27, 0
      %p419 = por %p417, %p418
      %p420 = scmp.ne.s32.totalorder %s412, %s414
      %p421 = scmp.eq.s32.totalorder %s32, 1
      %p422 = por %p420, %p421
      %p423 = scmp.ne.s32.totalorder %s414, %s415
      %p424 = scmp.eq.s32.totalorder %s32, 0
      %p425 = por %p423, %p424
      %p426 = scmp.ne.s32.totalorder %s414, %s415
      %p427 = scmp.eq.s32.totalorder %s33, 1
      %p428 = por %p426, %p427
      %p430 = scmp.ne.s32.totalorder %s415, %s429
      %p431 = scmp.eq.s32.totalorder %s33, 0
      %p432 = por %p430, %p431
      %s433 = ssub.s32 %s27, %s34
      %p434 = scmp.eq.s32.totalorder %s433, 0
      %s436 = sadd.s32 %s435, 1
      %s437 = scalar_select %p434, %s435, %s436
      %p440 = pneg %p434
      %p441 = scmp.eq.s32.totalorder %s27, 1
      %p442 = por %p440, %p441
      %p443 = scmp.ne.s32.totalorder %s435, %s438
      %p444 = scmp.eq.s32.totalorder %s27, 0
      %p445 = por %p443, %p444
      %p446 = scmp.ne.s32.totalorder %s435, %s438
      %p447 = scmp.eq.s32.totalorder %s32, 1
      %p448 = por %p446, %p447
      %p449 = scmp.ne.s32.totalorder %s438, %s439
      %p450 = scmp.eq.s32.totalorder %s32, 0
      %p451 = por %p449, %p450
      %p452 = scmp.ne.s32.totalorder %s438, %s439
      %p453 = scmp.eq.s32.totalorder %s33, 1
      %p454 = por %p452, %p453
      %p456 = scmp.ne.s32.totalorder %s439, %s455
      %p457 = scmp.eq.s32.totalorder %s33, 0
      %p458 = por %p456, %p457
      %p459 = scmp.le.s32.totalorder 1, %s27
      %p460 = scmp.lt.s32.totalorder %s27, 3
      %p461 = pnand %p459, %p460
      %p462 = pneg %p461
      // Predicated region
      $region9: #{option_compare_cell.1} parent=5 // pred_check
        _
      $region10: #{option_compare_cell.1} parent=5 // pred_check_branch
        %464 = sbr.rel (%p461) target = $region12
      $region11: #{option_compare_cell.1} parent=5 // pred_region
        %s465 = ssub.s32 %s27, 1
        // Predicated region
        $region13: #{option_compare_cell.1} parent=11 // pred_check
          %p466 = pneg %p152
        $region14: #{option_compare_cell.1} parent=11 // pred_check_branch
          %468 = sbr.rel (%p466) target = $region16
        $region15: #{option_compare_cell.1} parent=11 // pred_region
          _
        $region16: #{option_compare_cell.1} parent=11 // pred_fallthru
          _
        // Predicated region
        $region17: #{option_compare_cell.1} parent=11 // pred_check
          %p469 = pneg %p173
        $region18: #{option_compare_cell.1} parent=11 // pred_check_branch
          %471 = sbr.rel (%p469) target = $region20
        $region19: #{option_compare_cell.1} parent=11 // pred_region
          _
        $region20: #{option_compare_cell.1} parent=11 // pred_fallthru
          _
        // Predicated region
        $region21: #{option_compare_cell.1} parent=11 // pred_check
          %p472 = pneg %p194
        $region22: #{option_compare_cell.1} parent=11 // pred_check_branch
          %474 = sbr.rel (%p472) target = $region24
        $region23: #{option_compare_cell.1} parent=11 // pred_region
          _
        $region24: #{option_compare_cell.1} parent=11 // pred_fallthru
          _
        // Predicated region
        $region25: #{option_compare_cell.1} parent=11 // pred_check
          %p475 = pneg %p215
        $region26: #{option_compare_cell.1} parent=11 // pred_check_branch
          %477 = sbr.rel (%p475) target = $region28
        $region27: #{option_compare_cell.1} parent=11 // pred_region
          _
        $region28: #{option_compare_cell.1} parent=11 // pred_fallthru
          _
        // Predicated region
        $region29: #{option_compare_cell.1} parent=11 // pred_check
          %p478 = pneg %p236
        $region30: #{option_compare_cell.1} parent=11 // pred_check_branch
          %480 = sbr.rel (%p478) target = $region32
        $region31: #{option_compare_cell.1} parent=11 // pred_region
          _
        $region32: #{option_compare_cell.1} parent=11 // pred_fallthru
          _
        // Predicated region
        $region33: #{option_compare_cell.1} parent=11 // pred_check
          %p481 = pneg %p257
        $region34: #{option_compare_cell.1} parent=11 // pred_check_branch
          %483 = sbr.rel (%p481) target = $region36
        $region35: #{option_compare_cell.1} parent=11 // pred_region
          _
        $region36: #{option_compare_cell.1} parent=11 // pred_fallthru
          _
        // Predicated region
        $region37: #{option_compare_cell.1} parent=11 // pred_check
          %p484 = pneg %p278
        $region38: #{option_compare_cell.1} parent=11 // pred_check_branch
          %486 = sbr.rel (%p484) target = $region40
        $region39: #{option_compare_cell.1} parent=11 // pred_region
          _
        $region40: #{option_compare_cell.1} parent=11 // pred_fallthru
          _
        // Predicated region
        $region41: #{option_compare_cell.1} parent=11 // pred_check
          %p487 = pneg %p299
        $region42: #{option_compare_cell.1} parent=11 // pred_check_branch
          %489 = sbr.rel (%p487) target = $region44
        $region43: #{option_compare_cell.1} parent=11 // pred_region
          _
        $region44: #{option_compare_cell.1} parent=11 // pred_fallthru
          _
        // Predicated region
        $region45: #{option_compare_cell.1} parent=11 // pred_check
          %p490 = pneg %p320
        $region46: #{option_compare_cell.1} parent=11 // pred_check_branch
          %492 = sbr.rel (%p490) target = $region48
        $region47: #{option_compare_cell.1} parent=11 // pred_region
          _
        $region48: #{option_compare_cell.1} parent=11 // pred_fallthru
          _
        // Predicated region
        $region49: #{option_compare_cell.1} parent=11 // pred_check
          %p493 = pneg %p341
        $region50: #{option_compare_cell.1} parent=11 // pred_check_branch
          %495 = sbr.rel (%p493) target = $region52
        $region51: #{option_compare_cell.1} parent=11 // pred_region
          _
        $region52: #{option_compare_cell.1} parent=11 // pred_fallthru
          _
        // Predicated region
        $region53: #{option_compare_cell.1} parent=11 // pred_check
          %p496 = pneg %p362
        $region54: #{option_compare_cell.1} parent=11 // pred_check_branch
          %498 = sbr.rel (%p496) target = $region56
        $region55: #{option_compare_cell.1} parent=11 // pred_region
          _
        $region56: #{option_compare_cell.1} parent=11 // pred_fallthru
          _
        // Predicated region
        $region57: #{option_compare_cell.1} parent=11 // pred_check
          %p499 = pneg %p383
        $region58: #{option_compare_cell.1} parent=11 // pred_check_branch
          %501 = sbr.rel (%p499) target = $region60
        $region59: #{option_compare_cell.1} parent=11 // pred_region
          _
        $region60: #{option_compare_cell.1} parent=11 // pred_fallthru
          _
        // Predicated region
        $region61: #{option_compare_cell.1} parent=11 // pred_check
          %p502 = pneg %p404
        $region62: #{option_compare_cell.1} parent=11 // pred_check_branch
          %504 = sbr.rel (%p502) target = $region64
        $region63: #{option_compare_cell.1} parent=11 // pred_region
          _
        $region64: #{option_compare_cell.1} parent=11 // pred_fallthru
          _
        // Predicated region
        $region65: #{option_compare_cell.1} parent=11 // pred_check
          %p505 = pneg %p425
        $region66: #{option_compare_cell.1} parent=11 // pred_check_branch
          %507 = sbr.rel (%p505) target = $region68
        $region67: #{option_compare_cell.1} parent=11 // pred_region
          _
        $region68: #{option_compare_cell.1} parent=11 // pred_fallthru
          _
      $region12: #{option_compare_cell.1} parent=5 // pred_fallthru
        _
      %p508 = scmp.lt.s32.totalorder %s27, 2
      // Predicated region
      $region69: #{option_compare_cell.1} parent=5 // pred_check
        %p509 = pneg %p508
      $region70: #{option_compare_cell.1} parent=5 // pred_check_branch
        %511 = sbr.rel (%p509) target = $region72
      $region71: #{option_compare_cell.1} parent=5 // pred_region
        // Predicated region
        $region73: #{option_compare_cell.1} parent=71 // pred_check
          %p512 = pneg %p47
        $region74: #{option_compare_cell.1} parent=71 // pred_check_branch
          %514 = sbr.rel (%p512) target = $region76
        $region75: #{option_compare_cell.1} parent=71 // pred_region
          %p515 = scmp.lt.s32.totalorder %s27, 1
          %s516 = scalar_select %p515, %s27, 1
          %s517 = smul.addr %s516, 8
          %s518 = smul.addr %s517, 8
          %s519 = scalar_lea.vmem %s0, %s518
        $region76: #{option_compare_cell.1} parent=71 // pred_fallthru
          _
        // Predicated region
        $region77: #{option_compare_cell.1} parent=71 // pred_check
          %p520 = pneg %p73
        $region78: #{option_compare_cell.1} parent=71 // pred_check_branch
          %522 = sbr.rel (%p520) target = $region80
        $region79: #{option_compare_cell.1} parent=71 // pred_region
          %p523 = scmp.lt.s32.totalorder %s27, 1
          %s524 = scalar_select %p523, %s27, 1
          %s525 = smul.addr %s524, 4
          %s526 = smul.addr %s525, 8
          %s527 = scalar_lea.vmem %s1, %s526
        $region80: #{option_compare_cell.1} parent=71 // pred_fallthru
          _
        // Predicated region
        $region81: #{option_compare_cell.1} parent=71 // pred_check
          %p528 = pneg %p99
        $region82: #{option_compare_cell.1} parent=71 // pred_check_branch
          %530 = sbr.rel (%p528) target = $region84
        $region83: #{option_compare_cell.1} parent=71 // pred_region
          %p531 = scmp.lt.s32.totalorder %s27, 1
          %s532 = scalar_select %p531, %s27, 1
          %s533 = smul.addr %s532, 8
          %s534 = smul.addr %s533, 8
          %s535 = scalar_lea.vmem %s2, %s534
        $region84: #{option_compare_cell.1} parent=71 // pred_fallthru
          _
        // Predicated region
        $region85: #{option_compare_cell.1} parent=71 // pred_check
          %p536 = pneg %p125
        $region86: #{option_compare_cell.1} parent=71 // pred_check_branch
          %538 = sbr.rel (%p536) target = $region88
        $region87: #{option_compare_cell.1} parent=71 // pred_region
          %p539 = scmp.lt.s32.totalorder %s27, 1
          %s540 = scalar_select %p539, %s27, 1
          %s541 = smul.addr %s540, 4
          %s542 = smul.addr %s541, 8
          %s543 = scalar_lea.vmem %s3, %s542
        $region88: #{option_compare_cell.1} parent=71 // pred_fallthru
          _
      $region72: #{option_compare_cell.1} parent=5 // pred_fallthru
        _
      %p544 = scmp.le.s32.totalorder 1, %s27
      %p545 = scmp.lt.s32.totalorder %s27, 3
      %p546 = pnand %p544, %p545
      %p547 = pneg %p546
      // Predicated region
      $region89: #{option_compare_cell.1} parent=5 // pred_check
        _
      $region90: #{option_compare_cell.1} parent=5 // pred_check_branch
        %549 = sbr.rel (%p546) target = $region92
      $region91: #{option_compare_cell.1} parent=5 // pred_region
        %s550 = ssub.s32 %s27, 1
        %p551 = scmp.lt.s32.totalorder %s32, 1
        %s552 = scalar_select %p551, %s32, 1
        %s553 = smul.addr %s552, 8
        %s554 = smul.addr %s553, 8
        %s555 = scalar_lea.vmem %s0, %s554
        %p556 = pneg %p53
        %p557 = pneg %p50
        %p558 = scmp.lt.s32.totalorder %s32, 1
        %s559 = scalar_select %p558, %s32, 1
        %s560 = smul.addr %s559, 4
        %s561 = smul.addr %s560, 8
        %s562 = scalar_lea.vmem %s1, %s561
        %p563 = pneg %p79
        %p564 = pneg %p76
        %p565 = scmp.lt.s32.totalorder %s32, 1
        %s566 = scalar_select %p565, %s32, 1
        %s567 = smul.addr %s566, 8
        %s568 = smul.addr %s567, 8
        %s569 = scalar_lea.vmem %s2, %s568
        %p570 = pneg %p105
        %p571 = pneg %p102
        %p572 = scmp.lt.s32.totalorder %s32, 1
        %s573 = scalar_select %p572, %s32, 1
        %s574 = smul.addr %s573, 4
        %s575 = smul.addr %s574, 8
        %s576 = scalar_lea.vmem %s3, %s575
        %p577 = pneg %p131
        %p578 = pneg %p128
        %p579 = pneg %p152
        %p580 = pneg %p149
        %p581 = pneg %p173
        %p582 = pneg %p170
        %p583 = pneg %p194
        %p584 = pneg %p191
        %p585 = pneg %p215
        %p586 = pneg %p212
        %p587 = pneg %p236
        %p588 = pneg %p233
        %p589 = pneg %p257
        %p590 = pneg %p254
        %p591 = pneg %p278
        %p592 = pneg %p275
        %p593 = pneg %p299
        %p594 = pneg %p296
        %p595 = pneg %p320
        %p596 = pneg %p317
        %p597 = pneg %p341
        %p598 = pneg %p338
        %p599 = pneg %p362
        %p600 = pneg %p359
        %p601 = pneg %p383
        %p602 = pneg %p380
        %p603 = pneg %p404
        %p604 = pneg %p401
        %p605 = pneg %p425
        %p606 = pneg %p422
        %p607 = pneg %p451
        %p608 = pneg %p448
        %s609 = sand.u32 %s438, 1
        %s610 = scalar_lea.sflag [#allocation3], %s609
        %s611 = sand.u32 %s438, 1
        %s612 = smul.addr %s611, 4
        %s613 = scalar_lea.vmem [#allocation2], %s612
        %p614 = scmp.lt.s32.totalorder %s32, 1
        %s615 = scalar_select %p614, %s32, 1
        %s616 = smul.addr %s615, 8
        %s617 = smul.addr %s616, 8
        %s618 = scalar_lea.vmem %s0, %s617
        %p619 = scmp.lt.s32.totalorder %s32, 1
        %s620 = scalar_select %p619, %s32, 1
        %s621 = smul.addr %s620, 4
        %s622 = smul.addr %s621, 8
        %s623 = scalar_lea.vmem %s1, %s622
        %p624 = scmp.lt.s32.totalorder %s32, 1
        %s625 = scalar_select %p624, %s32, 1
        %s626 = smul.addr %s625, 8
        %s627 = smul.addr %s626, 8
        %s628 = scalar_lea.vmem %s2, %s627
        %p629 = scmp.lt.s32.totalorder %s32, 1
        %s630 = scalar_select %p629, %s32, 1
        %s631 = smul.addr %s630, 4
        %s632 = smul.addr %s631, 8
        %s633 = scalar_lea.vmem %s3, %s632
        %v634 = vld [vmem:[%s618] sm:$0xff]
        %v635 = vld [vmem:[%s618 + $0x8] sm:$0xff]
        %v636 = vld [vmem:[%s618 + $0x10] sm:$0xff]
        %v637 = vld [vmem:[%s618 + $0x18] sm:$0xff]
        %v638 = vld [vmem:[%s618 + $0x20] sm:$0xff]
        %v639 = vld [vmem:[%s618 + $0x28] sm:$0xff]
        %v640 = vld [vmem:[%s618 + $0x30] sm:$0xff]
        %v641 = vld [vmem:[%s618 + $0x38] sm:$0xff]
        %v642 = vld [vmem:[%s623] sm:$0xff]
        %v643 = vld [vmem:[%s623 + $0x8] sm:$0xff]
        %v644 = vld [vmem:[%s623 + $0x10] sm:$0xff]
        %v645 = vld [vmem:[%s623 + $0x18] sm:$0xff]
        %v646 = vld [vmem:[%s628] sm:$0xff]
        %v647 = vld [vmem:[%s628 + $0x8] sm:$0xff]
        %v648 = vld [vmem:[%s628 + $0x10] sm:$0xff]
        %v649 = vld [vmem:[%s628 + $0x18] sm:$0xff]
        %v650 = vld [vmem:[%s628 + $0x20] sm:$0xff]
        %v651 = vld [vmem:[%s628 + $0x28] sm:$0xff]
        %v652 = vld [vmem:[%s628 + $0x30] sm:$0xff]
        %v653 = vld [vmem:[%s628 + $0x38] sm:$0xff]
        %v654 = vld [vmem:[%s633] sm:$0xff]
        %v655 = vld [vmem:[%s633 + $0x8] sm:$0xff]
        %v656 = vld [vmem:[%s633 + $0x10] sm:$0xff]
        %v657 = vld [vmem:[%s633 + $0x18] sm:$0xff]
        %v658 = vld [vmem:[%s4] sm:$0xff]
        %v659 = vld [vmem:[%s4 + $0x8] sm:$0xff]
        %v660 = vld [vmem:[%s4 + $0x10] sm:$0xff]
        %v661 = vld [vmem:[%s4 + $0x18] sm:$0xff]
        %v662 = vld [vmem:[%s4 + $0x20] sm:$0xff]
        %v663 = vld [vmem:[%s4 + $0x28] sm:$0xff]
        %v664 = vld [vmem:[%s4 + $0x30] sm:$0xff]
        %v665 = vld [vmem:[%s4 + $0x38] sm:$0xff]
        %v666 = vld [vmem:[%s5] sm:$0x7]
        %v667 = vld [vmem:[%s6] sm:$0x7]
        %v668 = vld [vmem:[%s7] sm:$0x7]
        %v669 = vld [vmem:[%s8] sm:$0x1]
        %v670 = vld [vmem:[%s9] sm:$0xff]
        %v671 = vld [vmem:[%s9 + $0x8] sm:$0xff]
        %v672 = vld [vmem:[%s9 + $0x10] sm:$0xff]
        %v673 = vld [vmem:[%s9 + $0x18] sm:$0xff]
        %v674 = vld [vmem:[%s9 + $0x20] sm:$0xff]
        %v675 = vld [vmem:[%s9 + $0x28] sm:$0xff]
        %v676 = vld [vmem:[%s9 + $0x30] sm:$0xff]
        %v677 = vld [vmem:[%s9 + $0x38] sm:$0xff]
        %v678 = vld [vmem:[%s9 + $0x40] sm:$0xff]
        %v679 = vld [vmem:[%s9 + $0x48] sm:$0xff]
        %v680 = vld [vmem:[%s9 + $0x50] sm:$0xff]
        %v681 = vld [vmem:[%s9 + $0x58] sm:$0xff]
        %v682 = vld [vmem:[%s10] sm:$0xff]
        %v683 = vld [vmem:[%s10 + $0x8] sm:$0xff]
        %v684 = vld [vmem:[%s10 + $0x10] sm:$0xff]
        %v685 = vld [vmem:[%s10 + $0x18] sm:$0xff]
        %v686 = vld [vmem:[%s10 + $0x20] sm:$0xff]
        %v687 = vld [vmem:[%s10 + $0x28] sm:$0xff]
        %v688 = vld [vmem:[%s10 + $0x30] sm:$0xff]
        %v689 = vld [vmem:[%s10 + $0x38] sm:$0xff]
        %v690 = vld [vmem:[%s11] sm:$0xff]
        %v691 = vld [vmem:[%s11 + $0x8] sm:$0xff]
        %v692 = vld [vmem:[%s11 + $0x10] sm:$0xff]
        %v693 = vld [vmem:[%s11 + $0x18] sm:$0xff]
        %v694 = vld [vmem:[%s12] sm:$0xff]
        %v695 = vld [vmem:[%s12 + $0x8] sm:$0xff]
        %v696 = vld [vmem:[%s12 + $0x10] sm:$0xff]
        %v697 = vld [vmem:[%s12 + $0x18] sm:$0xff]
        %v698 = vld [vmem:[%s12 + $0x20] sm:$0xff]
        %v699 = vld [vmem:[%s12 + $0x28] sm:$0xff]
        %v700 = vld [vmem:[%s12 + $0x30] sm:$0xff]
        %v701 = vld [vmem:[%s12 + $0x38] sm:$0xff]
        %v702 = vld [vmem:[%s12 + $0x40] sm:$0xff]
        %v703 = vld [vmem:[%s12 + $0x48] sm:$0xff]
        %v704 = vld [vmem:[%s12 + $0x50] sm:$0xff]
        %v705 = vld [vmem:[%s12 + $0x58] sm:$0xff]
        %v706 = vld [vmem:[%s13] sm:$0xff]
        %v707 = vld [vmem:[%s13 + $0x8] sm:$0xff]
        %v708 = vld [vmem:[%s13 + $0x10] sm:$0xff]
        %v709 = vld [vmem:[%s13 + $0x18] sm:$0xff]
        %v710 = vld [vmem:[%s13 + $0x20] sm:$0xff]
        %v711 = vld [vmem:[%s13 + $0x28] sm:$0xff]
        %v712 = vld [vmem:[%s13 + $0x30] sm:$0xff]
        %v713 = vld [vmem:[%s13 + $0x38] sm:$0xff]
        %v714 = vld [vmem:[%s13 + $0x40] sm:$0xff]
        %v715 = vld [vmem:[%s13 + $0x48] sm:$0xff]
        %v716 = vld [vmem:[%s13 + $0x50] sm:$0xff]
        %v717 = vld [vmem:[%s13 + $0x58] sm:$0xff]
        %v718 = vld [vmem:[%s14] sm:$0x1]
        %v719 = vld [vmem:[%s15] sm:$0x1]
        %v720 = vld [vmem:[%s16] sm:$0x1]
        %v721 = vld [vmem:[%s17] sm:$0x1]
        %v722 = vlaneseq
        %v723 = vshrl.u32 %v722, 7
        %v724 = vsub.s32 0, %v723
        %v725 = vrot.slane %v666, %v724
        %v726 = vmul.f32 %v634, %v725
        %v727 = vmul.f32 %v635, %v725
        %v728 = vmul.f32 %v636, %v725
        %v729 = vmul.f32 %v637, %v725
        %v730 = vmul.f32 %v638, %v725
        %v731 = vmul.f32 %v639, %v725
        %v732 = vmul.f32 %v640, %v725
        %v733 = vmul.f32 %v641, %v725
        %vm734 = vcmask 261120
        %v735 = vsel %vm734, %v726, 0.0
        %736 = vadd.xlane.f32.xlu0 %v735
        %v737 = vpop.xlane.xlu0 %736
        %v738 = vsel %vm734, %v727, 0.0
        %739 = vadd.xlane.f32.xlu0 %v738
        %v740 = vpop.xlane.xlu0 %739
        %v741 = vsel %vm734, %v728, 0.0
        %742 = vadd.xlane.f32.xlu0 %v741
        %v743 = vpop.xlane.xlu0 %742
        %v744 = vsel %vm734, %v729, 0.0
        %745 = vadd.xlane.f32.xlu0 %v744
        %v746 = vpop.xlane.xlu0 %745
        %v747 = vsel %vm734, %v730, 0.0
        %748 = vadd.xlane.f32.xlu0 %v747
        %v749 = vpop.xlane.xlu0 %748
        %v750 = vsel %vm734, %v731, 0.0
        %751 = vadd.xlane.f32.xlu0 %v750
        %v752 = vpop.xlane.xlu0 %751
        %v753 = vsel %vm734, %v732, 0.0
        %754 = vadd.xlane.f32.xlu0 %v753
        %v755 = vpop.xlane.xlu0 %754
        %v756 = vsel %vm734, %v733, 0.0
        %757 = vadd.xlane.f32.xlu0 %v756
        %v758 = vpop.xlane.xlu0 %757
        %v759 = vlaneseq
        %v760 = vshrl.u32 %v759, 7
        %v761 = vsub.s32 2, %v760
        %v762 = vrot.slane %v666, %v761
        %v763 = vmul.f32 %v634, %v762
        %v764 = vmul.f32 %v635, %v762
        %v765 = vmul.f32 %v636, %v762
        %v766 = vmul.f32 %v637, %v762
        %v767 = vmul.f32 %v638, %v762
        %v768 = vmul.f32 %v639, %v762
        %v769 = vmul.f32 %v640, %v762
        %v770 = vmul.f32 %v641, %v762
        %v771 = vsel %vm734, %v763, 1.0
        %v772 = vsel %vm734, %v764, 1.0
        %v773 = vsel %vm734, %v765, 1.0
        %v774 = vsel %vm734, %v766, 1.0
        %v775 = vsel %vm734, %v767, 1.0
        %v776 = vsel %vm734, %v768, 1.0
        %v777 = vsel %vm734, %v769, 1.0
        %v778 = vsel %vm734, %v770, 1.0
        %v779 = vadd.f32 %v737, %v646
        %v780 = vadd.f32 %v740, %v647
        %v781 = vadd.f32 %v743, %v648
        %v782 = vadd.f32 %v746, %v649
        %v783 = vadd.f32 %v749, %v650
        %v784 = vadd.f32 %v752, %v651
        %v785 = vadd.f32 %v755, %v652
        %v786 = vadd.f32 %v758, %v653
        %795 = vrot.lane.b32.xlu0 %v779, 32
        %v796 = vpop.permute.xlu0 %795
        %797 = vrot.lane.b32.xlu0 %v780, 32
        %v798 = vpop.permute.xlu0 %797
        %799 = vrot.lane.b32.xlu0 %v781, 32
        %v800 = vpop.permute.xlu0 %799
        %801 = vrot.lane.b32.xlu0 %v782, 32
        %v802 = vpop.permute.xlu0 %801
        %803 = vrot.lane.b32.xlu0 %v783, 32
        %v804 = vpop.permute.xlu0 %803
        %805 = vrot.lane.b32.xlu0 %v784, 32
        %v806 = vpop.permute.xlu0 %805
        %807 = vrot.lane.b32.xlu0 %v785, 32
        %v808 = vpop.permute.xlu0 %807
        %809 = vrot.lane.b32.xlu0 %v786, 32
        %v810 = vpop.permute.xlu0 %809
        %v819 = vsel %vm734, %v634, %v796
        %v820 = vsel %vm734, %v635, %v798
        %v821 = vsel %vm734, %v636, %v800
        %v822 = vsel %vm734, %v637, %v802
        %v823 = vsel %vm734, %v638, %v804
        %v824 = vsel %vm734, %v639, %v806
        %v825 = vsel %vm734, %v640, %v808
        %v826 = vsel %vm734, %v641, %v810
        %vm827 = vcmask 269312
        %v829 = vsel %vm827, %v771, 0
        %v832 = vsel %vm827, %v772, 0
        %v835 = vsel %vm827, %v773, 0
        %v838 = vsel %vm827, %v774, 0
        %v841 = vsel %vm827, %v775, 0
        %v844 = vsel %vm827, %v776, 0
        %v847 = vsel %vm827, %v777, 0
        %v850 = vsel %vm827, %v778, 0
        %v853 = vsel %vm827, %v819, 0
        %v856 = vsel %vm827, %v820, 0
        %v859 = vsel %vm827, %v821, 0
        %v862 = vsel %vm827, %v822, 0
        %v865 = vsel %vm827, %v823, 0
        %v868 = vsel %vm827, %v824, 0
        %v871 = vsel %vm827, %v825, 0
        %v874 = vsel %vm827, %v826, 0
        %876 = vmatprep.subr.mxu0 0.0
        %877 = vmatpush1.xpose.msra.mxu0 %v853
        %878 = vmatprep.subr.mxu0 0.0
        %879 = vmatpush1.xpose.msra.mxu0 %v856
        %880 = vmatprep.subr.mxu0 0.0
        %881 = vmatpush1.xpose.msra.mxu0 %v859
        %882 = vmatprep.subr.mxu0 0.0
        %883 = vmatpush1.xpose.msra.mxu0 %v862
        %884 = vmatprep.subr.mxu0 0.0
        %885 = vmatpush1.xpose.msra.mxu0 %v865
        %886 = vmatprep.subr.mxu0 0.0
        %887 = vmatpush1.xpose.msra.mxu0 %v868
        %888 = vmatprep.subr.mxu0 0.0
        %889 = vmatpush1.xpose.msra.mxu0 %v871
        %890 = vmatprep.subr.mxu0 0.0
        %891 = vmatpush1.xpose.msra.mxu0 %v874
        %892 = vmatprep.subr.mxu0 0.0
        %893 = vmatpush1.xpose.msra.mxu0 0.0
        %894 = vmatprep.subr.mxu0 0.0
        %895 = vmatpush1.xpose.msra.mxu0 0.0
        %896 = vmatprep.subr.mxu0 0.0
        %897 = vmatpush1.xpose.msra.mxu0 0.0
        %898 = vmatprep.subr.mxu0 0.0
        %899 = vmatpush1.xpose.msra.mxu0 0.0
        %900 = vmatprep.subr.mxu0 0.0
        %901 = vmatpush1.xpose.msra.mxu0 0.0
        %902 = vmatprep.subr.mxu0 0.0
        %903 = vmatpush1.xpose.msra.mxu0 0.0
        %904 = vmatprep.subr.mxu0 0.0
        %905 = vmatpush1.xpose.msra.mxu0 0.0
        %906 = vmatprep.subr.mxu0 0.0
        %907 = vmatpush1.xpose.msra.mxu0 0.0
        %908 = vmatprep.subr.mxu0 0.0
        %909 = vmatpush1.xpose.msra.mxu0 0.0
        %910 = vmatprep.subr.mxu0 0.0
        %911 = vmatpush1.xpose.msra.mxu0 0.0
        %912 = vmatprep.subr.mxu0 0.0
        %913 = vmatpush1.xpose.msra.mxu0 0.0
        %914 = vmatprep.subr.mxu0 0.0
        %915 = vmatpush1.xpose.msra.mxu0 0.0
        %916 = vmatprep.subr.mxu0 0.0
        %917 = vmatpush1.xpose.msra.mxu0 0.0
        %918 = vmatprep.subr.mxu0 0.0
        %919 = vmatpush1.xpose.msra.mxu0 0.0
        %920 = vmatprep.subr.mxu0 0.0
        %921 = vmatpush1.xpose.msra.mxu0 0.0
        %922 = vmatprep.subr.mxu0 0.0
        %923 = vmatpush1.xpose.msra.mxu0 0.0
        %924 = vmatprep.subr.mxu0 0.0
        %925 = vmatpush1.xpose.msra.mxu0 0.0
        %926 = vmatprep.subr.mxu0 0.0
        %927 = vmatpush1.xpose.msra.mxu0 0.0
        %928 = vmatprep.subr.mxu0 0.0
        %929 = vmatpush1.xpose.msra.mxu0 0.0
        %930 = vmatprep.subr.mxu0 0.0
        %931 = vmatpush1.xpose.msra.mxu0 0.0
        %932 = vmatprep.subr.mxu0 0.0
        %933 = vmatpush1.xpose.msra.mxu0 0.0
        %934 = vmatprep.subr.mxu0 0.0
        %935 = vmatpush1.xpose.msra.mxu0 0.0
        %936 = vmatprep.subr.mxu0 0.0
        %937 = vmatpush1.xpose.msra.mxu0 0.0
        %938 = vmatprep.subr.mxu0 0.0
        %939 = vmatpush1.xpose.msra.mxu0 0.0
        %940 = vmatprep.mubr.f32.mxu0 0.0
        %941 = vmatmul.mubr.f32.gmra.mrb[0].mxu0 %v829
        %v942 = vpop.f32.mrb[0].mxu0
        %v943 = vadd.f32 0.0, %v942
        %v944 = vpop.f32.mrb[0].mxu0
        %945 = vmatprep.mubr.f32.mxu0 0.0
        %946 = vmatmul.mubr.f32.gmra.mrb[0].mxu0 %v832
        %v947 = vpop.f32.mrb[0].mxu0
        %v948 = vadd.f32 0.0, %v947
        %v949 = vpop.f32.mrb[0].mxu0
        %950 = vmatprep.mubr.f32.mxu0 0.0
        %951 = vmatmul.mubr.f32.gmra.mrb[0].mxu0 %v835
        %v952 = vpop.f32.mrb[0].mxu0
        %v953 = vadd.f32 0.0, %v952
        %v954 = vpop.f32.mrb[0].mxu0
        %955 = vmatprep.mubr.f32.mxu0 0.0
        %956 = vmatmul.mubr.f32.gmra.mrb[0].mxu0 %v838
        %v957 = vpop.f32.mrb[0].mxu0
        %v958 = vadd.f32 0.0, %v957
        %v959 = vpop.f32.mrb[0].mxu0
        %960 = vmatprep.mubr.f32.mxu0 0.0
        %961 = vmatmul.mubr.f32.gmra.mrb[0].mxu0 %v841
        %v962 = vpop.f32.mrb[0].mxu0
        %v963 = vadd.f32 0.0, %v962
        %v964 = vpop.f32.mrb[0].mxu0
        %965 = vmatprep.mubr.f32.mxu0 0.0
        %966 = vmatmul.mubr.f32.gmra.mrb[0].mxu0 %v844
        %v967 = vpop.f32.mrb[0].mxu0
        %v968 = vadd.f32 0.0, %v967
        %v969 = vpop.f32.mrb[0].mxu0
        %970 = vmatprep.mubr.f32.mxu0 0.0
        %971 = vmatmul.mubr.f32.gmra.mrb[0].mxu0 %v847
        %v972 = vpop.f32.mrb[0].mxu0
        %v973 = vadd.f32 0.0, %v972
        %v974 = vpop.f32.mrb[0].mxu0
        %975 = vmatprep.mubr.f32.mxu0 0.0
        %976 = vmatmul.mubr.f32.gmra.mrb[0].mxu0 %v850
        %v977 = vpop.f32.mrb[0].mxu0
        %v978 = vadd.f32 0.0, %v977
        %v979 = vpop.f32.mrb[0].mxu0
        %980 = vdwg.mxu0
        %vm981 = vcmask 130048
        %v982 = vsel %vm981, %v943, -inf
        %983 = vmax.xlane.f32.xlu0 %v982
        %v984 = vpop.xlane.xlu0 %983
        %v985 = vsel %vm981, %v948, -inf
        %986 = vmax.xlane.f32.xlu0 %v985
        %v987 = vpop.xlane.xlu0 %986
        %v988 = vsel %vm981, %v953, -inf
        %989 = vmax.xlane.f32.xlu0 %v988
        %v990 = vpop.xlane.xlu0 %989
        %v991 = vsel %vm981, %v958, -inf
        %992 = vmax.xlane.f32.xlu0 %v991
        %v993 = vpop.xlane.xlu0 %992
        %v994 = vsel %vm981, %v963, -inf
        %995 = vmax.xlane.f32.xlu0 %v994
        %v996 = vpop.xlane.xlu0 %995
        %v997 = vsel %vm981, %v968, -inf
        %998 = vmax.xlane.f32.xlu0 %v997
        %v999 = vpop.xlane.xlu0 %998
        %v1000 = vsel %vm981, %v973, -inf
        %1001 = vmax.xlane.f32.xlu0 %v1000
        %v1002 = vpop.xlane.xlu0 %1001
        %v1003 = vsel %vm981, %v978, -inf
        %1004 = vmax.xlane.f32.xlu0 %v1003
        %v1005 = vpop.xlane.xlu0 %1004
        %vm1006 = vcmask 261248
        %v1007 = vsel %vm1006, %v943, -inf
        %1008 = vmax.xlane.f32.xlu0 %v1007
        %v1009 = vpop.xlane.xlu0 %1008
        %v1010 = vsel %vm1006, %v948, -inf
        %1011 = vmax.xlane.f32.xlu0 %v1010
        %v1012 = vpop.xlane.xlu0 %1011
        %v1013 = vsel %vm1006, %v953, -inf
        %1014 = vmax.xlane.f32.xlu0 %v1013
        %v1015 = vpop.xlane.xlu0 %1014
        %v1016 = vsel %vm1006, %v958, -inf
        %1017 = vmax.xlane.f32.xlu0 %v1016
        %v1018 = vpop.xlane.xlu0 %1017
        %v1019 = vsel %vm1006, %v963, -inf
        %1020 = vmax.xlane.f32.xlu0 %v1019
        %v1021 = vpop.xlane.xlu0 %1020
        %v1022 = vsel %vm1006, %v968, -inf
        %1023 = vmax.xlane.f32.xlu0 %v1022
        %v1024 = vpop.xlane.xlu0 %1023
        %v1025 = vsel %vm1006, %v973, -inf
        %1026 = vmax.xlane.f32.xlu0 %v1025
        %v1027 = vpop.xlane.xlu0 %1026
        %v1028 = vsel %vm1006, %v978, -inf
        %1029 = vmax.xlane.f32.xlu0 %v1028
        %v1030 = vpop.xlane.xlu0 %1029
        %vm1031 = vcmask 392448
        %v1032 = vsel %vm1031, %v943, -inf
        %1033 = vmax.xlane.f32.xlu0 %v1032
        %v1034 = vpop.xlane.xlu0 %1033
        %v1035 = vsel %vm1031, %v948, -inf
        %1036 = vmax.xlane.f32.xlu0 %v1035
        %v1037 = vpop.xlane.xlu0 %1036
        %v1038 = vsel %vm1031, %v953, -inf
        %1039 = vmax.xlane.f32.xlu0 %v1038
        %v1040 = vpop.xlane.xlu0 %1039
        %v1041 = vsel %vm1031, %v958, -inf
        %1042 = vmax.xlane.f32.xlu0 %v1041
        %v1043 = vpop.xlane.xlu0 %1042
        %v1044 = vsel %vm1031, %v963, -inf
        %1045 = vmax.xlane.f32.xlu0 %v1044
        %v1046 = vpop.xlane.xlu0 %1045
        %v1047 = vsel %vm1031, %v968, -inf
        %1048 = vmax.xlane.f32.xlu0 %v1047
        %v1049 = vpop.xlane.xlu0 %1048
        %v1050 = vsel %vm1031, %v973, -inf
        %1051 = vmax.xlane.f32.xlu0 %v1050
        %v1052 = vpop.xlane.xlu0 %1051
        %v1053 = vsel %vm1031, %v978, -inf
        %1054 = vmax.xlane.f32.xlu0 %v1053
        %v1055 = vpop.xlane.xlu0 %1054
        %vm1056 = vcmask 523648
        %v1057 = vsel %vm1056, %v943, -inf
        %1058 = vmax.xlane.f32.xlu0 %v1057
        %v1059 = vpop.xlane.xlu0 %1058
        %v1060 = vsel %vm1056, %v948, -inf
        %1061 = vmax.xlane.f32.xlu0 %v1060
        %v1062 = vpop.xlane.xlu0 %1061
        %v1063 = vsel %vm1056, %v953, -inf
        %1064 = vmax.xlane.f32.xlu0 %v1063
        %v1065 = vpop.xlane.xlu0 %1064
        %v1066 = vsel %vm1056, %v958, -inf
        %1067 = vmax.xlane.f32.xlu0 %v1066
        %v1068 = vpop.xlane.xlu0 %1067
        %v1069 = vsel %vm1056, %v963, -inf
        %1070 = vmax.xlane.f32.xlu0 %v1069
        %v1071 = vpop.xlane.xlu0 %1070
        %v1072 = vsel %vm1056, %v968, -inf
        %1073 = vmax.xlane.f32.xlu0 %v1072
        %v1074 = vpop.xlane.xlu0 %1073
        %v1075 = vsel %vm1056, %v973, -inf
        %1076 = vmax.xlane.f32.xlu0 %v1075
        %v1077 = vpop.xlane.xlu0 %1076
        %v1078 = vsel %vm1056, %v978, -inf
        %1079 = vmax.xlane.f32.xlu0 %v1078
        %v1080 = vpop.xlane.xlu0 %1079
        %v1081 = vsel %vm981, %v984, %v1009
        %v1082 = vsel %vm981, %v987, %v1012
        %v1083 = vsel %vm981, %v990, %v1015
        %v1084 = vsel %vm981, %v993, %v1018
        %v1085 = vsel %vm981, %v996, %v1021
        %v1086 = vsel %vm981, %v999, %v1024
        %v1087 = vsel %vm981, %v1002, %v1027
        %v1088 = vsel %vm981, %v1005, %v1030
        %v1089 = vsel %vm734, %v1081, %v1034
        %v1090 = vsel %vm734, %v1082, %v1037
        %v1091 = vsel %vm734, %v1083, %v1040
        %v1092 = vsel %vm734, %v1084, %v1043
        %v1093 = vsel %vm734, %v1085, %v1046
        %v1094 = vsel %vm734, %v1086, %v1049
        %v1095 = vsel %vm734, %v1087, %v1052
        %v1096 = vsel %vm734, %v1088, %v1055
        %vm1097 = vcmask 392192
        %v1098 = vsel %vm1097, %v1089, %v1059
        %v1099 = vsel %vm1097, %v1090, %v1062
        %v1100 = vsel %vm1097, %v1091, %v1065
        %v1101 = vsel %vm1097, %v1092, %v1068
        %v1102 = vsel %vm1097, %v1093, %v1071
        %v1103 = vsel %vm1097, %v1094, %v1074
        %v1104 = vsel %vm1097, %v1095, %v1077
        %v1105 = vsel %vm1097, %v1096, %v1080
        %v1106 = vsub.f32 %v943, %v1098
        %v1107 = vsub.f32 %v948, %v1099
        %v1108 = vsub.f32 %v953, %v1100
        %v1109 = vsub.f32 %v958, %v1101
        %v1110 = vsub.f32 %v963, %v1102
        %v1111 = vsub.f32 %v968, %v1103
        %v1112 = vsub.f32 %v973, %v1104
        %v1113 = vsub.f32 %v978, %v1105
        %v1114 = vmul.f32 %v1106, 1.442695
        %v1115 = vpow.pop %v1114
        %v1116 = vmul.f32 %v1107, 1.442695
        %v1117 = vpow.pop %v1116
        %v1118 = vmul.f32 %v1108, 1.442695
        %v1119 = vpow.pop %v1118
        %v1120 = vmul.f32 %v1109, 1.442695
        %v1121 = vpow.pop %v1120
        %v1122 = vmul.f32 %v1110, 1.442695
        %v1123 = vpow.pop %v1122
        %v1124 = vmul.f32 %v1111, 1.442695
        %v1125 = vpow.pop %v1124
        %v1126 = vmul.f32 %v1112, 1.442695
        %v1127 = vpow.pop %v1126
        %v1128 = vmul.f32 %v1113, 1.442695
        %v1129 = vpow.pop %v1128
        %v1130 = vsel %vm981, %v1115, 0.0
        %1131 = vadd.xlane.f32.xlu0 %v1130
        %v1132 = vpop.xlane.xlu0 %1131
        %v1133 = vsel %vm981, %v1117, 0.0
        %1134 = vadd.xlane.f32.xlu0 %v1133
        %v1135 = vpop.xlane.xlu0 %1134
        %v1136 = vsel %vm981, %v1119, 0.0
        %1137 = vadd.xlane.f32.xlu0 %v1136
        %v1138 = vpop.xlane.xlu0 %1137
        %v1139 = vsel %vm981, %v1121, 0.0
        %1140 = vadd.xlane.f32.xlu0 %v1139
        %v1141 = vpop.xlane.xlu0 %1140
        %v1142 = vsel %vm981, %v1123, 0.0
        %1143 = vadd.xlane.f32.xlu0 %v1142
        %v1144 = vpop.xlane.xlu0 %1143
        %v1145 = vsel %vm981, %v1125, 0.0
        %1146 = vadd.xlane.f32.xlu0 %v1145
        %v1147 = vpop.xlane.xlu0 %1146
        %v1148 = vsel %vm981, %v1127, 0.0
        %1149 = vadd.xlane.f32.xlu0 %v1148
        %v1150 = vpop.xlane.xlu0 %1149
        %v1151 = vsel %vm981, %v1129, 0.0
        %1152 = vadd.xlane.f32.xlu0 %v1151
        %v1153 = vpop.xlane.xlu0 %1152
        %1162 = vrot.lane.b32.xlu0 %v1115, 112
        %v1163 = vpop.permute.xlu0 %1162
        %1164 = vrot.lane.b32.xlu0 %v1117, 112
        %v1165 = vpop.permute.xlu0 %1164
        %1166 = vrot.lane.b32.xlu0 %v1119, 112
        %v1167 = vpop.permute.xlu0 %1166
        %1168 = vrot.lane.b32.xlu0 %v1121, 112
        %v1169 = vpop.permute.xlu0 %1168
        %1170 = vrot.lane.b32.xlu0 %v1123, 112
        %v1171 = vpop.permute.xlu0 %1170
        %1172 = vrot.lane.b32.xlu0 %v1125, 112
        %v1173 = vpop.permute.xlu0 %1172
        %1174 = vrot.lane.b32.xlu0 %v1127, 112
        %v1175 = vpop.permute.xlu0 %1174
        %1176 = vrot.lane.b32.xlu0 %v1129, 112
        %v1177 = vpop.permute.xlu0 %1176
        %v1186 = vsel %vm981, %v1163, 0.0
        %1187 = vadd.xlane.f32.xlu0 %v1186
        %v1188 = vpop.xlane.xlu0 %1187
        %v1189 = vsel %vm981, %v1165, 0.0
        %1190 = vadd.xlane.f32.xlu0 %v1189
        %v1191 = vpop.xlane.xlu0 %1190
        %v1192 = vsel %vm981, %v1167, 0.0
        %1193 = vadd.xlane.f32.xlu0 %v1192
        %v1194 = vpop.xlane.xlu0 %1193
        %v1195 = vsel %vm981, %v1169, 0.0
        %1196 = vadd.xlane.f32.xlu0 %v1195
        %v1197 = vpop.xlane.xlu0 %1196
        %v1198 = vsel %vm981, %v1171, 0.0
        %1199 = vadd.xlane.f32.xlu0 %v1198
        %v1200 = vpop.xlane.xlu0 %1199
        %v1201 = vsel %vm981, %v1173, 0.0
        %1202 = vadd.xlane.f32.xlu0 %v1201
        %v1203 = vpop.xlane.xlu0 %1202
        %v1204 = vsel %vm981, %v1175, 0.0
        %1205 = vadd.xlane.f32.xlu0 %v1204
        %v1206 = vpop.xlane.xlu0 %1205
        %v1207 = vsel %vm981, %v1177, 0.0
        %1208 = vadd.xlane.f32.xlu0 %v1207
        %v1209 = vpop.xlane.xlu0 %1208
        %1210 = vrot.lane.b32.xlu0 %v1115, 96
        %v1211 = vpop.permute.xlu0 %1210
        %1212 = vrot.lane.b32.xlu0 %v1117, 96
        %v1213 = vpop.permute.xlu0 %1212
        %1214 = vrot.lane.b32.xlu0 %v1119, 96
        %v1215 = vpop.permute.xlu0 %1214
        %1216 = vrot.lane.b32.xlu0 %v1121, 96
        %v1217 = vpop.permute.xlu0 %1216
        %1218 = vrot.lane.b32.xlu0 %v1123, 96
        %v1219 = vpop.permute.xlu0 %1218
        %1220 = vrot.lane.b32.xlu0 %v1125, 96
        %v1221 = vpop.permute.xlu0 %1220
        %1222 = vrot.lane.b32.xlu0 %v1127, 96
        %v1223 = vpop.permute.xlu0 %1222
        %1224 = vrot.lane.b32.xlu0 %v1129, 96
        %v1225 = vpop.permute.xlu0 %1224
        %v1234 = vsel %vm981, %v1211, 0.0
        %1235 = vadd.xlane.f32.xlu0 %v1234
        %v1236 = vpop.xlane.xlu0 %1235
        %v1237 = vsel %vm981, %v1213, 0.0
        %1238 = vadd.xlane.f32.xlu0 %v1237
        %v1239 = vpop.xlane.xlu0 %1238
        %v1240 = vsel %vm981, %v1215, 0.0
        %1241 = vadd.xlane.f32.xlu0 %v1240
        %v1242 = vpop.xlane.xlu0 %1241
        %v1243 = vsel %vm981, %v1217, 0.0
        %1244 = vadd.xlane.f32.xlu0 %v1243
        %v1245 = vpop.xlane.xlu0 %1244
        %v1246 = vsel %vm981, %v1219, 0.0
        %1247 = vadd.xlane.f32.xlu0 %v1246
        %v1248 = vpop.xlane.xlu0 %1247
        %v1249 = vsel %vm981, %v1221, 0.0
        %1250 = vadd.xlane.f32.xlu0 %v1249
        %v1251 = vpop.xlane.xlu0 %1250
        %v1252 = vsel %vm981, %v1223, 0.0
        %1253 = vadd.xlane.f32.xlu0 %v1252
        %v1254 = vpop.xlane.xlu0 %1253
        %v1255 = vsel %vm981, %v1225, 0.0
        %1256 = vadd.xlane.f32.xlu0 %v1255
        %v1257 = vpop.xlane.xlu0 %1256
        %1258 = vrot.lane.b32.xlu0 %v1115, 80
        %v1259 = vpop.permute.xlu0 %1258
        %1260 = vrot.lane.b32.xlu0 %v1117, 80
        %v1261 = vpop.permute.xlu0 %1260
        %1262 = vrot.lane.b32.xlu0 %v1119, 80
        %v1263 = vpop.permute.xlu0 %1262
        %1264 = vrot.lane.b32.xlu0 %v1121, 80
        %v1265 = vpop.permute.xlu0 %1264
        %1266 = vrot.lane.b32.xlu0 %v1123, 80
        %v1267 = vpop.permute.xlu0 %1266
        %1268 = vrot.lane.b32.xlu0 %v1125, 80
        %v1269 = vpop.permute.xlu0 %1268
        %1270 = vrot.lane.b32.xlu0 %v1127, 80
        %v1271 = vpop.permute.xlu0 %1270
        %1272 = vrot.lane.b32.xlu0 %v1129, 80
        %v1273 = vpop.permute.xlu0 %1272
        %v1282 = vsel %vm981, %v1259, 0.0
        %1283 = vadd.xlane.f32.xlu0 %v1282
        %v1284 = vpop.xlane.xlu0 %1283
        %v1285 = vsel %vm981, %v1261, 0.0
        %1286 = vadd.xlane.f32.xlu0 %v1285
        %v1287 = vpop.xlane.xlu0 %1286
        %v1288 = vsel %vm981, %v1263, 0.0
        %1289 = vadd.xlane.f32.xlu0 %v1288
        %v1290 = vpop.xlane.xlu0 %1289
        %v1291 = vsel %vm981, %v1265, 0.0
        %1292 = vadd.xlane.f32.xlu0 %v1291
        %v1293 = vpop.xlane.xlu0 %1292
        %v1294 = vsel %vm981, %v1267, 0.0
        %1295 = vadd.xlane.f32.xlu0 %v1294
        %v1296 = vpop.xlane.xlu0 %1295
        %v1297 = vsel %vm981, %v1269, 0.0
        %1298 = vadd.xlane.f32.xlu0 %v1297
        %v1299 = vpop.xlane.xlu0 %1298
        %v1300 = vsel %vm981, %v1271, 0.0
        %1301 = vadd.xlane.f32.xlu0 %v1300
        %v1302 = vpop.xlane.xlu0 %1301
        %v1303 = vsel %vm981, %v1273, 0.0
        %1304 = vadd.xlane.f32.xlu0 %v1303
        %v1305 = vpop.xlane.xlu0 %1304
        %v1306 = vsel %vm981, %v1132, %v1188
        %v1307 = vsel %vm981, %v1135, %v1191
        %v1308 = vsel %vm981, %v1138, %v1194
        %v1309 = vsel %vm981, %v1141, %v1197
        %v1310 = vsel %vm981, %v1144, %v1200
        %v1311 = vsel %vm981, %v1147, %v1203
        %v1312 = vsel %vm981, %v1150, %v1206
        %v1313 = vsel %vm981, %v1153, %v1209
        %v1314 = vsel %vm734, %v1306, %v1236
        %v1315 = vsel %vm734, %v1307, %v1239
        %v1316 = vsel %vm734, %v1308, %v1242
        %v1317 = vsel %vm734, %v1309, %v1245
        %v1318 = vsel %vm734, %v1310, %v1248
        %v1319 = vsel %vm734, %v1311, %v1251
        %v1320 = vsel %vm734, %v1312, %v1254
        %v1321 = vsel %vm734, %v1313, %v1257
        %v1322 = vsel %vm1097, %v1314, %v1284
        %v1323 = vsel %vm1097, %v1315, %v1287
        %v1324 = vsel %vm1097, %v1316, %v1290
        %v1325 = vsel %vm1097, %v1317, %v1293
        %v1326 = vsel %vm1097, %v1318, %v1296
        %v1327 = vsel %vm1097, %v1319, %v1299
        %v1328 = vsel %vm1097, %v1320, %v1302
        %v1329 = vsel %vm1097, %v1321, %v1305
        %v1330 = vrcp.pop %v1322
        %v1331 = vrcp.pop %v1323
        %v1332 = vrcp.pop %v1324
        %v1333 = vrcp.pop %v1325
        %v1334 = vrcp.pop %v1326
        %v1335 = vrcp.pop %v1327
        %v1336 = vrcp.pop %v1328
        %v1337 = vrcp.pop %v1329
        %v1338 = vmul.f32 %v1115, %v1330
        %v1339 = vmul.f32 %v1117, %v1331
        %v1340 = vmul.f32 %v1119, %v1332
        %v1341 = vmul.f32 %v1121, %v1333
        %v1342 = vmul.f32 %v1123, %v1334
        %v1343 = vmul.f32 %v1125, %v1335
        %v1344 = vmul.f32 %v1127, %v1336
        %v1345 = vmul.f32 %v1129, %v1337
        %v1346 = vmul.f32 %v1338, %v658
        %v1347 = vmul.f32 %v1339, %v659
        %v1348 = vmul.f32 %v1340, %v660
        %v1349 = vmul.f32 %v1341, %v661
        %v1350 = vmul.f32 %v1342, %v662
        %v1351 = vmul.f32 %v1343, %v663
        %v1352 = vmul.f32 %v1344, %v664
        %v1353 = vmul.f32 %v1345, %v665
        %vm1354 = vcmask 523264
        %v1356 = vsel %vm1354, %v1346, 0
        %v1359 = vsel %vm1354, %v1347, 0
        %v1362 = vsel %vm1354, %v1348, 0
        %v1365 = vsel %vm1354, %v1349, 0
        %v1368 = vsel %vm1354, %v1350, 0
        %v1371 = vsel %vm1354, %v1351, 0
        %v1374 = vsel %vm1354, %v1352, 0
        %v1377 = vsel %vm1354, %v1353, 0
        %1379 = vmatprep.subr.mxu0 0.0
        %1380 = vmatpush1.msra.mxu0 %v634
        %1381 = vmatprep.subr.mxu0 0.0
        %1382 = vmatpush1.msra.mxu0 %v635
        %1383 = vmatprep.subr.mxu0 0.0
        %1384 = vmatpush1.msra.mxu0 %v636
        %1385 = vmatprep.subr.mxu0 0.0
        %1386 = vmatpush1.msra.mxu0 %v637
        %1387 = vmatprep.subr.mxu0 0.0
        %1388 = vmatpush1.msra.mxu0 %v638
        %1389 = vmatprep.subr.mxu0 0.0
        %1390 = vmatpush1.msra.mxu0 %v639
        %1391 = vmatprep.subr.mxu0 0.0
        %1392 = vmatpush1.msra.mxu0 %v640
        %1393 = vmatprep.subr.mxu0 0.0
        %1394 = vmatpush1.msra.mxu0 %v641
        %1395 = vmatprep.subr.mxu0 0.0
        %1396 = vmatpush1.msra.mxu0 0.0
        %1397 = vmatprep.subr.mxu0 0.0
        %1398 = vmatpush1.msra.mxu0 0.0
        %1399 = vmatprep.subr.mxu0 0.0
        %1400 = vmatpush1.msra.mxu0 0.0
        %1401 = vmatprep.subr.mxu0 0.0
        %1402 = vmatpush1.msra.mxu0 0.0
        %1403 = vmatprep.subr.mxu0 0.0
        %1404 = vmatpush1.msra.mxu0 0.0
        %1405 = vmatprep.subr.mxu0 0.0
        %1406 = vmatpush1.msra.mxu0 0.0
        %1407 = vmatprep.subr.mxu0 0.0
        %1408 = vmatpush1.msra.mxu0 0.0
        %1409 = vmatprep.subr.mxu0 0.0
        %1410 = vmatpush1.msra.mxu0 0.0
        %1411 = vmatprep.subr.mxu0 0.0
        %1412 = vmatpush1.msra.mxu0 0.0
        %1413 = vmatprep.subr.mxu0 0.0
        %1414 = vmatpush1.msra.mxu0 0.0
        %1415 = vmatprep.subr.mxu0 0.0
        %1416 = vmatpush1.msra.mxu0 0.0
        %1417 = vmatprep.subr.mxu0 0.0
        %1418 = vmatpush1.msra.mxu0 0.0
        %1419 = vmatprep.subr.mxu0 0.0
        %1420 = vmatpush1.msra.mxu0 0.0
        %1421 = vmatprep.subr.mxu0 0.0
        %1422 = vmatpush1.msra.mxu0 0.0
        %1423 = vmatprep.subr.mxu0 0.0
        %1424 = vmatpush1.msra.mxu0 0.0
        %1425 = vmatprep.subr.mxu0 0.0
        %1426 = vmatpush1.msra.mxu0 0.0
        %1427 = vmatprep.subr.mxu0 0.0
        %1428 = vmatpush1.msra.mxu0 0.0
        %1429 = vmatprep.subr.mxu0 0.0
        %1430 = vmatpush1.msra.mxu0 0.0
        %1431 = vmatprep.subr.mxu0 0.0
        %1432 = vmatpush1.msra.mxu0 0.0
        %1433 = vmatprep.subr.mxu0 0.0
        %1434 = vmatpush1.msra.mxu0 0.0
        %1435 = vmatprep.subr.mxu0 0.0
        %1436 = vmatpush1.msra.mxu0 0.0
        %1437 = vmatprep.subr.mxu0 0.0
        %1438 = vmatpush1.msra.mxu0 0.0
        %1439 = vmatprep.subr.mxu0 0.0
        %1440 = vmatpush1.msra.mxu0 0.0
        %1441 = vmatprep.subr.mxu0 0.0
        %1442 = vmatpush1.msra.mxu0 0.0
        %1443 = vmatprep.mubr.f32.mxu0 0.0
        %1444 = vmatmul.mubr.f32.gmra.mrb[0].mxu0 %v1356
        %v1445 = vpop.f32.mrb[0].mxu0
        %v1446 = vadd.f32 0.0, %v1445
        %v1447 = vpop.f32.mrb[0].mxu0
        %1448 = vmatprep.mubr.f32.mxu0 0.0
        %1449 = vmatmul.mubr.f32.gmra.mrb[0].mxu0 %v1359
        %v1450 = vpop.f32.mrb[0].mxu0
        %v1451 = vadd.f32 0.0, %v1450
        %v1452 = vpop.f32.mrb[0].mxu0
        %1453 = vmatprep.mubr.f32.mxu0 0.0
        %1454 = vmatmul.mubr.f32.gmra.mrb[0].mxu0 %v1362
        %v1455 = vpop.f32.mrb[0].mxu0
        %v1456 = vadd.f32 0.0, %v1455
        %v1457 = vpop.f32.mrb[0].mxu0
        %1458 = vmatprep.mubr.f32.mxu0 0.0
        %1459 = vmatmul.mubr.f32.gmra.mrb[0].mxu0 %v1365
        %v1460 = vpop.f32.mrb[0].mxu0
        %v1461 = vadd.f32 0.0, %v1460
        %v1462 = vpop.f32.mrb[0].mxu0
        %1463 = vmatprep.mubr.f32.mxu0 0.0
        %1464 = vmatmul.mubr.f32.gmra.mrb[0].mxu0 %v1368
        %v1465 = vpop.f32.mrb[0].mxu0
        %v1466 = vadd.f32 0.0, %v1465
        %v1467 = vpop.f32.mrb[0].mxu0
        %1468 = vmatprep.mubr.f32.mxu0 0.0
        %1469 = vmatmul.mubr.f32.gmra.mrb[0].mxu0 %v1371
        %v1470 = vpop.f32.mrb[0].mxu0
        %v1471 = vadd.f32 0.0, %v1470
        %v1472 = vpop.f32.mrb[0].mxu0
        %1473 = vmatprep.mubr.f32.mxu0 0.0
        %1474 = vmatmul.mubr.f32.gmra.mrb[0].mxu0 %v1374
        %v1475 = vpop.f32.mrb[0].mxu0
        %v1476 = vadd.f32 0.0, %v1475
        %v1477 = vpop.f32.mrb[0].mxu0
        %1478 = vmatprep.mubr.f32.mxu0 0.0
        %1479 = vmatmul.mubr.f32.gmra.mrb[0].mxu0 %v1377
        %v1480 = vpop.f32.mrb[0].mxu0
        %v1481 = vadd.f32 0.0, %v1480
        %v1482 = vpop.f32.mrb[0].mxu0
        %1483 = vdwg.mxu0
        %v1484 = vmul.f32 %v634, %v1446
        %v1485 = vmul.f32 %v635, %v1451
        %v1486 = vmul.f32 %v636, %v1456
        %v1487 = vmul.f32 %v637, %v1461
        %v1488 = vmul.f32 %v638, %v1466
        %v1489 = vmul.f32 %v639, %v1471
        %v1490 = vmul.f32 %v640, %v1476
        %v1491 = vmul.f32 %v641, %v1481
        %1500 = vrot.lane.b32.xlu0 %v1446, 32
        %v1501 = vpop.permute.xlu0 %1500
        %1502 = vrot.lane.b32.xlu0 %v1451, 32
        %v1503 = vpop.permute.xlu0 %1502
        %1504 = vrot.lane.b32.xlu0 %v1456, 32
        %v1505 = vpop.permute.xlu0 %1504
        %1506 = vrot.lane.b32.xlu0 %v1461, 32
        %v1507 = vpop.permute.xlu0 %1506
        %1508 = vrot.lane.b32.xlu0 %v1466, 32
        %v1509 = vpop.permute.xlu0 %1508
        %1510 = vrot.lane.b32.xlu0 %v1471, 32
        %v1511 = vpop.permute.xlu0 %1510
        %1512 = vrot.lane.b32.xlu0 %v1476, 32
        %v1513 = vpop.permute.xlu0 %1512
        %1514 = vrot.lane.b32.xlu0 %v1481, 32
        %v1515 = vpop.permute.xlu0 %1514
        %1532 = vrot.lane.b32.xlu0 %v1484, 64
        %v1533 = vpop.permute.xlu0 %1532
        %1534 = vrot.lane.b32.xlu0 %v1485, 64
        %v1535 = vpop.permute.xlu0 %1534
        %1536 = vrot.lane.b32.xlu0 %v1486, 64
        %v1537 = vpop.permute.xlu0 %1536
        %1538 = vrot.lane.b32.xlu0 %v1487, 64
        %v1539 = vpop.permute.xlu0 %1538
        %1540 = vrot.lane.b32.xlu0 %v1488, 64
        %v1541 = vpop.permute.xlu0 %1540
        %1542 = vrot.lane.b32.xlu0 %v1489, 64
        %v1543 = vpop.permute.xlu0 %1542
        %1544 = vrot.lane.b32.xlu0 %v1490, 64
        %v1545 = vpop.permute.xlu0 %1544
        %1546 = vrot.lane.b32.xlu0 %v1491, 64
        %v1547 = vpop.permute.xlu0 %1546
        %v1556 = vsel %vm734, %v634, %v1501
        %v1557 = vsel %vm734, %v635, %v1503
        %v1558 = vsel %vm734, %v636, %v1505
        %v1559 = vsel %vm734, %v637, %v1507
        %v1560 = vsel %vm734, %v638, %v1509
        %v1561 = vsel %vm734, %v639, %v1511
        %v1562 = vsel %vm734, %v640, %v1513
        %v1563 = vsel %vm734, %v641, %v1515
        %v1564 = vsel %vm1354, %v1556, %v1533
        %v1565 = vsel %vm1354, %v1557, %v1535
        %v1566 = vsel %vm1354, %v1558, %v1537
        %v1567 = vsel %vm1354, %v1559, %v1539
        %v1568 = vsel %vm1354, %v1560, %v1541
        %v1569 = vsel %vm1354, %v1561, %v1543
        %v1570 = vsel %vm1354, %v1562, %v1545
        %v1571 = vsel %vm1354, %v1563, %v1547
        %v1573 = vlaneseq
        %v1574 = vshrl.u32 %v1573, 7
        %v1575 = vsub.s32 0, %v1574
        %v1576 = vrot.slane %v718, %v1575
        %vm1578 = vcmask 785408
        %v1580 = vsel %vm1578, %v1564, 0
        %v1583 = vsel %vm1578, %v1565, 0
        %v1586 = vsel %vm1578, %v1566, 0
        %v1589 = vsel %vm1578, %v1567, 0
        %v1592 = vsel %vm1578, %v1568, 0
        %v1595 = vsel %vm1578, %v1569, 0
        %v1598 = vsel %vm1578, %v1570, 0
        %v1601 = vsel %vm1578, %v1571, 0
        %1603 = vmatprep.subr.mxu0 0.0
        %1604 = vmatpush1.msra.mxu0 %v670
        %1605 = vmatprep.subr.mxu0 0.0
        %1606 = vmatpush1.msra.mxu0 %v671
        %1607 = vmatprep.subr.mxu0 0.0
        %1608 = vmatpush1.msra.mxu0 %v672
        %1609 = vmatprep.subr.mxu0 0.0
        %1610 = vmatpush1.msra.mxu0 %v673
        %1611 = vmatprep.subr.mxu0 0.0
        %1612 = vmatpush1.msra.mxu0 %v674
        %1613 = vmatprep.subr.mxu0 0.0
        %1614 = vmatpush1.msra.mxu0 %v675
        %1615 = vmatprep.subr.mxu0 0.0
        %1616 = vmatpush1.msra.mxu0 %v676
        %1617 = vmatprep.subr.mxu0 0.0
        %1618 = vmatpush1.msra.mxu0 %v677
        %1619 = vmatprep.subr.mxu0 0.0
        %1620 = vmatpush1.msra.mxu0 %v678
        %1621 = vmatprep.subr.mxu0 0.0
        %1622 = vmatpush1.msra.mxu0 %v679
        %1623 = vmatprep.subr.mxu0 0.0
        %1624 = vmatpush1.msra.mxu0 %v680
        %1625 = vmatprep.subr.mxu0 0.0
        %1626 = vmatpush1.msra.mxu0 %v681
        %1627 = vmatprep.subr.mxu0 0.0
        %1628 = vmatpush1.msra.mxu0 0.0
        %1629 = vmatprep.subr.mxu0 0.0
        %1630 = vmatpush1.msra.mxu0 0.0
        %1631 = vmatprep.subr.mxu0 0.0
        %1632 = vmatpush1.msra.mxu0 0.0
        %1633 = vmatprep.subr.mxu0 0.0
        %1634 = vmatpush1.msra.mxu0 0.0
        %1635 = vmatprep.subr.mxu0 0.0
        %1636 = vmatpush1.msra.mxu0 0.0
        %1637 = vmatprep.subr.mxu0 0.0
        %1638 = vmatpush1.msra.mxu0 0.0
        %1639 = vmatprep.subr.mxu0 0.0
        %1640 = vmatpush1.msra.mxu0 0.0
        %1641 = vmatprep.subr.mxu0 0.0
        %1642 = vmatpush1.msra.mxu0 0.0
        %1643 = vmatprep.subr.mxu0 0.0
        %1644 = vmatpush1.msra.mxu0 0.0
        %1645 = vmatprep.subr.mxu0 0.0
        %1646 = vmatpush1.msra.mxu0 0.0
        %1647 = vmatprep.subr.mxu0 0.0
        %1648 = vmatpush1.msra.mxu0 0.0
        %1649 = vmatprep.subr.mxu0 0.0
        %1650 = vmatpush1.msra.mxu0 0.0
        %1651 = vmatprep.subr.mxu0 0.0
        %1652 = vmatpush1.msra.mxu0 0.0
        %1653 = vmatprep.subr.mxu0 0.0
        %1654 = vmatpush1.msra.mxu0 0.0
        %1655 = vmatprep.subr.mxu0 0.0
        %1656 = vmatpush1.msra.mxu0 0.0
        %1657 = vmatprep.subr.mxu0 0.0
        %1658 = vmatpush1.msra.mxu0 0.0
        %1659 = vmatprep.subr.mxu0 0.0
        %1660 = vmatpush1.msra.mxu0 0.0
        %1661 = vmatprep.subr.mxu0 0.0
        %1662 = vmatpush1.msra.mxu0 0.0
        %1663 = vmatprep.subr.mxu0 0.0
        %1664 = vmatpush1.msra.mxu0 0.0
        %1665 = vmatprep.subr.mxu0 0.0
        %1666 = vmatpush1.msra.mxu0 0.0
        %1667 = vmatprep.mubr.f32.mxu0 0.0
        %1668 = vmatmul.mubr.f32.gmra.mrb[0].mxu0 %v1580
        %v1669 = vpop.f32.mrb[0].mxu0
        %v1670 = vadd.f32 %v1576, %v1669
        %v1671 = vpop.f32.mrb[0].mxu0
        %1672 = vmatprep.mubr.f32.mxu0 0.0
        %1673 = vmatmul.mubr.f32.gmra.mrb[0].mxu0 %v1583
        %v1674 = vpop.f32.mrb[0].mxu0
        %v1675 = vadd.f32 %v1576, %v1674
        %v1676 = vpop.f32.mrb[0].mxu0
        %1677 = vmatprep.mubr.f32.mxu0 0.0
        %1678 = vmatmul.mubr.f32.gmra.mrb[0].mxu0 %v1586
        %v1679 = vpop.f32.mrb[0].mxu0
        %v1680 = vadd.f32 %v1576, %v1679
        %v1681 = vpop.f32.mrb[0].mxu0
        %1682 = vmatprep.mubr.f32.mxu0 0.0
        %1683 = vmatmul.mubr.f32.gmra.mrb[0].mxu0 %v1589
        %v1684 = vpop.f32.mrb[0].mxu0
        %v1685 = vadd.f32 %v1576, %v1684
        %v1686 = vpop.f32.mrb[0].mxu0
        %1687 = vmatprep.mubr.f32.mxu0 0.0
        %1688 = vmatmul.mubr.f32.gmra.mrb[0].mxu0 %v1592
        %v1689 = vpop.f32.mrb[0].mxu0
        %v1690 = vadd.f32 %v1576, %v1689
        %v1691 = vpop.f32.mrb[0].mxu0
        %1692 = vmatprep.mubr.f32.mxu0 0.0
        %1693 = vmatmul.mubr.f32.gmra.mrb[0].mxu0 %v1595
        %v1694 = vpop.f32.mrb[0].mxu0
        %v1695 = vadd.f32 %v1576, %v1694
        %v1696 = vpop.f32.mrb[0].mxu0
        %1697 = vmatprep.mubr.f32.mxu0 0.0
        %1698 = vmatmul.mubr.f32.gmra.mrb[0].mxu0 %v1598
        %v1699 = vpop.f32.mrb[0].mxu0
        %v1700 = vadd.f32 %v1576, %v1699
        %v1701 = vpop.f32.mrb[0].mxu0
        %1702 = vmatprep.mubr.f32.mxu0 0.0
        %1703 = vmatmul.mubr.f32.gmra.mrb[0].mxu0 %v1601
        %v1704 = vpop.f32.mrb[0].mxu0
        %v1705 = vadd.f32 %v1576, %v1704
        %v1706 = vpop.f32.mrb[0].mxu0
        %1707 = vdwg.mxu0
        %v1708 = vtanh.pop %v1670
        %v1709 = vtanh.pop %v1675
        %v1710 = vtanh.pop %v1680
        %v1711 = vtanh.pop %v1685
        %v1712 = vtanh.pop %v1690
        %v1713 = vtanh.pop %v1695
        %v1714 = vtanh.pop %v1700
        %v1715 = vtanh.pop %v1705
        %v1717 = vlaneseq
        %v1718 = vshrl.u32 %v1717, 7
        %v1719 = vsub.s32 0, %v1718
        %v1720 = vrot.slane %v669, %v1719
        %v1722 = vmul.f32 %v642, %v1720
        %v1723 = vmul.f32 %v643, %v1720
        %v1724 = vmul.f32 %v644, %v1720
        %v1725 = vmul.f32 %v645, %v1720
        %v1726 = vsel %vm734, %v1722, 0.0
        %1727 = vadd.xlane.f32.xlu0 %v1726
        %v1728 = vpop.xlane.xlu0 %1727
        %v1729 = vsel %vm734, %v1723, 0.0
        %1730 = vadd.xlane.f32.xlu0 %v1729
        %v1731 = vpop.xlane.xlu0 %1730
        %v1732 = vsel %vm734, %v1724, 0.0
        %1733 = vadd.xlane.f32.xlu0 %v1732
        %v1734 = vpop.xlane.xlu0 %1733
        %v1735 = vsel %vm734, %v1725, 0.0
        %1736 = vadd.xlane.f32.xlu0 %v1735
        %v1737 = vpop.xlane.xlu0 %1736
        %v1738 = vadd.f32 %v1728, %v654
        %v1739 = vadd.f32 %v1731, %v655
        %v1740 = vadd.f32 %v1734, %v656
        %v1741 = vadd.f32 %v1737, %v657
        %vm1742 = vcmask 7168
        %v1743 = vsel %vm1742, %v1738, -inf
        %v1744 = vrot.slane %v1743, 4
        %v1745 = vmax.f32 %v1743, %v1744
        %v1746 = vrot.slane %v1745, 2
        %v1747 = vmax.f32 %v1745, %v1746
        %v1748 = vrot.slane %v1747, 1
        %v1749 = vmax.f32 %v1747, %v1748
        %v1750 = vsel %vm1742, %v1739, -inf
        %v1751 = vrot.slane %v1750, 4
        %v1752 = vmax.f32 %v1750, %v1751
        %v1753 = vrot.slane %v1752, 2
        %v1754 = vmax.f32 %v1752, %v1753
        %v1755 = vrot.slane %v1754, 1
        %v1756 = vmax.f32 %v1754, %v1755
        %v1757 = vsel %vm1742, %v1740, -inf
        %v1758 = vrot.slane %v1757, 4
        %v1759 = vmax.f32 %v1757, %v1758
        %v1760 = vrot.slane %v1759, 2
        %v1761 = vmax.f32 %v1759, %v1760
        %v1762 = vrot.slane %v1761, 1
        %v1763 = vmax.f32 %v1761, %v1762
        %v1764 = vsel %vm1742, %v1741, -inf
        %v1765 = vrot.slane %v1764, 4
        %v1766 = vmax.f32 %v1764, %v1765
        %v1767 = vrot.slane %v1766, 2
        %v1768 = vmax.f32 %v1766, %v1767
        %v1769 = vrot.slane %v1768, 1
        %v1770 = vmax.f32 %v1768, %v1769
        %v1771 = vsub.f32 %v1738, %v1749
        %v1772 = vsub.f32 %v1739, %v1756
        %v1773 = vsub.f32 %v1740, %v1763
        %v1774 = vsub.f32 %v1741, %v1770
        %v1775 = vmul.f32 %v1771, 1.442695
        %v1776 = vpow.pop %v1775
        %v1777 = vmul.f32 %v1772, 1.442695
        %v1778 = vpow.pop %v1777
        %v1779 = vmul.f32 %v1773, 1.442695
        %v1780 = vpow.pop %v1779
        %v1781 = vmul.f32 %v1774, 1.442695
        %v1782 = vpow.pop %v1781
        %v1783 = vsel %vm1742, %v1776, 0.0
        %v1784 = vrot.slane %v1783, 4
        %v1785 = vadd.f32 %v1783, %v1784
        %v1786 = vrot.slane %v1785, 2
        %v1787 = vadd.f32 %v1785, %v1786
        %v1788 = vrot.slane %v1787, 1
        %v1789 = vadd.f32 %v1787, %v1788
        %v1790 = vsel %vm1742, %v1778, 0.0
        %v1791 = vrot.slane %v1790, 4
        %v1792 = vadd.f32 %v1790, %v1791
        %v1793 = vrot.slane %v1792, 2
        %v1794 = vadd.f32 %v1792, %v1793
        %v1795 = vrot.slane %v1794, 1
        %v1796 = vadd.f32 %v1794, %v1795
        %v1797 = vsel %vm1742, %v1780, 0.0
        %v1798 = vrot.slane %v1797, 4
        %v1799 = vadd.f32 %v1797, %v1798
        %v1800 = vrot.slane %v1799, 2
        %v1801 = vadd.f32 %v1799, %v1800
        %v1802 = vrot.slane %v1801, 1
        %v1803 = vadd.f32 %v1801, %v1802
        %v1804 = vsel %vm1742, %v1782, 0.0
        %v1805 = vrot.slane %v1804, 4
        %v1806 = vadd.f32 %v1804, %v1805
        %v1807 = vrot.slane %v1806, 2
        %v1808 = vadd.f32 %v1806, %v1807
        %v1809 = vrot.slane %v1808, 1
        %v1810 = vadd.f32 %v1808, %v1809
        %v1811 = vrcp.pop %v1789
        %v1812 = vrcp.pop %v1796
        %v1813 = vrcp.pop %v1803
        %v1814 = vrcp.pop %v1810
        %v1815 = vmul.f32 %v1776, %v1811
        %v1816 = vmul.f32 %v1778, %v1812
        %v1817 = vmul.f32 %v1780, %v1813
        %v1818 = vmul.f32 %v1782, %v1814
        %1820 = vset.pattern.permute.xlu0 0
        %1821 = vperm.xlu0 %1820, %v1815
        %v1822 = vpop.permute.xlu0 %1821
        %1825 = vset.pattern.permute.xlu0 0
        %1826 = vperm.xlu0 %1825, %v1816
        %v1827 = vpop.permute.xlu0 %1826
        %1830 = vset.pattern.permute.xlu0 0
        %1831 = vperm.xlu0 %1830, %v1817
        %v1832 = vpop.permute.xlu0 %1831
        %1835 = vset.pattern.permute.xlu0 0
        %1836 = vperm.xlu0 %1835, %v1818
        %v1837 = vpop.permute.xlu0 %1836
        %v1839 = vmul.f32 %v642, %v1822
        %v1840 = vmul.f32 %v643, %v1827
        %v1841 = vmul.f32 %v644, %v1832
        %v1842 = vmul.f32 %v645, %v1837
        %v1843 = vsel %vm734, %v1839, 0.0
        %v1844 = vrot.slane %v1843, 4
        %v1845 = vadd.f32 %v1843, %v1844
        %v1846 = vrot.slane %v1845, 2
        %v1847 = vadd.f32 %v1845, %v1846
        %v1848 = vrot.slane %v1847, 1
        %v1849 = vadd.f32 %v1847, %v1848
        %v1850 = vsel %vm734, %v1840, 0.0
        %v1851 = vrot.slane %v1850, 4
        %v1852 = vadd.f32 %v1850, %v1851
        %v1853 = vrot.slane %v1852, 2
        %v1854 = vadd.f32 %v1852, %v1853
        %v1855 = vrot.slane %v1854, 1
        %v1856 = vadd.f32 %v1854, %v1855
        %v1857 = vsel %vm734, %v1841, 0.0
        %v1858 = vrot.slane %v1857, 4
        %v1859 = vadd.f32 %v1857, %v1858
        %v1860 = vrot.slane %v1859, 2
        %v1861 = vadd.f32 %v1859, %v1860
        %v1862 = vrot.slane %v1861, 1
        %v1863 = vadd.f32 %v1861, %v1862
        %v1864 = vsel %vm734, %v1842, 0.0
        %v1865 = vrot.slane %v1864, 4
        %v1866 = vadd.f32 %v1864, %v1865
        %v1867 = vrot.slane %v1866, 2
        %v1868 = vadd.f32 %v1866, %v1867
        %v1869 = vrot.slane %v1868, 1
        %v1870 = vadd.f32 %v1868, %v1869
        %vm1875 = vcmask 1041409
        %v1876 = vsel %vm1875, %v1856, %v1849
        %vm1877 = vcmask 1042434
        %v1878 = vsel %vm1877, %v1863, %v1876
        %vm1879 = vcmask 1043459
        %v1880 = vsel %vm1879, %v1870, %v1878
        %v1881 = vsel %vm734, %v1880, 0
        %1883 = vmatprep.subr.mxu0 0.0
        %1884 = vmatpush1.msra.mxu0 %v690
        %1885 = vmatprep.subr.mxu0 0.0
        %1886 = vmatpush1.msra.mxu0 %v691
        %1887 = vmatprep.subr.mxu0 0.0
        %1888 = vmatpush1.msra.mxu0 %v692
        %1889 = vmatprep.subr.mxu0 0.0
        %1890 = vmatpush1.msra.mxu0 %v693
        %1891 = vmatprep.subr.mxu0 0.0
        %1892 = vmatpush1.msra.mxu0 0.0
        %1893 = vmatprep.subr.mxu0 0.0
        %1894 = vmatpush1.msra.mxu0 0.0
        %1895 = vmatprep.subr.mxu0 0.0
        %1896 = vmatpush1.msra.mxu0 0.0
        %1897 = vmatprep.subr.mxu0 0.0
        %1898 = vmatpush1.msra.mxu0 0.0
        %1899 = vmatprep.subr.mxu0 0.0
        %1900 = vmatpush1.msra.mxu0 0.0
        %1901 = vmatprep.subr.mxu0 0.0
        %1902 = vmatpush1.msra.mxu0 0.0
        %1903 = vmatprep.subr.mxu0 0.0
        %1904 = vmatpush1.msra.mxu0 0.0
        %1905 = vmatprep.subr.mxu0 0.0
        %1906 = vmatpush1.msra.mxu0 0.0
        %1907 = vmatprep.subr.mxu0 0.0
        %1908 = vmatpush1.msra.mxu0 0.0
        %1909 = vmatprep.subr.mxu0 0.0
        %1910 = vmatpush1.msra.mxu0 0.0
        %1911 = vmatprep.subr.mxu0 0.0
        %1912 = vmatpush1.msra.mxu0 0.0
        %1913 = vmatprep.subr.mxu0 0.0
        %1914 = vmatpush1.msra.mxu0 0.0
        %1915 = vmatprep.subr.mxu0 0.0
        %1916 = vmatpush1.msra.mxu0 0.0
        %1917 = vmatprep.subr.mxu0 0.0
        %1918 = vmatpush1.msra.mxu0 0.0
        %1919 = vmatprep.subr.mxu0 0.0
        %1920 = vmatpush1.msra.mxu0 0.0
        %1921 = vmatprep.subr.mxu0 0.0
        %1922 = vmatpush1.msra.mxu0 0.0
        %1923 = vmatprep.subr.mxu0 0.0
        %1924 = vmatpush1.msra.mxu0 0.0
        %1925 = vmatprep.subr.mxu0 0.0
        %1926 = vmatpush1.msra.mxu0 0.0
        %1927 = vmatprep.subr.mxu0 0.0
        %1928 = vmatpush1.msra.mxu0 0.0
        %1929 = vmatprep.subr.mxu0 0.0
        %1930 = vmatpush1.msra.mxu0 0.0
        %1931 = vmatprep.subr.mxu0 0.0
        %1932 = vmatpush1.msra.mxu0 0.0
        %1933 = vmatprep.subr.mxu0 0.0
        %1934 = vmatpush1.msra.mxu0 0.0
        %1935 = vmatprep.subr.mxu0 0.0
        %1936 = vmatpush1.msra.mxu0 0.0
        %1937 = vmatprep.subr.mxu0 0.0
        %1938 = vmatpush1.msra.mxu0 0.0
        %1939 = vmatprep.subr.mxu0 0.0
        %1940 = vmatpush1.msra.mxu0 0.0
        %1941 = vmatprep.subr.mxu0 0.0
        %1942 = vmatpush1.msra.mxu0 0.0
        %1943 = vmatprep.subr.mxu0 0.0
        %1944 = vmatpush1.msra.mxu0 0.0
        %1945 = vmatprep.subr.mxu0 0.0
        %1946 = vmatpush1.msra.mxu0 0.0
        %1947 = vmatprep.mubr.f32.mxu0 0.0
        %1948 = vmatmul.mubr.f32.gmra.mrb[0].mxu0 %v1881
        %v1949 = vpop.f32.mrb[0].mxu0
        %v1950 = vadd.f32 0.0, %v1949
        %v1951 = vpop.f32.mrb[0].mxu0
        %1952 = vdwg.mxu0
        %1961 = vrot.lane.b32.xlu0 %v1708, 32
        %v1962 = vpop.permute.xlu0 %1961
        %1963 = vrot.lane.b32.xlu0 %v1709, 32
        %v1964 = vpop.permute.xlu0 %1963
        %1965 = vrot.lane.b32.xlu0 %v1710, 32
        %v1966 = vpop.permute.xlu0 %1965
        %1967 = vrot.lane.b32.xlu0 %v1711, 32
        %v1968 = vpop.permute.xlu0 %1967
        %1969 = vrot.lane.b32.xlu0 %v1712, 32
        %v1970 = vpop.permute.xlu0 %1969
        %1971 = vrot.lane.b32.xlu0 %v1713, 32
        %v1972 = vpop.permute.xlu0 %1971
        %1973 = vrot.lane.b32.xlu0 %v1714, 32
        %v1974 = vpop.permute.xlu0 %1973
        %1975 = vrot.lane.b32.xlu0 %v1715, 32
        %v1976 = vpop.permute.xlu0 %1975
        %v1985 = vsel %vm734, %v634, %v1962
        %v1986 = vsel %vm734, %v635, %v1964
        %v1987 = vsel %vm734, %v636, %v1966
        %v1988 = vsel %vm734, %v637, %v1968
        %v1989 = vsel %vm734, %v638, %v1970
        %v1990 = vsel %vm734, %v639, %v1972
        %v1991 = vsel %vm734, %v640, %v1974
        %v1992 = vsel %vm734, %v641, %v1976
        %v1994 = vlaneseq
        %v1995 = vshrl.u32 %v1994, 7
        %v1996 = vsub.s32 0, %v1995
        %v1997 = vrot.slane %v719, %v1996
        %v2000 = vsel %vm1354, %v1985, 0
        %v2003 = vsel %vm1354, %v1986, 0
        %v2006 = vsel %vm1354, %v1987, 0
        %v2009 = vsel %vm1354, %v1988, 0
        %v2012 = vsel %vm1354, %v1989, 0
        %v2015 = vsel %vm1354, %v1990, 0
        %v2018 = vsel %vm1354, %v1991, 0
        %v2021 = vsel %vm1354, %v1992, 0
        %2023 = vmatprep.subr.mxu0 0.0
        %2024 = vmatpush1.msra.mxu0 %v682
        %2025 = vmatprep.subr.mxu0 0.0
        %2026 = vmatpush1.msra.mxu0 %v683
        %2027 = vmatprep.subr.mxu0 0.0
        %2028 = vmatpush1.msra.mxu0 %v684
        %2029 = vmatprep.subr.mxu0 0.0
        %2030 = vmatpush1.msra.mxu0 %v685
        %2031 = vmatprep.subr.mxu0 0.0
        %2032 = vmatpush1.msra.mxu0 %v686
        %2033 = vmatprep.subr.mxu0 0.0
        %2034 = vmatpush1.msra.mxu0 %v687
        %2035 = vmatprep.subr.mxu0 0.0
        %2036 = vmatpush1.msra.mxu0 %v688
        %2037 = vmatprep.subr.mxu0 0.0
        %2038 = vmatpush1.msra.mxu0 %v689
        %2039 = vmatprep.subr.mxu0 0.0
        %2040 = vmatpush1.msra.mxu0 0.0
        %2041 = vmatprep.subr.mxu0 0.0
        %2042 = vmatpush1.msra.mxu0 0.0
        %2043 = vmatprep.subr.mxu0 0.0
        %2044 = vmatpush1.msra.mxu0 0.0
        %2045 = vmatprep.subr.mxu0 0.0
        %2046 = vmatpush1.msra.mxu0 0.0
        %2047 = vmatprep.subr.mxu0 0.0
        %2048 = vmatpush1.msra.mxu0 0.0
        %2049 = vmatprep.subr.mxu0 0.0
        %2050 = vmatpush1.msra.mxu0 0.0
        %2051 = vmatprep.subr.mxu0 0.0
        %2052 = vmatpush1.msra.mxu0 0.0
        %2053 = vmatprep.subr.mxu0 0.0
        %2054 = vmatpush1.msra.mxu0 0.0
        %2055 = vmatprep.subr.mxu0 0.0
        %2056 = vmatpush1.msra.mxu0 0.0
        %2057 = vmatprep.subr.mxu0 0.0
        %2058 = vmatpush1.msra.mxu0 0.0
        %2059 = vmatprep.subr.mxu0 0.0
        %2060 = vmatpush1.msra.mxu0 0.0
        %2061 = vmatprep.subr.mxu0 0.0
        %2062 = vmatpush1.msra.mxu0 0.0
        %2063 = vmatprep.subr.mxu0 0.0
        %2064 = vmatpush1.msra.mxu0 0.0
        %2065 = vmatprep.subr.mxu0 0.0
        %2066 = vmatpush1.msra.mxu0 0.0
        %2067 = vmatprep.subr.mxu0 0.0
        %2068 = vmatpush1.msra.mxu0 0.0
        %2069 = vmatprep.subr.mxu0 0.0
        %2070 = vmatpush1.msra.mxu0 0.0
        %2071 = vmatprep.subr.mxu0 0.0
        %2072 = vmatpush1.msra.mxu0 0.0
        %2073 = vmatprep.subr.mxu0 0.0
        %2074 = vmatpush1.msra.mxu0 0.0
        %2075 = vmatprep.subr.mxu0 0.0
        %2076 = vmatpush1.msra.mxu0 0.0
        %2077 = vmatprep.subr.mxu0 0.0
        %2078 = vmatpush1.msra.mxu0 0.0
        %2079 = vmatprep.subr.mxu0 0.0
        %2080 = vmatpush1.msra.mxu0 0.0
        %2081 = vmatprep.subr.mxu0 0.0
        %2082 = vmatpush1.msra.mxu0 0.0
        %2083 = vmatprep.subr.mxu0 0.0
        %2084 = vmatpush1.msra.mxu0 0.0
        %2085 = vmatprep.subr.mxu0 0.0
        %2086 = vmatpush1.msra.mxu0 0.0
        %2087 = vmatprep.mubr.f32.mxu0 0.0
        %2088 = vmatmul.mubr.f32.gmra.mrb[0].mxu0 %v2000
        %v2089 = vpop.f32.mrb[0].mxu0
        %v2090 = vadd.f32 %v1997, %v2089
        %v2091 = vpop.f32.mrb[0].mxu0
        %2092 = vmatprep.mubr.f32.mxu0 0.0
        %2093 = vmatmul.mubr.f32.gmra.mrb[0].mxu0 %v2003
        %v2094 = vpop.f32.mrb[0].mxu0
        %v2095 = vadd.f32 %v1997, %v2094
        %v2096 = vpop.f32.mrb[0].mxu0
        %2097 = vmatprep.mubr.f32.mxu0 0.0
        %2098 = vmatmul.mubr.f32.gmra.mrb[0].mxu0 %v2006
        %v2099 = vpop.f32.mrb[0].mxu0
        %v2100 = vadd.f32 %v1997, %v2099
        %v2101 = vpop.f32.mrb[0].mxu0
        %2102 = vmatprep.mubr.f32.mxu0 0.0
        %2103 = vmatmul.mubr.f32.gmra.mrb[0].mxu0 %v2009
        %v2104 = vpop.f32.mrb[0].mxu0
        %v2105 = vadd.f32 %v1997, %v2104
        %v2106 = vpop.f32.mrb[0].mxu0
        %2107 = vmatprep.mubr.f32.mxu0 0.0
        %2108 = vmatmul.mubr.f32.gmra.mrb[0].mxu0 %v2012
        %v2109 = vpop.f32.mrb[0].mxu0
        %v2110 = vadd.f32 %v1997, %v2109
        %v2111 = vpop.f32.mrb[0].mxu0
        %2112 = vmatprep.mubr.f32.mxu0 0.0
        %2113 = vmatmul.mubr.f32.gmra.mrb[0].mxu0 %v2015
        %v2114 = vpop.f32.mrb[0].mxu0
        %v2115 = vadd.f32 %v1997, %v2114
        %v2116 = vpop.f32.mrb[0].mxu0
        %2117 = vmatprep.mubr.f32.mxu0 0.0
        %2118 = vmatmul.mubr.f32.gmra.mrb[0].mxu0 %v2018
        %v2119 = vpop.f32.mrb[0].mxu0
        %v2120 = vadd.f32 %v1997, %v2119
        %v2121 = vpop.f32.mrb[0].mxu0
        %2122 = vmatprep.mubr.f32.mxu0 0.0
        %2123 = vmatmul.mubr.f32.gmra.mrb[0].mxu0 %v2021
        %v2124 = vpop.f32.mrb[0].mxu0
        %v2125 = vadd.f32 %v1997, %v2124
        %v2126 = vpop.f32.mrb[0].mxu0
        %2127 = vdwg.mxu0
        %v2130 = vunpack.c.l.s4 1966171168
        %v2131 = vunpack.c.0.s8 %v2130
        %v2132 = vlaneseq
        %v2133 = vshrl.u32 %v2132, 7
        %v2134 = vsub.s32 %v2131, %v2133
        %v2135 = vrot.slane %v1950, %v2134
        %v2136 = vcombine.high %v2135, %v2135
        %v2138 = vunpack.c.l.s4 1966171168
        %v2139 = vunpack.c.0.s8 %v2138
        %v2140 = vlaneseq
        %v2141 = vshrl.u32 %v2140, 7
        %v2142 = vsub.s32 %v2139, %v2141
        %v2143 = vrot.slane %v2135, %v2142
        %v2145 = vunpack.c.l.s4 1966171168
        %v2146 = vunpack.c.0.s8 %v2145
        %v2147 = vlaneseq
        %v2148 = vshrl.u32 %v2147, 7
        %v2149 = vsub.s32 %v2146, %v2148
        %v2150 = vrot.slane %v2136, %v2149
        %v2151 = vcombine.high %v2143, %v2143
        %v2152 = vcombine.high %v2150, %v2150
        %v2153 = vlaneseq
        %v2154 = vshrl.u32 %v2153, 7
        %v2155 = vsub.s32 0, %v2154
        %v2156 = vrot.slane %v2143, %v2155
        %v2157 = vlaneseq
        %v2158 = vshrl.u32 %v2157, 7
        %v2159 = vsub.s32 0, %v2158
        %v2160 = vrot.slane %v2150, %v2159
        %v2161 = vlaneseq
        %v2162 = vshrl.u32 %v2161, 7
        %v2163 = vsub.s32 0, %v2162
        %v2164 = vrot.slane %v2151, %v2163
        %v2165 = vlaneseq
        %v2166 = vshrl.u32 %v2165, 7
        %v2167 = vsub.s32 0, %v2166
        %v2168 = vrot.slane %v2152, %v2167
        %v2173 = vadd.f32 %v2090, %v2156
        %v2174 = vadd.f32 %v2095, %v2156
        %v2175 = vadd.f32 %v2100, %v2160
        %v2176 = vadd.f32 %v2105, %v2160
        %v2177 = vadd.f32 %v2110, %v2164
        %v2178 = vadd.f32 %v2115, %v2164
        %v2179 = vadd.f32 %v2120, %v2168
        %v2180 = vadd.f32 %v2125, %v2168
        %v2181 = vsub.f32 0.0, %v2173
        %v2182 = vsub.f32 0.0, %v2174
        %v2183 = vsub.f32 0.0, %v2175
        %v2184 = vsub.f32 0.0, %v2176
        %v2185 = vsub.f32 0.0, %v2177
        %v2186 = vsub.f32 0.0, %v2178
        %v2187 = vsub.f32 0.0, %v2179
        %v2188 = vsub.f32 0.0, %v2180
        %v2189 = vmul.f32 %v2181, 1.442695
        %v2190 = vpow.pop %v2189
        %v2191 = vmul.f32 %v2182, 1.442695
        %v2192 = vpow.pop %v2191
        %v2193 = vmul.f32 %v2183, 1.442695
        %v2194 = vpow.pop %v2193
        %v2195 = vmul.f32 %v2184, 1.442695
        %v2196 = vpow.pop %v2195
        %v2197 = vmul.f32 %v2185, 1.442695
        %v2198 = vpow.pop %v2197
        %v2199 = vmul.f32 %v2186, 1.442695
        %v2200 = vpow.pop %v2199
        %v2201 = vmul.f32 %v2187, 1.442695
        %v2202 = vpow.pop %v2201
        %v2203 = vmul.f32 %v2188, 1.442695
        %v2204 = vpow.pop %v2203
        %v2205 = vadd.f32 %v2190, 1.0
        %v2206 = vadd.f32 %v2192, 1.0
        %v2207 = vadd.f32 %v2194, 1.0
        %v2208 = vadd.f32 %v2196, 1.0
        %v2209 = vadd.f32 %v2198, 1.0
        %v2210 = vadd.f32 %v2200, 1.0
        %v2211 = vadd.f32 %v2202, 1.0
        %v2212 = vadd.f32 %v2204, 1.0
        %v2213 = vrcp.pop %v2205
        %v2214 = vrcp.pop %v2206
        %v2215 = vrcp.pop %v2207
        %v2216 = vrcp.pop %v2208
        %v2217 = vrcp.pop %v2209
        %v2218 = vrcp.pop %v2210
        %v2219 = vrcp.pop %v2211
        %v2220 = vrcp.pop %v2212
        %v2221 = vsub.f32 %v634, %v1708
        %v2222 = vsub.f32 %v635, %v1709
        %v2223 = vsub.f32 %v636, %v1710
        %v2224 = vsub.f32 %v637, %v1711
        %v2225 = vsub.f32 %v638, %v1712
        %v2226 = vsub.f32 %v639, %v1713
        %v2227 = vsub.f32 %v640, %v1714
        %v2228 = vsub.f32 %v641, %v1715
        %v2229 = vmul.f32 %v2213, %v2221
        %v2230 = vmul.f32 %v2214, %v2222
        %v2231 = vmul.f32 %v2215, %v2223
        %v2232 = vmul.f32 %v2216, %v2224
        %v2233 = vmul.f32 %v2217, %v2225
        %v2234 = vmul.f32 %v2218, %v2226
        %v2235 = vmul.f32 %v2219, %v2227
        %v2236 = vmul.f32 %v2220, %v2228
        %v2237 = vadd.f32 %v1708, %v2229
        %v2238 = vadd.f32 %v1709, %v2230
        %v2239 = vadd.f32 %v1710, %v2231
        %v2240 = vadd.f32 %v1711, %v2232
        %v2241 = vadd.f32 %v1712, %v2233
        %v2242 = vadd.f32 %v1713, %v2234
        %v2243 = vadd.f32 %v1714, %v2235
        %v2244 = vadd.f32 %v1715, %v2236
        %v2245 = vlaneseq
        %v2246 = vshrl.u32 %v2245, 7
        %v2247 = vsub.s32 0, %v2246
        %v2248 = vrot.slane %v667, %v2247
        %v2249 = vmul.f32 %v642, %v2248
        %v2250 = vmul.f32 %v643, %v2248
        %v2251 = vmul.f32 %v644, %v2248
        %v2252 = vmul.f32 %v645, %v2248
        %v2253 = vsel %vm734, %v2249, 0.0
        %2254 = vadd.xlane.f32.xlu0 %v2253
        %v2255 = vpop.xlane.xlu0 %2254
        %v2256 = vsel %vm734, %v2250, 0.0
        %2257 = vadd.xlane.f32.xlu0 %v2256
        %v2258 = vpop.xlane.xlu0 %2257
        %v2259 = vsel %vm734, %v2251, 0.0
        %2260 = vadd.xlane.f32.xlu0 %v2259
        %v2261 = vpop.xlane.xlu0 %2260
        %v2262 = vsel %vm734, %v2252, 0.0
        %2263 = vadd.xlane.f32.xlu0 %v2262
        %v2264 = vpop.xlane.xlu0 %2263
        %v2265 = vlaneseq
        %v2266 = vshrl.u32 %v2265, 7
        %v2267 = vsub.s32 1, %v2266
        %v2268 = vrot.slane %v667, %v2267
        %v2269 = vmul.f32 %v2237, %v2268
        %v2270 = vmul.f32 %v2238, %v2268
        %v2271 = vmul.f32 %v2239, %v2268
        %v2272 = vmul.f32 %v2240, %v2268
        %v2273 = vmul.f32 %v2241, %v2268
        %v2274 = vmul.f32 %v2242, %v2268
        %v2275 = vmul.f32 %v2243, %v2268
        %v2276 = vmul.f32 %v2244, %v2268
        %v2277 = vsel %vm734, %v2269, 0.0
        %2278 = vadd.xlane.f32.xlu0 %v2277
        %v2279 = vpop.xlane.xlu0 %2278
        %v2280 = vsel %vm734, %v2270, 0.0
        %2281 = vadd.xlane.f32.xlu0 %v2280
        %v2282 = vpop.xlane.xlu0 %2281
        %v2283 = vsel %vm734, %v2271, 0.0
        %2284 = vadd.xlane.f32.xlu0 %v2283
        %v2285 = vpop.xlane.xlu0 %2284
        %v2286 = vsel %vm734, %v2272, 0.0
        %2287 = vadd.xlane.f32.xlu0 %v2286
        %v2288 = vpop.xlane.xlu0 %2287
        %v2289 = vsel %vm734, %v2273, 0.0
        %2290 = vadd.xlane.f32.xlu0 %v2289
        %v2291 = vpop.xlane.xlu0 %2290
        %v2292 = vsel %vm734, %v2274, 0.0
        %2293 = vadd.xlane.f32.xlu0 %v2292
        %v2294 = vpop.xlane.xlu0 %2293
        %v2295 = vsel %vm734, %v2275, 0.0
        %2296 = vadd.xlane.f32.xlu0 %v2295
        %v2297 = vpop.xlane.xlu0 %2296
        %v2298 = vsel %vm734, %v2276, 0.0
        %2299 = vadd.xlane.f32.xlu0 %v2298
        %v2300 = vpop.xlane.xlu0 %2299
        %v2301 = vlaneseq
        %v2302 = vshrl.u32 %v2301, 7
        %v2303 = vsub.s32 2, %v2302
        %v2304 = vrot.slane %v667, %v2303
        %v2305 = vmul.f32 %v642, %v2304
        %v2306 = vmul.f32 %v643, %v2304
        %v2307 = vmul.f32 %v644, %v2304
        %v2308 = vmul.f32 %v645, %v2304
        %v2309 = vsel %vm734, %v2305, 1.0
        %v2310 = vsel %vm734, %v2306, 1.0
        %v2311 = vsel %vm734, %v2307, 1.0
        %v2312 = vsel %vm734, %v2308, 1.0
        %v2313 = vadd.f32 %v2279, %v646
        %v2314 = vadd.f32 %v2282, %v647
        %v2315 = vadd.f32 %v2285, %v648
        %v2316 = vadd.f32 %v2288, %v649
        %v2317 = vadd.f32 %v2291, %v650
        %v2318 = vadd.f32 %v2294, %v651
        %v2319 = vadd.f32 %v2297, %v652
        %v2320 = vadd.f32 %v2300, %v653
        %2329 = vrot.lane.b32.xlu0 %v2313, 32
        %v2330 = vpop.permute.xlu0 %2329
        %2331 = vrot.lane.b32.xlu0 %v2314, 32
        %v2332 = vpop.permute.xlu0 %2331
        %2333 = vrot.lane.b32.xlu0 %v2315, 32
        %v2334 = vpop.permute.xlu0 %2333
        %2335 = vrot.lane.b32.xlu0 %v2316, 32
        %v2336 = vpop.permute.xlu0 %2335
        %2337 = vrot.lane.b32.xlu0 %v2317, 32
        %v2338 = vpop.permute.xlu0 %2337
        %2339 = vrot.lane.b32.xlu0 %v2318, 32
        %v2340 = vpop.permute.xlu0 %2339
        %2341 = vrot.lane.b32.xlu0 %v2319, 32
        %v2342 = vpop.permute.xlu0 %2341
        %2343 = vrot.lane.b32.xlu0 %v2320, 32
        %v2344 = vpop.permute.xlu0 %2343
        %v2353 = vsel %vm734, %v2237, %v2330
        %v2354 = vsel %vm734, %v2238, %v2332
        %v2355 = vsel %vm734, %v2239, %v2334
        %v2356 = vsel %vm734, %v2240, %v2336
        %v2357 = vsel %vm734, %v2241, %v2338
        %v2358 = vsel %vm734, %v2242, %v2340
        %v2359 = vsel %vm734, %v2243, %v2342
        %v2360 = vsel %vm734, %v2244, %v2344
        %v2361 = vadd.f32 %v2255, %v654
        %v2362 = vadd.f32 %v2258, %v655
        %v2363 = vadd.f32 %v2261, %v656
        %v2364 = vadd.f32 %v2264, %v657
        %2366 = vset.pattern.permute.xlu0 0
        %2367 = vperm.xlu0 %2366, %v2361
        %v2368 = vpop.permute.xlu0 %2367
        %2371 = vset.pattern.permute.xlu0 0
        %2372 = vperm.xlu0 %2371, %v2362
        %v2373 = vpop.permute.xlu0 %2372
        %2376 = vset.pattern.permute.xlu0 0
        %2377 = vperm.xlu0 %2376, %v2363
        %v2378 = vpop.permute.xlu0 %2377
        %2381 = vset.pattern.permute.xlu0 0
        %2382 = vperm.xlu0 %2381, %v2364
        %v2383 = vpop.permute.xlu0 %2382
        %v2386 = vsel %vm827, %v2309, 0
        %v2389 = vsel %vm827, %v2353, 0
        %v2392 = vsel %vm827, %v2354, 0
        %2394 = vmatprep.subr.mxu0 0.0
        %2395 = vmatpush1.xpose.msra.mxu0 %v2389
        %2396 = vmatprep.subr.mxu0 0.0
        %2397 = vmatpush1.xpose.msra.mxu0 %v2392
        %2398 = vmatprep.subr.mxu0 0.0
        %2399 = vmatpush1.xpose.msra.mxu0 0.0
        %2400 = vmatprep.subr.mxu0 0.0
        %2401 = vmatpush1.xpose.msra.mxu0 0.0
        %2402 = vmatprep.subr.mxu0 0.0
        %2403 = vmatpush1.xpose.msra.mxu0 0.0
        %2404 = vmatprep.subr.mxu0 0.0
        %2405 = vmatpush1.xpose.msra.mxu0 0.0
        %2406 = vmatprep.subr.mxu0 0.0
        %2407 = vmatpush1.xpose.msra.mxu0 0.0
        %2408 = vmatprep.subr.mxu0 0.0
        %2409 = vmatpush1.xpose.msra.mxu0 0.0
        %2410 = vmatprep.subr.mxu0 0.0
        %2411 = vmatpush1.xpose.msra.mxu0 0.0
        %2412 = vmatprep.subr.mxu0 0.0
        %2413 = vmatpush1.xpose.msra.mxu0 0.0
        %2414 = vmatprep.subr.mxu0 0.0
        %2415 = vmatpush1.xpose.msra.mxu0 0.0
        %2416 = vmatprep.subr.mxu0 0.0
        %2417 = vmatpush1.xpose.msra.mxu0 0.0
        %2418 = vmatprep.subr.mxu0 0.0
        %2419 = vmatpush1.xpose.msra.mxu0 0.0
        %2420 = vmatprep.subr.mxu0 0.0
        %2421 = vmatpush1.xpose.msra.mxu0 0.0
        %2422 = vmatprep.subr.mxu0 0.0
        %2423 = vmatpush1.xpose.msra.mxu0 0.0
        %2424 = vmatprep.subr.mxu0 0.0
        %2425 = vmatpush1.xpose.msra.mxu0 0.0
        %2426 = vmatprep.subr.mxu0 0.0
        %2427 = vmatpush1.xpose.msra.mxu0 0.0
        %2428 = vmatprep.subr.mxu0 0.0
        %2429 = vmatpush1.xpose.msra.mxu0 0.0
        %2430 = vmatprep.subr.mxu0 0.0
        %2431 = vmatpush1.xpose.msra.mxu0 0.0
        %2432 = vmatprep.subr.mxu0 0.0
        %2433 = vmatpush1.xpose.msra.mxu0 0.0
        %2434 = vmatprep.subr.mxu0 0.0
        %2435 = vmatpush1.xpose.msra.mxu0 0.0
        %2436 = vmatprep.subr.mxu0 0.0
        %2437 = vmatpush1.xpose.msra.mxu0 0.0
        %2438 = vmatprep.subr.mxu0 0.0
        %2439 = vmatpush1.xpose.msra.mxu0 0.0
        %2440 = vmatprep.subr.mxu0 0.0
        %2441 = vmatpush1.xpose.msra.mxu0 0.0
        %2442 = vmatprep.subr.mxu0 0.0
        %2443 = vmatpush1.xpose.msra.mxu0 0.0
        %2444 = vmatprep.subr.mxu0 0.0
        %2445 = vmatpush1.xpose.msra.mxu0 0.0
        %2446 = vmatprep.subr.mxu0 0.0
        %2447 = vmatpush1.xpose.msra.mxu0 0.0
        %2448 = vmatprep.subr.mxu0 0.0
        %2449 = vmatpush1.xpose.msra.mxu0 0.0
        %2450 = vmatprep.subr.mxu0 0.0
        %2451 = vmatpush1.xpose.msra.mxu0 0.0
        %2452 = vmatprep.subr.mxu0 0.0
        %2453 = vmatpush1.xpose.msra.mxu0 0.0
        %2454 = vmatprep.subr.mxu0 0.0
        %2455 = vmatpush1.xpose.msra.mxu0 0.0
        %2456 = vmatprep.subr.mxu0 0.0
        %2457 = vmatpush1.xpose.msra.mxu0 0.0
        %2458 = vmatprep.mubr.f32.mxu0 0.0
        %2459 = vmatmul.mubr.f32.gmra.mrb[0].mxu0 %v2386
        %v2460 = vpop.f32.mrb[0].mxu0
        %v2461 = vadd.f32 %v2368, %v2460
        %v2462 = vpop.f32.mrb[0].mxu0
        %2463 = vdwg.mxu0
        %v2465 = vsel %vm827, %v2310, 0
        %v2468 = vsel %vm827, %v2355, 0
        %v2471 = vsel %vm827, %v2356, 0
        %2473 = vmatprep.subr.mxu0 0.0
        %2474 = vmatpush1.xpose.msra.mxu0 %v2468
        %2475 = vmatprep.subr.mxu0 0.0
        %2476 = vmatpush1.xpose.msra.mxu0 %v2471
        %2477 = vmatprep.subr.mxu0 0.0
        %2478 = vmatpush1.xpose.msra.mxu0 0.0
        %2479 = vmatprep.subr.mxu0 0.0
        %2480 = vmatpush1.xpose.msra.mxu0 0.0
        %2481 = vmatprep.subr.mxu0 0.0
        %2482 = vmatpush1.xpose.msra.mxu0 0.0
        %2483 = vmatprep.subr.mxu0 0.0
        %2484 = vmatpush1.xpose.msra.mxu0 0.0
        %2485 = vmatprep.subr.mxu0 0.0
        %2486 = vmatpush1.xpose.msra.mxu0 0.0
        %2487 = vmatprep.subr.mxu0 0.0
        %2488 = vmatpush1.xpose.msra.mxu0 0.0
        %2489 = vmatprep.subr.mxu0 0.0
        %2490 = vmatpush1.xpose.msra.mxu0 0.0
        %2491 = vmatprep.subr.mxu0 0.0
        %2492 = vmatpush1.xpose.msra.mxu0 0.0
        %2493 = vmatprep.subr.mxu0 0.0
        %2494 = vmatpush1.xpose.msra.mxu0 0.0
        %2495 = vmatprep.subr.mxu0 0.0
        %2496 = vmatpush1.xpose.msra.mxu0 0.0
        %2497 = vmatprep.subr.mxu0 0.0
        %2498 = vmatpush1.xpose.msra.mxu0 0.0
        %2499 = vmatprep.subr.mxu0 0.0
        %2500 = vmatpush1.xpose.msra.mxu0 0.0
        %2501 = vmatprep.subr.mxu0 0.0
        %2502 = vmatpush1.xpose.msra.mxu0 0.0
        %2503 = vmatprep.subr.mxu0 0.0
        %2504 = vmatpush1.xpose.msra.mxu0 0.0
        %2505 = vmatprep.subr.mxu0 0.0
        %2506 = vmatpush1.xpose.msra.mxu0 0.0
        %2507 = vmatprep.subr.mxu0 0.0
        %2508 = vmatpush1.xpose.msra.mxu0 0.0
        %2509 = vmatprep.subr.mxu0 0.0
        %2510 = vmatpush1.xpose.msra.mxu0 0.0
        %2511 = vmatprep.subr.mxu0 0.0
        %2512 = vmatpush1.xpose.msra.mxu0 0.0
        %2513 = vmatprep.subr.mxu0 0.0
        %2514 = vmatpush1.xpose.msra.mxu0 0.0
        %2515 = vmatprep.subr.mxu0 0.0
        %2516 = vmatpush1.xpose.msra.mxu0 0.0
        %2517 = vmatprep.subr.mxu0 0.0
        %2518 = vmatpush1.xpose.msra.mxu0 0.0
        %2519 = vmatprep.subr.mxu0 0.0
        %2520 = vmatpush1.xpose.msra.mxu0 0.0
        %2521 = vmatprep.subr.mxu0 0.0
        %2522 = vmatpush1.xpose.msra.mxu0 0.0
        %2523 = vmatprep.subr.mxu0 0.0
        %2524 = vmatpush1.xpose.msra.mxu0 0.0
        %2525 = vmatprep.subr.mxu0 0.0
        %2526 = vmatpush1.xpose.msra.mxu0 0.0
        %2527 = vmatprep.subr.mxu0 0.0
        %2528 = vmatpush1.xpose.msra.mxu0 0.0
        %2529 = vmatprep.subr.mxu0 0.0
        %2530 = vmatpush1.xpose.msra.mxu0 0.0
        %2531 = vmatprep.subr.mxu0 0.0
        %2532 = vmatpush1.xpose.msra.mxu0 0.0
        %2533 = vmatprep.subr.mxu0 0.0
        %2534 = vmatpush1.xpose.msra.mxu0 0.0
        %2535 = vmatprep.subr.mxu0 0.0
        %2536 = vmatpush1.xpose.msra.mxu0 0.0
        %2537 = vmatprep.mubr.f32.mxu0 0.0
        %2538 = vmatmul.mubr.f32.gmra.mrb[0].mxu0 %v2465
        %v2539 = vpop.f32.mrb[0].mxu0
        %v2540 = vadd.f32 %v2373, %v2539
        %v2541 = vpop.f32.mrb[0].mxu0
        %2542 = vdwg.mxu0
        %v2544 = vsel %vm827, %v2311, 0
        %v2547 = vsel %vm827, %v2357, 0
        %v2550 = vsel %vm827, %v2358, 0
        %2552 = vmatprep.subr.mxu0 0.0
        %2553 = vmatpush1.xpose.msra.mxu0 %v2547
        %2554 = vmatprep.subr.mxu0 0.0
        %2555 = vmatpush1.xpose.msra.mxu0 %v2550
        %2556 = vmatprep.subr.mxu0 0.0
        %2557 = vmatpush1.xpose.msra.mxu0 0.0
        %2558 = vmatprep.subr.mxu0 0.0
        %2559 = vmatpush1.xpose.msra.mxu0 0.0
        %2560 = vmatprep.subr.mxu0 0.0
        %2561 = vmatpush1.xpose.msra.mxu0 0.0
        %2562 = vmatprep.subr.mxu0 0.0
        %2563 = vmatpush1.xpose.msra.mxu0 0.0
        %2564 = vmatprep.subr.mxu0 0.0
        %2565 = vmatpush1.xpose.msra.mxu0 0.0
        %2566 = vmatprep.subr.mxu0 0.0
        %2567 = vmatpush1.xpose.msra.mxu0 0.0
        %2568 = vmatprep.subr.mxu0 0.0
        %2569 = vmatpush1.xpose.msra.mxu0 0.0
        %2570 = vmatprep.subr.mxu0 0.0
        %2571 = vmatpush1.xpose.msra.mxu0 0.0
        %2572 = vmatprep.subr.mxu0 0.0
        %2573 = vmatpush1.xpose.msra.mxu0 0.0
        %2574 = vmatprep.subr.mxu0 0.0
        %2575 = vmatpush1.xpose.msra.mxu0 0.0
        %2576 = vmatprep.subr.mxu0 0.0
        %2577 = vmatpush1.xpose.msra.mxu0 0.0
        %2578 = vmatprep.subr.mxu0 0.0
        %2579 = vmatpush1.xpose.msra.mxu0 0.0
        %2580 = vmatprep.subr.mxu0 0.0
        %2581 = vmatpush1.xpose.msra.mxu0 0.0
        %2582 = vmatprep.subr.mxu0 0.0
        %2583 = vmatpush1.xpose.msra.mxu0 0.0
        %2584 = vmatprep.subr.mxu0 0.0
        %2585 = vmatpush1.xpose.msra.mxu0 0.0
        %2586 = vmatprep.subr.mxu0 0.0
        %2587 = vmatpush1.xpose.msra.mxu0 0.0
        %2588 = vmatprep.subr.mxu0 0.0
        %2589 = vmatpush1.xpose.msra.mxu0 0.0
        %2590 = vmatprep.subr.mxu0 0.0
        %2591 = vmatpush1.xpose.msra.mxu0 0.0
        %2592 = vmatprep.subr.mxu0 0.0
        %2593 = vmatpush1.xpose.msra.mxu0 0.0
        %2594 = vmatprep.subr.mxu0 0.0
        %2595 = vmatpush1.xpose.msra.mxu0 0.0
        %2596 = vmatprep.subr.mxu0 0.0
        %2597 = vmatpush1.xpose.msra.mxu0 0.0
        %2598 = vmatprep.subr.mxu0 0.0
        %2599 = vmatpush1.xpose.msra.mxu0 0.0
        %2600 = vmatprep.subr.mxu0 0.0
        %2601 = vmatpush1.xpose.msra.mxu0 0.0
        %2602 = vmatprep.subr.mxu0 0.0
        %2603 = vmatpush1.xpose.msra.mxu0 0.0
        %2604 = vmatprep.subr.mxu0 0.0
        %2605 = vmatpush1.xpose.msra.mxu0 0.0
        %2606 = vmatprep.subr.mxu0 0.0
        %2607 = vmatpush1.xpose.msra.mxu0 0.0
        %2608 = vmatprep.subr.mxu0 0.0
        %2609 = vmatpush1.xpose.msra.mxu0 0.0
        %2610 = vmatprep.subr.mxu0 0.0
        %2611 = vmatpush1.xpose.msra.mxu0 0.0
        %2612 = vmatprep.subr.mxu0 0.0
        %2613 = vmatpush1.xpose.msra.mxu0 0.0
        %2614 = vmatprep.subr.mxu0 0.0
        %2615 = vmatpush1.xpose.msra.mxu0 0.0
        %2616 = vmatprep.mubr.f32.mxu0 0.0
        %2617 = vmatmul.mubr.f32.gmra.mrb[0].mxu0 %v2544
        %v2618 = vpop.f32.mrb[0].mxu0
        %v2619 = vadd.f32 %v2378, %v2618
        %v2620 = vpop.f32.mrb[0].mxu0
        %2621 = vdwg.mxu0
        %v2623 = vsel %vm827, %v2312, 0
        %v2626 = vsel %vm827, %v2359, 0
        %v2629 = vsel %vm827, %v2360, 0
        %2631 = vmatprep.subr.mxu0 0.0
        %2632 = vmatpush1.xpose.msra.mxu0 %v2626
        %2633 = vmatprep.subr.mxu0 0.0
        %2634 = vmatpush1.xpose.msra.mxu0 %v2629
        %2635 = vmatprep.subr.mxu0 0.0
        %2636 = vmatpush1.xpose.msra.mxu0 0.0
        %2637 = vmatprep.subr.mxu0 0.0
        %2638 = vmatpush1.xpose.msra.mxu0 0.0
        %2639 = vmatprep.subr.mxu0 0.0
        %2640 = vmatpush1.xpose.msra.mxu0 0.0
        %2641 = vmatprep.subr.mxu0 0.0
        %2642 = vmatpush1.xpose.msra.mxu0 0.0
        %2643 = vmatprep.subr.mxu0 0.0
        %2644 = vmatpush1.xpose.msra.mxu0 0.0
        %2645 = vmatprep.subr.mxu0 0.0
        %2646 = vmatpush1.xpose.msra.mxu0 0.0
        %2647 = vmatprep.subr.mxu0 0.0
        %2648 = vmatpush1.xpose.msra.mxu0 0.0
        %2649 = vmatprep.subr.mxu0 0.0
        %2650 = vmatpush1.xpose.msra.mxu0 0.0
        %2651 = vmatprep.subr.mxu0 0.0
        %2652 = vmatpush1.xpose.msra.mxu0 0.0
        %2653 = vmatprep.subr.mxu0 0.0
        %2654 = vmatpush1.xpose.msra.mxu0 0.0
        %2655 = vmatprep.subr.mxu0 0.0
        %2656 = vmatpush1.xpose.msra.mxu0 0.0
        %2657 = vmatprep.subr.mxu0 0.0
        %2658 = vmatpush1.xpose.msra.mxu0 0.0
        %2659 = vmatprep.subr.mxu0 0.0
        %2660 = vmatpush1.xpose.msra.mxu0 0.0
        %2661 = vmatprep.subr.mxu0 0.0
        %2662 = vmatpush1.xpose.msra.mxu0 0.0
        %2663 = vmatprep.subr.mxu0 0.0
        %2664 = vmatpush1.xpose.msra.mxu0 0.0
        %2665 = vmatprep.subr.mxu0 0.0
        %2666 = vmatpush1.xpose.msra.mxu0 0.0
        %2667 = vmatprep.subr.mxu0 0.0
        %2668 = vmatpush1.xpose.msra.mxu0 0.0
        %2669 = vmatprep.subr.mxu0 0.0
        %2670 = vmatpush1.xpose.msra.mxu0 0.0
        %2671 = vmatprep.subr.mxu0 0.0
        %2672 = vmatpush1.xpose.msra.mxu0 0.0
        %2673 = vmatprep.subr.mxu0 0.0
        %2674 = vmatpush1.xpose.msra.mxu0 0.0
        %2675 = vmatprep.subr.mxu0 0.0
        %2676 = vmatpush1.xpose.msra.mxu0 0.0
        %2677 = vmatprep.subr.mxu0 0.0
        %2678 = vmatpush1.xpose.msra.mxu0 0.0
        %2679 = vmatprep.subr.mxu0 0.0
        %2680 = vmatpush1.xpose.msra.mxu0 0.0
        %2681 = vmatprep.subr.mxu0 0.0
        %2682 = vmatpush1.xpose.msra.mxu0 0.0
        %2683 = vmatprep.subr.mxu0 0.0
        %2684 = vmatpush1.xpose.msra.mxu0 0.0
        %2685 = vmatprep.subr.mxu0 0.0
        %2686 = vmatpush1.xpose.msra.mxu0 0.0
        %2687 = vmatprep.subr.mxu0 0.0
        %2688 = vmatpush1.xpose.msra.mxu0 0.0
        %2689 = vmatprep.subr.mxu0 0.0
        %2690 = vmatpush1.xpose.msra.mxu0 0.0
        %2691 = vmatprep.subr.mxu0 0.0
        %2692 = vmatpush1.xpose.msra.mxu0 0.0
        %2693 = vmatprep.subr.mxu0 0.0
        %2694 = vmatpush1.xpose.msra.mxu0 0.0
        %2695 = vmatprep.mubr.f32.mxu0 0.0
        %2696 = vmatmul.mubr.f32.gmra.mrb[0].mxu0 %v2623
        %v2697 = vpop.f32.mrb[0].mxu0
        %v2698 = vadd.f32 %v2383, %v2697
        %v2699 = vpop.f32.mrb[0].mxu0
        %2700 = vdwg.mxu0
        %v2701 = vsel %vm981, %v2461, -inf
        %2702 = vmax.xlane.f32.xlu0 %v2701
        %v2703 = vpop.xlane.xlu0 %2702
        %v2704 = vsel %vm981, %v2540, -inf
        %2705 = vmax.xlane.f32.xlu0 %v2704
        %v2706 = vpop.xlane.xlu0 %2705
        %v2707 = vsel %vm981, %v2619, -inf
        %2708 = vmax.xlane.f32.xlu0 %v2707
        %v2709 = vpop.xlane.xlu0 %2708
        %v2710 = vsel %vm981, %v2698, -inf
        %2711 = vmax.xlane.f32.xlu0 %v2710
        %v2712 = vpop.xlane.xlu0 %2711
        %v2713 = vsub.f32 %v2461, %v2703
        %v2714 = vsub.f32 %v2540, %v2706
        %v2715 = vsub.f32 %v2619, %v2709
        %v2716 = vsub.f32 %v2698, %v2712
        %v2717 = vmul.f32 %v2713, 1.442695
        %v2718 = vpow.pop %v2717
        %v2719 = vmul.f32 %v2714, 1.442695
        %v2720 = vpow.pop %v2719
        %v2721 = vmul.f32 %v2715, 1.442695
        %v2722 = vpow.pop %v2721
        %v2723 = vmul.f32 %v2716, 1.442695
        %v2724 = vpow.pop %v2723
        %v2725 = vsel %vm981, %v2718, 0.0
        %2726 = vadd.xlane.f32.xlu0 %v2725
        %v2727 = vpop.xlane.xlu0 %2726
        %v2728 = vsel %vm981, %v2720, 0.0
        %2729 = vadd.xlane.f32.xlu0 %v2728
        %v2730 = vpop.xlane.xlu0 %2729
        %v2731 = vsel %vm981, %v2722, 0.0
        %2732 = vadd.xlane.f32.xlu0 %v2731
        %v2733 = vpop.xlane.xlu0 %2732
        %v2734 = vsel %vm981, %v2724, 0.0
        %2735 = vadd.xlane.f32.xlu0 %v2734
        %v2736 = vpop.xlane.xlu0 %2735
        %v2737 = vrcp.pop %v2727
        %v2738 = vrcp.pop %v2730
        %v2739 = vrcp.pop %v2733
        %v2740 = vrcp.pop %v2736
        %v2741 = vmul.f32 %v2718, %v2737
        %v2742 = vmul.f32 %v2720, %v2738
        %v2743 = vmul.f32 %v2722, %v2739
        %v2744 = vmul.f32 %v2724, %v2740
        %v2746 = vsel %vm981, %v2741, 0
        %2748 = vmatprep.subr.mxu0 0.0
        %2749 = vmatpush1.msra.mxu0 %v2237
        %2750 = vmatprep.subr.mxu0 0.0
        %2751 = vmatpush1.msra.mxu0 %v2238
        %2752 = vmatprep.subr.mxu0 0.0
        %2753 = vmatpush1.msra.mxu0 0.0
        %2754 = vmatprep.subr.mxu0 0.0
        %2755 = vmatpush1.msra.mxu0 0.0
        %2756 = vmatprep.subr.mxu0 0.0
        %2757 = vmatpush1.msra.mxu0 0.0
        %2758 = vmatprep.subr.mxu0 0.0
        %2759 = vmatpush1.msra.mxu0 0.0
        %2760 = vmatprep.subr.mxu0 0.0
        %2761 = vmatpush1.msra.mxu0 0.0
        %2762 = vmatprep.subr.mxu0 0.0
        %2763 = vmatpush1.msra.mxu0 0.0
        %2764 = vmatprep.subr.mxu0 0.0
        %2765 = vmatpush1.msra.mxu0 0.0
        %2766 = vmatprep.subr.mxu0 0.0
        %2767 = vmatpush1.msra.mxu0 0.0
        %2768 = vmatprep.subr.mxu0 0.0
        %2769 = vmatpush1.msra.mxu0 0.0
        %2770 = vmatprep.subr.mxu0 0.0
        %2771 = vmatpush1.msra.mxu0 0.0
        %2772 = vmatprep.subr.mxu0 0.0
        %2773 = vmatpush1.msra.mxu0 0.0
        %2774 = vmatprep.subr.mxu0 0.0
        %2775 = vmatpush1.msra.mxu0 0.0
        %2776 = vmatprep.subr.mxu0 0.0
        %2777 = vmatpush1.msra.mxu0 0.0
        %2778 = vmatprep.subr.mxu0 0.0
        %2779 = vmatpush1.msra.mxu0 0.0
        %2780 = vmatprep.subr.mxu0 0.0
        %2781 = vmatpush1.msra.mxu0 0.0
        %2782 = vmatprep.subr.mxu0 0.0
        %2783 = vmatpush1.msra.mxu0 0.0
        %2784 = vmatprep.subr.mxu0 0.0
        %2785 = vmatpush1.msra.mxu0 0.0
        %2786 = vmatprep.subr.mxu0 0.0
        %2787 = vmatpush1.msra.mxu0 0.0
        %2788 = vmatprep.subr.mxu0 0.0
        %2789 = vmatpush1.msra.mxu0 0.0
        %2790 = vmatprep.subr.mxu0 0.0
        %2791 = vmatpush1.msra.mxu0 0.0
        %2792 = vmatprep.subr.mxu0 0.0
        %2793 = vmatpush1.msra.mxu0 0.0
        %2794 = vmatprep.subr.mxu0 0.0
        %2795 = vmatpush1.msra.mxu0 0.0
        %2796 = vmatprep.subr.mxu0 0.0
        %2797 = vmatpush1.msra.mxu0 0.0
        %2798 = vmatprep.subr.mxu0 0.0
        %2799 = vmatpush1.msra.mxu0 0.0
        %2800 = vmatprep.subr.mxu0 0.0
        %2801 = vmatpush1.msra.mxu0 0.0
        %2802 = vmatprep.subr.mxu0 0.0
        %2803 = vmatpush1.msra.mxu0 0.0
        %2804 = vmatprep.subr.mxu0 0.0
        %2805 = vmatpush1.msra.mxu0 0.0
        %2806 = vmatprep.subr.mxu0 0.0
        %2807 = vmatpush1.msra.mxu0 0.0
        %2808 = vmatprep.subr.mxu0 0.0
        %2809 = vmatpush1.msra.mxu0 0.0
        %2810 = vmatprep.subr.mxu0 0.0
        %2811 = vmatpush1.msra.mxu0 0.0
        %2812 = vmatprep.mubr.f32.mxu0 0.0
        %2813 = vmatmul.mubr.f32.gmra.mrb[0].mxu0 %v2746
        %v2814 = vpop.f32.mrb[0].mxu0
        %v2815 = vadd.f32 0.0, %v2814
        %v2816 = vpop.f32.mrb[0].mxu0
        %2817 = vdwg.mxu0
        %v2819 = vsel %vm981, %v2742, 0
        %2821 = vmatprep.subr.mxu0 0.0
        %2822 = vmatpush1.msra.mxu0 %v2239
        %2823 = vmatprep.subr.mxu0 0.0
        %2824 = vmatpush1.msra.mxu0 %v2240
        %2825 = vmatprep.subr.mxu0 0.0
        %2826 = vmatpush1.msra.mxu0 0.0
        %2827 = vmatprep.subr.mxu0 0.0
        %2828 = vmatpush1.msra.mxu0 0.0
        %2829 = vmatprep.subr.mxu0 0.0
        %2830 = vmatpush1.msra.mxu0 0.0
        %2831 = vmatprep.subr.mxu0 0.0
        %2832 = vmatpush1.msra.mxu0 0.0
        %2833 = vmatprep.subr.mxu0 0.0
        %2834 = vmatpush1.msra.mxu0 0.0
        %2835 = vmatprep.subr.mxu0 0.0
        %2836 = vmatpush1.msra.mxu0 0.0
        %2837 = vmatprep.subr.mxu0 0.0
        %2838 = vmatpush1.msra.mxu0 0.0
        %2839 = vmatprep.subr.mxu0 0.0
        %2840 = vmatpush1.msra.mxu0 0.0
        %2841 = vmatprep.subr.mxu0 0.0
        %2842 = vmatpush1.msra.mxu0 0.0
        %2843 = vmatprep.subr.mxu0 0.0
        %2844 = vmatpush1.msra.mxu0 0.0
        %2845 = vmatprep.subr.mxu0 0.0
        %2846 = vmatpush1.msra.mxu0 0.0
        %2847 = vmatprep.subr.mxu0 0.0
        %2848 = vmatpush1.msra.mxu0 0.0
        %2849 = vmatprep.subr.mxu0 0.0
        %2850 = vmatpush1.msra.mxu0 0.0
        %2851 = vmatprep.subr.mxu0 0.0
        %2852 = vmatpush1.msra.mxu0 0.0
        %2853 = vmatprep.subr.mxu0 0.0
        %2854 = vmatpush1.msra.mxu0 0.0
        %2855 = vmatprep.subr.mxu0 0.0
        %2856 = vmatpush1.msra.mxu0 0.0
        %2857 = vmatprep.subr.mxu0 0.0
        %2858 = vmatpush1.msra.mxu0 0.0
        %2859 = vmatprep.subr.mxu0 0.0
        %2860 = vmatpush1.msra.mxu0 0.0
        %2861 = vmatprep.subr.mxu0 0.0
        %2862 = vmatpush1.msra.mxu0 0.0
        %2863 = vmatprep.subr.mxu0 0.0
        %2864 = vmatpush1.msra.mxu0 0.0
        %2865 = vmatprep.subr.mxu0 0.0
        %2866 = vmatpush1.msra.mxu0 0.0
        %2867 = vmatprep.subr.mxu0 0.0
        %2868 = vmatpush1.msra.mxu0 0.0
        %2869 = vmatprep.subr.mxu0 0.0
        %2870 = vmatpush1.msra.mxu0 0.0
        %2871 = vmatprep.subr.mxu0 0.0
        %2872 = vmatpush1.msra.mxu0 0.0
        %2873 = vmatprep.subr.mxu0 0.0
        %2874 = vmatpush1.msra.mxu0 0.0
        %2875 = vmatprep.subr.mxu0 0.0
        %2876 = vmatpush1.msra.mxu0 0.0
        %2877 = vmatprep.subr.mxu0 0.0
        %2878 = vmatpush1.msra.mxu0 0.0
        %2879 = vmatprep.subr.mxu0 0.0
        %2880 = vmatpush1.msra.mxu0 0.0
        %2881 = vmatprep.subr.mxu0 0.0
        %2882 = vmatpush1.msra.mxu0 0.0
        %2883 = vmatprep.subr.mxu0 0.0
        %2884 = vmatpush1.msra.mxu0 0.0
        %2885 = vmatprep.mubr.f32.mxu0 0.0
        %2886 = vmatmul.mubr.f32.gmra.mrb[0].mxu0 %v2819
        %v2887 = vpop.f32.mrb[0].mxu0
        %v2888 = vadd.f32 0.0, %v2887
        %v2889 = vpop.f32.mrb[0].mxu0
        %2890 = vdwg.mxu0
        %v2892 = vsel %vm981, %v2743, 0
        %2894 = vmatprep.subr.mxu0 0.0
        %2895 = vmatpush1.msra.mxu0 %v2241
        %2896 = vmatprep.subr.mxu0 0.0
        %2897 = vmatpush1.msra.mxu0 %v2242
        %2898 = vmatprep.subr.mxu0 0.0
        %2899 = vmatpush1.msra.mxu0 0.0
        %2900 = vmatprep.subr.mxu0 0.0
        %2901 = vmatpush1.msra.mxu0 0.0
        %2902 = vmatprep.subr.mxu0 0.0
        %2903 = vmatpush1.msra.mxu0 0.0
        %2904 = vmatprep.subr.mxu0 0.0
        %2905 = vmatpush1.msra.mxu0 0.0
        %2906 = vmatprep.subr.mxu0 0.0
        %2907 = vmatpush1.msra.mxu0 0.0
        %2908 = vmatprep.subr.mxu0 0.0
        %2909 = vmatpush1.msra.mxu0 0.0
        %2910 = vmatprep.subr.mxu0 0.0
        %2911 = vmatpush1.msra.mxu0 0.0
        %2912 = vmatprep.subr.mxu0 0.0
        %2913 = vmatpush1.msra.mxu0 0.0
        %2914 = vmatprep.subr.mxu0 0.0
        %2915 = vmatpush1.msra.mxu0 0.0
        %2916 = vmatprep.subr.mxu0 0.0
        %2917 = vmatpush1.msra.mxu0 0.0
        %2918 = vmatprep.subr.mxu0 0.0
        %2919 = vmatpush1.msra.mxu0 0.0
        %2920 = vmatprep.subr.mxu0 0.0
        %2921 = vmatpush1.msra.mxu0 0.0
        %2922 = vmatprep.subr.mxu0 0.0
        %2923 = vmatpush1.msra.mxu0 0.0
        %2924 = vmatprep.subr.mxu0 0.0
        %2925 = vmatpush1.msra.mxu0 0.0
        %2926 = vmatprep.subr.mxu0 0.0
        %2927 = vmatpush1.msra.mxu0 0.0
        %2928 = vmatprep.subr.mxu0 0.0
        %2929 = vmatpush1.msra.mxu0 0.0
        %2930 = vmatprep.subr.mxu0 0.0
        %2931 = vmatpush1.msra.mxu0 0.0
        %2932 = vmatprep.subr.mxu0 0.0
        %2933 = vmatpush1.msra.mxu0 0.0
        %2934 = vmatprep.subr.mxu0 0.0
        %2935 = vmatpush1.msra.mxu0 0.0
        %2936 = vmatprep.subr.mxu0 0.0
        %2937 = vmatpush1.msra.mxu0 0.0
        %2938 = vmatprep.subr.mxu0 0.0
        %2939 = vmatpush1.msra.mxu0 0.0
        %2940 = vmatprep.subr.mxu0 0.0
        %2941 = vmatpush1.msra.mxu0 0.0
        %2942 = vmatprep.subr.mxu0 0.0
        %2943 = vmatpush1.msra.mxu0 0.0
        %2944 = vmatprep.subr.mxu0 0.0
        %2945 = vmatpush1.msra.mxu0 0.0
        %2946 = vmatprep.subr.mxu0 0.0
        %2947 = vmatpush1.msra.mxu0 0.0
        %2948 = vmatprep.subr.mxu0 0.0
        %2949 = vmatpush1.msra.mxu0 0.0
        %2950 = vmatprep.subr.mxu0 0.0
        %2951 = vmatpush1.msra.mxu0 0.0
        %2952 = vmatprep.subr.mxu0 0.0
        %2953 = vmatpush1.msra.mxu0 0.0
        %2954 = vmatprep.subr.mxu0 0.0
        %2955 = vmatpush1.msra.mxu0 0.0
        %2956 = vmatprep.subr.mxu0 0.0
        %2957 = vmatpush1.msra.mxu0 0.0
        %2958 = vmatprep.mubr.f32.mxu0 0.0
        %2959 = vmatmul.mubr.f32.gmra.mrb[0].mxu0 %v2892
        %v2960 = vpop.f32.mrb[0].mxu0
        %v2961 = vadd.f32 0.0, %v2960
        %v2962 = vpop.f32.mrb[0].mxu0
        %2963 = vdwg.mxu0
        %v2965 = vsel %vm981, %v2744, 0
        %2967 = vmatprep.subr.mxu0 0.0
        %2968 = vmatpush1.msra.mxu0 %v2243
        %2969 = vmatprep.subr.mxu0 0.0
        %2970 = vmatpush1.msra.mxu0 %v2244
        %2971 = vmatprep.subr.mxu0 0.0
        %2972 = vmatpush1.msra.mxu0 0.0
        %2973 = vmatprep.subr.mxu0 0.0
        %2974 = vmatpush1.msra.mxu0 0.0
        %2975 = vmatprep.subr.mxu0 0.0
        %2976 = vmatpush1.msra.mxu0 0.0
        %2977 = vmatprep.subr.mxu0 0.0
        %2978 = vmatpush1.msra.mxu0 0.0
        %2979 = vmatprep.subr.mxu0 0.0
        %2980 = vmatpush1.msra.mxu0 0.0
        %2981 = vmatprep.subr.mxu0 0.0
        %2982 = vmatpush1.msra.mxu0 0.0
        %2983 = vmatprep.subr.mxu0 0.0
        %2984 = vmatpush1.msra.mxu0 0.0
        %2985 = vmatprep.subr.mxu0 0.0
        %2986 = vmatpush1.msra.mxu0 0.0
        %2987 = vmatprep.subr.mxu0 0.0
        %2988 = vmatpush1.msra.mxu0 0.0
        %2989 = vmatprep.subr.mxu0 0.0
        %2990 = vmatpush1.msra.mxu0 0.0
        %2991 = vmatprep.subr.mxu0 0.0
        %2992 = vmatpush1.msra.mxu0 0.0
        %2993 = vmatprep.subr.mxu0 0.0
        %2994 = vmatpush1.msra.mxu0 0.0
        %2995 = vmatprep.subr.mxu0 0.0
        %2996 = vmatpush1.msra.mxu0 0.0
        %2997 = vmatprep.subr.mxu0 0.0
        %2998 = vmatpush1.msra.mxu0 0.0
        %2999 = vmatprep.subr.mxu0 0.0
        %3000 = vmatpush1.msra.mxu0 0.0
        %3001 = vmatprep.subr.mxu0 0.0
        %3002 = vmatpush1.msra.mxu0 0.0
        %3003 = vmatprep.subr.mxu0 0.0
        %3004 = vmatpush1.msra.mxu0 0.0
        %3005 = vmatprep.subr.mxu0 0.0
        %3006 = vmatpush1.msra.mxu0 0.0
        %3007 = vmatprep.subr.mxu0 0.0
        %3008 = vmatpush1.msra.mxu0 0.0
        %3009 = vmatprep.subr.mxu0 0.0
        %3010 = vmatpush1.msra.mxu0 0.0
        %3011 = vmatprep.subr.mxu0 0.0
        %3012 = vmatpush1.msra.mxu0 0.0
        %3013 = vmatprep.subr.mxu0 0.0
        %3014 = vmatpush1.msra.mxu0 0.0
        %3015 = vmatprep.subr.mxu0 0.0
        %3016 = vmatpush1.msra.mxu0 0.0
        %3017 = vmatprep.subr.mxu0 0.0
        %3018 = vmatpush1.msra.mxu0 0.0
        %3019 = vmatprep.subr.mxu0 0.0
        %3020 = vmatpush1.msra.mxu0 0.0
        %3021 = vmatprep.subr.mxu0 0.0
        %3022 = vmatpush1.msra.mxu0 0.0
        %3023 = vmatprep.subr.mxu0 0.0
        %3024 = vmatpush1.msra.mxu0 0.0
        %3025 = vmatprep.subr.mxu0 0.0
        %3026 = vmatpush1.msra.mxu0 0.0
        %3027 = vmatprep.subr.mxu0 0.0
        %3028 = vmatpush1.msra.mxu0 0.0
        %3029 = vmatprep.subr.mxu0 0.0
        %3030 = vmatpush1.msra.mxu0 0.0
        %3031 = vmatprep.mubr.f32.mxu0 0.0
        %3032 = vmatmul.mubr.f32.gmra.mrb[0].mxu0 %v2965
        %v3033 = vpop.f32.mrb[0].mxu0
        %v3034 = vadd.f32 0.0, %v3033
        %v3035 = vpop.f32.mrb[0].mxu0
        %3036 = vdwg.mxu0
        %3037 = vxpose.xlu0.b32.start [1/16] %v2461, 128
        %3038 = vxpose.xlu0.b32.cont [2/16] 0.0, 128
        %3039 = vxpose.xlu0.b32.cont [3/16] 0.0, 128
        %3040 = vxpose.xlu0.b32.cont [4/16] 0.0, 128
        %3041 = vxpose.xlu0.b32.cont [5/16] 0.0, 128
        %3042 = vxpose.xlu0.b32.cont [6/16] 0.0, 128
        %3043 = vxpose.xlu0.b32.cont [7/16] 0.0, 128
        %3044 = vxpose.xlu0.b32.cont [8/16] 0.0, 128
        %3045 = vxpose.xlu0.b32.cont [9/16] 0.0, 128
        %3046 = vxpose.xlu0.b32.cont [10/16] 0.0, 128
        %3047 = vxpose.xlu0.b32.cont [11/16] 0.0, 128
        %3048 = vxpose.xlu0.b32.cont [12/16] 0.0, 128
        %3049 = vxpose.xlu0.b32.cont [13/16] 0.0, 128
        %3050 = vxpose.xlu0.b32.cont [14/16] 0.0, 128
        %3051 = vxpose.xlu0.b32.cont [15/16] 0.0, 128
        %3052 = vxpose.xlu0.b32.end [16/16] 0.0, 128
        %v3053 = vpop.trf.xlu0
        %v3054 = vpop.trf.xlu0
        %v3055 = vpop.trf.xlu0
        %v3056 = vpop.trf.xlu0
        %v3057 = vpop.trf.xlu0
        %v3058 = vpop.trf.xlu0
        %v3059 = vpop.trf.xlu0
        %v3060 = vpop.trf.xlu0
        %v3061 = vpop.trf.xlu0
        %v3062 = vpop.trf.xlu0
        %v3063 = vpop.trf.xlu0
        %v3064 = vpop.trf.xlu0
        %v3065 = vpop.trf.xlu0
        %v3066 = vpop.trf.xlu0
        %v3067 = vpop.trf.xlu0
        %v3068 = vpop.trf.xlu0
        %3069 = vxpose.xlu0.b32.start [1/16] %v2540, 128
        %3070 = vxpose.xlu0.b32.cont [2/16] 0.0, 128
        %3071 = vxpose.xlu0.b32.cont [3/16] 0.0, 128
        %3072 = vxpose.xlu0.b32.cont [4/16] 0.0, 128
        %3073 = vxpose.xlu0.b32.cont [5/16] 0.0, 128
        %3074 = vxpose.xlu0.b32.cont [6/16] 0.0, 128
        %3075 = vxpose.xlu0.b32.cont [7/16] 0.0, 128
        %3076 = vxpose.xlu0.b32.cont [8/16] 0.0, 128
        %3077 = vxpose.xlu0.b32.cont [9/16] 0.0, 128
        %3078 = vxpose.xlu0.b32.cont [10/16] 0.0, 128
        %3079 = vxpose.xlu0.b32.cont [11/16] 0.0, 128
        %3080 = vxpose.xlu0.b32.cont [12/16] 0.0, 128
        %3081 = vxpose.xlu0.b32.cont [13/16] 0.0, 128
        %3082 = vxpose.xlu0.b32.cont [14/16] 0.0, 128
        %3083 = vxpose.xlu0.b32.cont [15/16] 0.0, 128
        %3084 = vxpose.xlu0.b32.end [16/16] 0.0, 128
        %v3085 = vpop.trf.xlu0
        %v3086 = vpop.trf.xlu0
        %v3087 = vpop.trf.xlu0
        %v3088 = vpop.trf.xlu0
        %v3089 = vpop.trf.xlu0
        %v3090 = vpop.trf.xlu0
        %v3091 = vpop.trf.xlu0
        %v3092 = vpop.trf.xlu0
        %v3093 = vpop.trf.xlu0
        %v3094 = vpop.trf.xlu0
        %v3095 = vpop.trf.xlu0
        %v3096 = vpop.trf.xlu0
        %v3097 = vpop.trf.xlu0
        %v3098 = vpop.trf.xlu0
        %v3099 = vpop.trf.xlu0
        %v3100 = vpop.trf.xlu0
        %3101 = vxpose.xlu0.b32.start [1/16] %v2619, 128
        %3102 = vxpose.xlu0.b32.cont [2/16] 0.0, 128
        %3103 = vxpose.xlu0.b32.cont [3/16] 0.0, 128
        %3104 = vxpose.xlu0.b32.cont [4/16] 0.0, 128
        %3105 = vxpose.xlu0.b32.cont [5/16] 0.0, 128
        %3106 = vxpose.xlu0.b32.cont [6/16] 0.0, 128
        %3107 = vxpose.xlu0.b32.cont [7/16] 0.0, 128
        %3108 = vxpose.xlu0.b32.cont [8/16] 0.0, 128
        %3109 = vxpose.xlu0.b32.cont [9/16] 0.0, 128
        %3110 = vxpose.xlu0.b32.cont [10/16] 0.0, 128
        %3111 = vxpose.xlu0.b32.cont [11/16] 0.0, 128
        %3112 = vxpose.xlu0.b32.cont [12/16] 0.0, 128
        %3113 = vxpose.xlu0.b32.cont [13/16] 0.0, 128
        %3114 = vxpose.xlu0.b32.cont [14/16] 0.0, 128
        %3115 = vxpose.xlu0.b32.cont [15/16] 0.0, 128
        %3116 = vxpose.xlu0.b32.end [16/16] 0.0, 128
        %v3117 = vpop.trf.xlu0
        %v3118 = vpop.trf.xlu0
        %v3119 = vpop.trf.xlu0
        %v3120 = vpop.trf.xlu0
        %v3121 = vpop.trf.xlu0
        %v3122 = vpop.trf.xlu0
        %v3123 = vpop.trf.xlu0
        %v3124 = vpop.trf.xlu0
        %v3125 = vpop.trf.xlu0
        %v3126 = vpop.trf.xlu0
        %v3127 = vpop.trf.xlu0
        %v3128 = vpop.trf.xlu0
        %v3129 = vpop.trf.xlu0
        %v3130 = vpop.trf.xlu0
        %v3131 = vpop.trf.xlu0
        %v3132 = vpop.trf.xlu0
        %3133 = vxpose.xlu0.b32.start [1/16] %v2698, 128
        %3134 = vxpose.xlu0.b32.cont [2/16] 0.0, 128
        %3135 = vxpose.xlu0.b32.cont [3/16] 0.0, 128
        %3136 = vxpose.xlu0.b32.cont [4/16] 0.0, 128
        %3137 = vxpose.xlu0.b32.cont [5/16] 0.0, 128
        %3138 = vxpose.xlu0.b32.cont [6/16] 0.0, 128
        %3139 = vxpose.xlu0.b32.cont [7/16] 0.0, 128
        %3140 = vxpose.xlu0.b32.cont [8/16] 0.0, 128
        %3141 = vxpose.xlu0.b32.cont [9/16] 0.0, 128
        %3142 = vxpose.xlu0.b32.cont [10/16] 0.0, 128
        %3143 = vxpose.xlu0.b32.cont [11/16] 0.0, 128
        %3144 = vxpose.xlu0.b32.cont [12/16] 0.0, 128
        %3145 = vxpose.xlu0.b32.cont [13/16] 0.0, 128
        %3146 = vxpose.xlu0.b32.cont [14/16] 0.0, 128
        %3147 = vxpose.xlu0.b32.cont [15/16] 0.0, 128
        %3148 = vxpose.xlu0.b32.end [16/16] 0.0, 128
        %v3149 = vpop.trf.xlu0
        %v3150 = vpop.trf.xlu0
        %v3151 = vpop.trf.xlu0
        %v3152 = vpop.trf.xlu0
        %v3153 = vpop.trf.xlu0
        %v3154 = vpop.trf.xlu0
        %v3155 = vpop.trf.xlu0
        %v3156 = vpop.trf.xlu0
        %v3157 = vpop.trf.xlu0
        %v3158 = vpop.trf.xlu0
        %v3159 = vpop.trf.xlu0
        %v3160 = vpop.trf.xlu0
        %v3161 = vpop.trf.xlu0
        %v3162 = vpop.trf.xlu0
        %v3163 = vpop.trf.xlu0
        %v3164 = vpop.trf.xlu0
        %vm3165 = vcmask 64512
        %v3166 = vsel %vm3165, %v3053, -inf
        %3167 = vmax.xlane.f32.xlu0 %v3166
        %v3168 = vpop.xlane.xlu0 %3167
        %v3169 = vsel %vm3165, %v3054, -inf
        %3170 = vmax.xlane.f32.xlu0 %v3169
        %v3171 = vpop.xlane.xlu0 %3170
        %v3172 = vsel %vm3165, %v3085, -inf
        %3173 = vmax.xlane.f32.xlu0 %v3172
        %v3174 = vpop.xlane.xlu0 %3173
        %v3175 = vsel %vm3165, %v3086, -inf
        %3176 = vmax.xlane.f32.xlu0 %v3175
        %v3177 = vpop.xlane.xlu0 %3176
        %v3178 = vsel %vm3165, %v3117, -inf
        %3179 = vmax.xlane.f32.xlu0 %v3178
        %v3180 = vpop.xlane.xlu0 %3179
        %v3181 = vsel %vm3165, %v3118, -inf
        %3182 = vmax.xlane.f32.xlu0 %v3181
        %v3183 = vpop.xlane.xlu0 %3182
        %v3184 = vsel %vm3165, %v3149, -inf
        %3185 = vmax.xlane.f32.xlu0 %v3184
        %v3186 = vpop.xlane.xlu0 %3185
        %v3187 = vsel %vm3165, %v3150, -inf
        %3188 = vmax.xlane.f32.xlu0 %v3187
        %v3189 = vpop.xlane.xlu0 %3188
        %v3190 = vsub.f32 %v3053, %v3168
        %v3191 = vsub.f32 %v3054, %v3171
        %v3192 = vsub.f32 %v3085, %v3174
        %v3193 = vsub.f32 %v3086, %v3177
        %v3194 = vsub.f32 %v3117, %v3180
        %v3195 = vsub.f32 %v3118, %v3183
        %v3196 = vsub.f32 %v3149, %v3186
        %v3197 = vsub.f32 %v3150, %v3189
        %v3198 = vmul.f32 %v3190, 1.442695
        %v3199 = vpow.pop %v3198
        %v3200 = vmul.f32 %v3191, 1.442695
        %v3201 = vpow.pop %v3200
        %v3202 = vmul.f32 %v3192, 1.442695
        %v3203 = vpow.pop %v3202
        %v3204 = vmul.f32 %v3193, 1.442695
        %v3205 = vpow.pop %v3204
        %v3206 = vmul.f32 %v3194, 1.442695
        %v3207 = vpow.pop %v3206
        %v3208 = vmul.f32 %v3195, 1.442695
        %v3209 = vpow.pop %v3208
        %v3210 = vmul.f32 %v3196, 1.442695
        %v3211 = vpow.pop %v3210
        %v3212 = vmul.f32 %v3197, 1.442695
        %v3213 = vpow.pop %v3212
        %v3214 = vsel %vm3165, %v3199, 0.0
        %3215 = vadd.xlane.f32.xlu0 %v3214
        %v3216 = vpop.xlane.xlu0 %3215
        %v3217 = vsel %vm3165, %v3201, 0.0
        %3218 = vadd.xlane.f32.xlu0 %v3217
        %v3219 = vpop.xlane.xlu0 %3218
        %v3220 = vsel %vm3165, %v3203, 0.0
        %3221 = vadd.xlane.f32.xlu0 %v3220
        %v3222 = vpop.xlane.xlu0 %3221
        %v3223 = vsel %vm3165, %v3205, 0.0
        %3224 = vadd.xlane.f32.xlu0 %v3223
        %v3225 = vpop.xlane.xlu0 %3224
        %v3226 = vsel %vm3165, %v3207, 0.0
        %3227 = vadd.xlane.f32.xlu0 %v3226
        %v3228 = vpop.xlane.xlu0 %3227
        %v3229 = vsel %vm3165, %v3209, 0.0
        %3230 = vadd.xlane.f32.xlu0 %v3229
        %v3231 = vpop.xlane.xlu0 %3230
        %v3232 = vsel %vm3165, %v3211, 0.0
        %3233 = vadd.xlane.f32.xlu0 %v3232
        %v3234 = vpop.xlane.xlu0 %3233
        %v3235 = vsel %vm3165, %v3213, 0.0
        %3236 = vadd.xlane.f32.xlu0 %v3235
        %v3237 = vpop.xlane.xlu0 %3236
        %v3238 = vrcp.pop %v3216
        %v3239 = vrcp.pop %v3219
        %v3240 = vrcp.pop %v3222
        %v3241 = vrcp.pop %v3225
        %v3242 = vrcp.pop %v3228
        %v3243 = vrcp.pop %v3231
        %v3244 = vrcp.pop %v3234
        %v3245 = vrcp.pop %v3237
        %v3246 = vmul.f32 %v3199, %v3238
        %v3247 = vmul.f32 %v3201, %v3239
        %v3248 = vmul.f32 %v3203, %v3240
        %v3249 = vmul.f32 %v3205, %v3241
        %v3250 = vmul.f32 %v3207, %v3242
        %v3251 = vmul.f32 %v3209, %v3243
        %v3252 = vmul.f32 %v3211, %v3244
        %v3253 = vmul.f32 %v3213, %v3245
        %3258 = vrot.lane.b32.xlu0 %v2815, 32
        %v3259 = vpop.permute.xlu0 %3258
        %3260 = vrot.lane.b32.xlu0 %v2888, 32
        %v3261 = vpop.permute.xlu0 %3260
        %3262 = vrot.lane.b32.xlu0 %v2961, 32
        %v3263 = vpop.permute.xlu0 %3262
        %3264 = vrot.lane.b32.xlu0 %v3034, 32
        %v3265 = vpop.permute.xlu0 %3264
        %v3270 = vsel %vm734, %v642, %v3259
        %v3271 = vsel %vm734, %v643, %v3261
        %v3272 = vsel %vm734, %v644, %v3263
        %v3273 = vsel %vm734, %v645, %v3265
        %v3275 = vsel %vm3165, %v3246, 0
        %v3278 = vsel %vm3165, %v3247, 0
        %3280 = vmatprep.subr.mxu0 0.0
        %3281 = vmatpush1.msra.mxu0 %v3270
        %3282 = vmatprep.subr.mxu0 0.0
        %3283 = vmatpush1.msra.mxu0 0.0
        %3284 = vmatprep.subr.mxu0 0.0
        %3285 = vmatpush1.msra.mxu0 0.0
        %3286 = vmatprep.subr.mxu0 0.0
        %3287 = vmatpush1.msra.mxu0 0.0
        %3288 = vmatprep.subr.mxu0 0.0
        %3289 = vmatpush1.msra.mxu0 0.0
        %3290 = vmatprep.subr.mxu0 0.0
        %3291 = vmatpush1.msra.mxu0 0.0
        %3292 = vmatprep.subr.mxu0 0.0
        %3293 = vmatpush1.msra.mxu0 0.0
        %3294 = vmatprep.subr.mxu0 0.0
        %3295 = vmatpush1.msra.mxu0 0.0
        %3296 = vmatprep.subr.mxu0 0.0
        %3297 = vmatpush1.msra.mxu0 0.0
        %3298 = vmatprep.subr.mxu0 0.0
        %3299 = vmatpush1.msra.mxu0 0.0
        %3300 = vmatprep.subr.mxu0 0.0
        %3301 = vmatpush1.msra.mxu0 0.0
        %3302 = vmatprep.subr.mxu0 0.0
        %3303 = vmatpush1.msra.mxu0 0.0
        %3304 = vmatprep.subr.mxu0 0.0
        %3305 = vmatpush1.msra.mxu0 0.0
        %3306 = vmatprep.subr.mxu0 0.0
        %3307 = vmatpush1.msra.mxu0 0.0
        %3308 = vmatprep.subr.mxu0 0.0
        %3309 = vmatpush1.msra.mxu0 0.0
        %3310 = vmatprep.subr.mxu0 0.0
        %3311 = vmatpush1.msra.mxu0 0.0
        %3312 = vmatprep.subr.mxu0 0.0
        %3313 = vmatpush1.msra.mxu0 0.0
        %3314 = vmatprep.subr.mxu0 0.0
        %3315 = vmatpush1.msra.mxu0 0.0
        %3316 = vmatprep.subr.mxu0 0.0
        %3317 = vmatpush1.msra.mxu0 0.0
        %3318 = vmatprep.subr.mxu0 0.0
        %3319 = vmatpush1.msra.mxu0 0.0
        %3320 = vmatprep.subr.mxu0 0.0
        %3321 = vmatpush1.msra.mxu0 0.0
        %3322 = vmatprep.subr.mxu0 0.0
        %3323 = vmatpush1.msra.mxu0 0.0
        %3324 = vmatprep.subr.mxu0 0.0
        %3325 = vmatpush1.msra.mxu0 0.0
        %3326 = vmatprep.subr.mxu0 0.0
        %3327 = vmatpush1.msra.mxu0 0.0
        %3328 = vmatprep.subr.mxu0 0.0
        %3329 = vmatpush1.msra.mxu0 0.0
        %3330 = vmatprep.subr.mxu0 0.0
        %3331 = vmatpush1.msra.mxu0 0.0
        %3332 = vmatprep.subr.mxu0 0.0
        %3333 = vmatpush1.msra.mxu0 0.0
        %3334 = vmatprep.subr.mxu0 0.0
        %3335 = vmatpush1.msra.mxu0 0.0
        %3336 = vmatprep.subr.mxu0 0.0
        %3337 = vmatpush1.msra.mxu0 0.0
        %3338 = vmatprep.subr.mxu0 0.0
        %3339 = vmatpush1.msra.mxu0 0.0
        %3340 = vmatprep.subr.mxu0 0.0
        %3341 = vmatpush1.msra.mxu0 0.0
        %3342 = vmatprep.subr.mxu0 0.0
        %3343 = vmatpush1.msra.mxu0 0.0
        %3344 = vmatprep.mubr.f32.mxu0 0.0
        %3345 = vmatmul.mubr.f32.gmra.mrb[0].mxu0 %v3275
        %v3346 = vpop.f32.mrb[0].mxu0
        %v3347 = vadd.f32 0.0, %v3346
        %v3348 = vpop.f32.mrb[0].mxu0
        %3349 = vmatprep.mubr.f32.mxu0 0.0
        %3350 = vmatmul.mubr.f32.gmra.mrb[0].mxu0 %v3278
        %v3351 = vpop.f32.mrb[0].mxu0
        %v3352 = vadd.f32 0.0, %v3351
        %v3353 = vpop.f32.mrb[0].mxu0
        %3354 = vdwg.mxu0
        %v3356 = vsel %vm3165, %v3248, 0
        %v3359 = vsel %vm3165, %v3249, 0
        %3361 = vmatprep.subr.mxu0 0.0
        %3362 = vmatpush1.msra.mxu0 %v3271
        %3363 = vmatprep.subr.mxu0 0.0
        %3364 = vmatpush1.msra.mxu0 0.0
        %3365 = vmatprep.subr.mxu0 0.0
        %3366 = vmatpush1.msra.mxu0 0.0
        %3367 = vmatprep.subr.mxu0 0.0
        %3368 = vmatpush1.msra.mxu0 0.0
        %3369 = vmatprep.subr.mxu0 0.0
        %3370 = vmatpush1.msra.mxu0 0.0
        %3371 = vmatprep.subr.mxu0 0.0
        %3372 = vmatpush1.msra.mxu0 0.0
        %3373 = vmatprep.subr.mxu0 0.0
        %3374 = vmatpush1.msra.mxu0 0.0
        %3375 = vmatprep.subr.mxu0 0.0
        %3376 = vmatpush1.msra.mxu0 0.0
        %3377 = vmatprep.subr.mxu0 0.0
        %3378 = vmatpush1.msra.mxu0 0.0
        %3379 = vmatprep.subr.mxu0 0.0
        %3380 = vmatpush1.msra.mxu0 0.0
        %3381 = vmatprep.subr.mxu0 0.0
        %3382 = vmatpush1.msra.mxu0 0.0
        %3383 = vmatprep.subr.mxu0 0.0
        %3384 = vmatpush1.msra.mxu0 0.0
        %3385 = vmatprep.subr.mxu0 0.0
        %3386 = vmatpush1.msra.mxu0 0.0
        %3387 = vmatprep.subr.mxu0 0.0
        %3388 = vmatpush1.msra.mxu0 0.0
        %3389 = vmatprep.subr.mxu0 0.0
        %3390 = vmatpush1.msra.mxu0 0.0
        %3391 = vmatprep.subr.mxu0 0.0
        %3392 = vmatpush1.msra.mxu0 0.0
        %3393 = vmatprep.subr.mxu0 0.0
        %3394 = vmatpush1.msra.mxu0 0.0
        %3395 = vmatprep.subr.mxu0 0.0
        %3396 = vmatpush1.msra.mxu0 0.0
        %3397 = vmatprep.subr.mxu0 0.0
        %3398 = vmatpush1.msra.mxu0 0.0
        %3399 = vmatprep.subr.mxu0 0.0
        %3400 = vmatpush1.msra.mxu0 0.0
        %3401 = vmatprep.subr.mxu0 0.0
        %3402 = vmatpush1.msra.mxu0 0.0
        %3403 = vmatprep.subr.mxu0 0.0
        %3404 = vmatpush1.msra.mxu0 0.0
        %3405 = vmatprep.subr.mxu0 0.0
        %3406 = vmatpush1.msra.mxu0 0.0
        %3407 = vmatprep.subr.mxu0 0.0
        %3408 = vmatpush1.msra.mxu0 0.0
        %3409 = vmatprep.subr.mxu0 0.0
        %3410 = vmatpush1.msra.mxu0 0.0
        %3411 = vmatprep.subr.mxu0 0.0
        %3412 = vmatpush1.msra.mxu0 0.0
        %3413 = vmatprep.subr.mxu0 0.0
        %3414 = vmatpush1.msra.mxu0 0.0
        %3415 = vmatprep.subr.mxu0 0.0
        %3416 = vmatpush1.msra.mxu0 0.0
        %3417 = vmatprep.subr.mxu0 0.0
        %3418 = vmatpush1.msra.mxu0 0.0
        %3419 = vmatprep.subr.mxu0 0.0
        %3420 = vmatpush1.msra.mxu0 0.0
        %3421 = vmatprep.subr.mxu0 0.0
        %3422 = vmatpush1.msra.mxu0 0.0
        %3423 = vmatprep.subr.mxu0 0.0
        %3424 = vmatpush1.msra.mxu0 0.0
        %3425 = vmatprep.mubr.f32.mxu0 0.0
        %3426 = vmatmul.mubr.f32.gmra.mrb[0].mxu0 %v3356
        %v3427 = vpop.f32.mrb[0].mxu0
        %v3428 = vadd.f32 0.0, %v3427
        %v3429 = vpop.f32.mrb[0].mxu0
        %3430 = vmatprep.mubr.f32.mxu0 0.0
        %3431 = vmatmul.mubr.f32.gmra.mrb[0].mxu0 %v3359
        %v3432 = vpop.f32.mrb[0].mxu0
        %v3433 = vadd.f32 0.0, %v3432
        %v3434 = vpop.f32.mrb[0].mxu0
        %3435 = vdwg.mxu0
        %v3437 = vsel %vm3165, %v3250, 0
        %v3440 = vsel %vm3165, %v3251, 0
        %3442 = vmatprep.subr.mxu0 0.0
        %3443 = vmatpush1.msra.mxu0 %v3272
        %3444 = vmatprep.subr.mxu0 0.0
        %3445 = vmatpush1.msra.mxu0 0.0
        %3446 = vmatprep.subr.mxu0 0.0
        %3447 = vmatpush1.msra.mxu0 0.0
        %3448 = vmatprep.subr.mxu0 0.0
        %3449 = vmatpush1.msra.mxu0 0.0
        %3450 = vmatprep.subr.mxu0 0.0
        %3451 = vmatpush1.msra.mxu0 0.0
        %3452 = vmatprep.subr.mxu0 0.0
        %3453 = vmatpush1.msra.mxu0 0.0
        %3454 = vmatprep.subr.mxu0 0.0
        %3455 = vmatpush1.msra.mxu0 0.0
        %3456 = vmatprep.subr.mxu0 0.0
        %3457 = vmatpush1.msra.mxu0 0.0
        %3458 = vmatprep.subr.mxu0 0.0
        %3459 = vmatpush1.msra.mxu0 0.0
        %3460 = vmatprep.subr.mxu0 0.0
        %3461 = vmatpush1.msra.mxu0 0.0
        %3462 = vmatprep.subr.mxu0 0.0
        %3463 = vmatpush1.msra.mxu0 0.0
        %3464 = vmatprep.subr.mxu0 0.0
        %3465 = vmatpush1.msra.mxu0 0.0
        %3466 = vmatprep.subr.mxu0 0.0
        %3467 = vmatpush1.msra.mxu0 0.0
        %3468 = vmatprep.subr.mxu0 0.0
        %3469 = vmatpush1.msra.mxu0 0.0
        %3470 = vmatprep.subr.mxu0 0.0
        %3471 = vmatpush1.msra.mxu0 0.0
        %3472 = vmatprep.subr.mxu0 0.0
        %3473 = vmatpush1.msra.mxu0 0.0
        %3474 = vmatprep.subr.mxu0 0.0
        %3475 = vmatpush1.msra.mxu0 0.0
        %3476 = vmatprep.subr.mxu0 0.0
        %3477 = vmatpush1.msra.mxu0 0.0
        %3478 = vmatprep.subr.mxu0 0.0
        %3479 = vmatpush1.msra.mxu0 0.0
        %3480 = vmatprep.subr.mxu0 0.0
        %3481 = vmatpush1.msra.mxu0 0.0
        %3482 = vmatprep.subr.mxu0 0.0
        %3483 = vmatpush1.msra.mxu0 0.0
        %3484 = vmatprep.subr.mxu0 0.0
        %3485 = vmatpush1.msra.mxu0 0.0
        %3486 = vmatprep.subr.mxu0 0.0
        %3487 = vmatpush1.msra.mxu0 0.0
        %3488 = vmatprep.subr.mxu0 0.0
        %3489 = vmatpush1.msra.mxu0 0.0
        %3490 = vmatprep.subr.mxu0 0.0
        %3491 = vmatpush1.msra.mxu0 0.0
        %3492 = vmatprep.subr.mxu0 0.0
        %3493 = vmatpush1.msra.mxu0 0.0
        %3494 = vmatprep.subr.mxu0 0.0
        %3495 = vmatpush1.msra.mxu0 0.0
        %3496 = vmatprep.subr.mxu0 0.0
        %3497 = vmatpush1.msra.mxu0 0.0
        %3498 = vmatprep.subr.mxu0 0.0
        %3499 = vmatpush1.msra.mxu0 0.0
        %3500 = vmatprep.subr.mxu0 0.0
        %3501 = vmatpush1.msra.mxu0 0.0
        %3502 = vmatprep.subr.mxu0 0.0
        %3503 = vmatpush1.msra.mxu0 0.0
        %3504 = vmatprep.subr.mxu0 0.0
        %3505 = vmatpush1.msra.mxu0 0.0
        %3506 = vmatprep.mubr.f32.mxu0 0.0
        %3507 = vmatmul.mubr.f32.gmra.mrb[0].mxu0 %v3437
        %v3508 = vpop.f32.mrb[0].mxu0
        %v3509 = vadd.f32 0.0, %v3508
        %v3510 = vpop.f32.mrb[0].mxu0
        %3511 = vmatprep.mubr.f32.mxu0 0.0
        %3512 = vmatmul.mubr.f32.gmra.mrb[0].mxu0 %v3440
        %v3513 = vpop.f32.mrb[0].mxu0
        %v3514 = vadd.f32 0.0, %v3513
        %v3515 = vpop.f32.mrb[0].mxu0
        %3516 = vdwg.mxu0
        %v3518 = vsel %vm3165, %v3252, 0
        %v3521 = vsel %vm3165, %v3253, 0
        %3523 = vmatprep.subr.mxu0 0.0
        %3524 = vmatpush1.msra.mxu0 %v3273
        %3525 = vmatprep.subr.mxu0 0.0
        %3526 = vmatpush1.msra.mxu0 0.0
        %3527 = vmatprep.subr.mxu0 0.0
        %3528 = vmatpush1.msra.mxu0 0.0
        %3529 = vmatprep.subr.mxu0 0.0
        %3530 = vmatpush1.msra.mxu0 0.0
        %3531 = vmatprep.subr.mxu0 0.0
        %3532 = vmatpush1.msra.mxu0 0.0
        %3533 = vmatprep.subr.mxu0 0.0
        %3534 = vmatpush1.msra.mxu0 0.0
        %3535 = vmatprep.subr.mxu0 0.0
        %3536 = vmatpush1.msra.mxu0 0.0
        %3537 = vmatprep.subr.mxu0 0.0
        %3538 = vmatpush1.msra.mxu0 0.0
        %3539 = vmatprep.subr.mxu0 0.0
        %3540 = vmatpush1.msra.mxu0 0.0
        %3541 = vmatprep.subr.mxu0 0.0
        %3542 = vmatpush1.msra.mxu0 0.0
        %3543 = vmatprep.subr.mxu0 0.0
        %3544 = vmatpush1.msra.mxu0 0.0
        %3545 = vmatprep.subr.mxu0 0.0
        %3546 = vmatpush1.msra.mxu0 0.0
        %3547 = vmatprep.subr.mxu0 0.0
        %3548 = vmatpush1.msra.mxu0 0.0
        %3549 = vmatprep.subr.mxu0 0.0
        %3550 = vmatpush1.msra.mxu0 0.0
        %3551 = vmatprep.subr.mxu0 0.0
        %3552 = vmatpush1.msra.mxu0 0.0
        %3553 = vmatprep.subr.mxu0 0.0
        %3554 = vmatpush1.msra.mxu0 0.0
        %3555 = vmatprep.subr.mxu0 0.0
        %3556 = vmatpush1.msra.mxu0 0.0
        %3557 = vmatprep.subr.mxu0 0.0
        %3558 = vmatpush1.msra.mxu0 0.0
        %3559 = vmatprep.subr.mxu0 0.0
        %3560 = vmatpush1.msra.mxu0 0.0
        %3561 = vmatprep.subr.mxu0 0.0
        %3562 = vmatpush1.msra.mxu0 0.0
        %3563 = vmatprep.subr.mxu0 0.0
        %3564 = vmatpush1.msra.mxu0 0.0
        %3565 = vmatprep.subr.mxu0 0.0
        %3566 = vmatpush1.msra.mxu0 0.0
        %3567 = vmatprep.subr.mxu0 0.0
        %3568 = vmatpush1.msra.mxu0 0.0
        %3569 = vmatprep.subr.mxu0 0.0
        %3570 = vmatpush1.msra.mxu0 0.0
        %3571 = vmatprep.subr.mxu0 0.0
        %3572 = vmatpush1.msra.mxu0 0.0
        %3573 = vmatprep.subr.mxu0 0.0
        %3574 = vmatpush1.msra.mxu0 0.0
        %3575 = vmatprep.subr.mxu0 0.0
        %3576 = vmatpush1.msra.mxu0 0.0
        %3577 = vmatprep.subr.mxu0 0.0
        %3578 = vmatpush1.msra.mxu0 0.0
        %3579 = vmatprep.subr.mxu0 0.0
        %3580 = vmatpush1.msra.mxu0 0.0
        %3581 = vmatprep.subr.mxu0 0.0
        %3582 = vmatpush1.msra.mxu0 0.0
        %3583 = vmatprep.subr.mxu0 0.0
        %3584 = vmatpush1.msra.mxu0 0.0
        %3585 = vmatprep.subr.mxu0 0.0
        %3586 = vmatpush1.msra.mxu0 0.0
        %3587 = vmatprep.mubr.f32.mxu0 0.0
        %3588 = vmatmul.mubr.f32.gmra.mrb[0].mxu0 %v3518
        %v3589 = vpop.f32.mrb[0].mxu0
        %v3590 = vadd.f32 0.0, %v3589
        %v3591 = vpop.f32.mrb[0].mxu0
        %3592 = vmatprep.mubr.f32.mxu0 0.0
        %3593 = vmatmul.mubr.f32.gmra.mrb[0].mxu0 %v3521
        %v3594 = vpop.f32.mrb[0].mxu0
        %v3595 = vadd.f32 0.0, %v3594
        %v3596 = vpop.f32.mrb[0].mxu0
        %3597 = vdwg.mxu0
        %3606 = vrot.lane.b32.xlu0 %v3347, 32
        %v3607 = vpop.permute.xlu0 %3606
        %3608 = vrot.lane.b32.xlu0 %v3352, 32
        %v3609 = vpop.permute.xlu0 %3608
        %3610 = vrot.lane.b32.xlu0 %v3428, 32
        %v3611 = vpop.permute.xlu0 %3610
        %3612 = vrot.lane.b32.xlu0 %v3433, 32
        %v3613 = vpop.permute.xlu0 %3612
        %3614 = vrot.lane.b32.xlu0 %v3509, 32
        %v3615 = vpop.permute.xlu0 %3614
        %3616 = vrot.lane.b32.xlu0 %v3514, 32
        %v3617 = vpop.permute.xlu0 %3616
        %3618 = vrot.lane.b32.xlu0 %v3590, 32
        %v3619 = vpop.permute.xlu0 %3618
        %3620 = vrot.lane.b32.xlu0 %v3595, 32
        %v3621 = vpop.permute.xlu0 %3620
        %v3630 = vsel %vm734, %v2237, %v3607
        %v3631 = vsel %vm734, %v2238, %v3609
        %v3632 = vsel %vm734, %v2239, %v3611
        %v3633 = vsel %vm734, %v2240, %v3613
        %v3634 = vsel %vm734, %v2241, %v3615
        %v3635 = vsel %vm734, %v2242, %v3617
        %v3636 = vsel %vm734, %v2243, %v3619
        %v3637 = vsel %vm734, %v2244, %v3621
        %v3639 = vlaneseq
        %v3640 = vshrl.u32 %v3639, 7
        %v3641 = vsub.s32 0, %v3640
        %v3642 = vrot.slane %v720, %v3641
        %v3645 = vsel %vm1578, %v3630, 0
        %v3648 = vsel %vm1578, %v3631, 0
        %v3651 = vsel %vm1578, %v3632, 0
        %v3654 = vsel %vm1578, %v3633, 0
        %v3657 = vsel %vm1578, %v3634, 0
        %v3660 = vsel %vm1578, %v3635, 0
        %v3663 = vsel %vm1578, %v3636, 0
        %v3666 = vsel %vm1578, %v3637, 0
        %3668 = vmatprep.subr.mxu0 0.0
        %3669 = vmatpush1.msra.mxu0 %v694
        %3670 = vmatprep.subr.mxu0 0.0
        %3671 = vmatpush1.msra.mxu0 %v695
        %3672 = vmatprep.subr.mxu0 0.0
        %3673 = vmatpush1.msra.mxu0 %v696
        %3674 = vmatprep.subr.mxu0 0.0
        %3675 = vmatpush1.msra.mxu0 %v697
        %3676 = vmatprep.subr.mxu0 0.0
        %3677 = vmatpush1.msra.mxu0 %v698
        %3678 = vmatprep.subr.mxu0 0.0
        %3679 = vmatpush1.msra.mxu0 %v699
        %3680 = vmatprep.subr.mxu0 0.0
        %3681 = vmatpush1.msra.mxu0 %v700
        %3682 = vmatprep.subr.mxu0 0.0
        %3683 = vmatpush1.msra.mxu0 %v701
        %3684 = vmatprep.subr.mxu0 0.0
        %3685 = vmatpush1.msra.mxu0 %v702
        %3686 = vmatprep.subr.mxu0 0.0
        %3687 = vmatpush1.msra.mxu0 %v703
        %3688 = vmatprep.subr.mxu0 0.0
        %3689 = vmatpush1.msra.mxu0 %v704
        %3690 = vmatprep.subr.mxu0 0.0
        %3691 = vmatpush1.msra.mxu0 %v705
        %3692 = vmatprep.subr.mxu0 0.0
        %3693 = vmatpush1.msra.mxu0 0.0
        %3694 = vmatprep.subr.mxu0 0.0
        %3695 = vmatpush1.msra.mxu0 0.0
        %3696 = vmatprep.subr.mxu0 0.0
        %3697 = vmatpush1.msra.mxu0 0.0
        %3698 = vmatprep.subr.mxu0 0.0
        %3699 = vmatpush1.msra.mxu0 0.0
        %3700 = vmatprep.subr.mxu0 0.0
        %3701 = vmatpush1.msra.mxu0 0.0
        %3702 = vmatprep.subr.mxu0 0.0
        %3703 = vmatpush1.msra.mxu0 0.0
        %3704 = vmatprep.subr.mxu0 0.0
        %3705 = vmatpush1.msra.mxu0 0.0
        %3706 = vmatprep.subr.mxu0 0.0
        %3707 = vmatpush1.msra.mxu0 0.0
        %3708 = vmatprep.subr.mxu0 0.0
        %3709 = vmatpush1.msra.mxu0 0.0
        %3710 = vmatprep.subr.mxu0 0.0
        %3711 = vmatpush1.msra.mxu0 0.0
        %3712 = vmatprep.subr.mxu0 0.0
        %3713 = vmatpush1.msra.mxu0 0.0
        %3714 = vmatprep.subr.mxu0 0.0
        %3715 = vmatpush1.msra.mxu0 0.0
        %3716 = vmatprep.subr.mxu0 0.0
        %3717 = vmatpush1.msra.mxu0 0.0
        %3718 = vmatprep.subr.mxu0 0.0
        %3719 = vmatpush1.msra.mxu0 0.0
        %3720 = vmatprep.subr.mxu0 0.0
        %3721 = vmatpush1.msra.mxu0 0.0
        %3722 = vmatprep.subr.mxu0 0.0
        %3723 = vmatpush1.msra.mxu0 0.0
        %3724 = vmatprep.subr.mxu0 0.0
        %3725 = vmatpush1.msra.mxu0 0.0
        %3726 = vmatprep.subr.mxu0 0.0
        %3727 = vmatpush1.msra.mxu0 0.0
        %3728 = vmatprep.subr.mxu0 0.0
        %3729 = vmatpush1.msra.mxu0 0.0
        %3730 = vmatprep.subr.mxu0 0.0
        %3731 = vmatpush1.msra.mxu0 0.0
        %3732 = vmatprep.mubr.f32.mxu0 0.0
        %3733 = vmatmul.mubr.f32.gmra.mrb[0].mxu0 %v3645
        %v3734 = vpop.f32.mrb[0].mxu0
        %v3735 = vadd.f32 %v3642, %v3734
        %v3736 = vpop.f32.mrb[0].mxu0
        %3737 = vmatprep.mubr.f32.mxu0 0.0
        %3738 = vmatmul.mubr.f32.gmra.mrb[0].mxu0 %v3648
        %v3739 = vpop.f32.mrb[0].mxu0
        %v3740 = vadd.f32 %v3642, %v3739
        %v3741 = vpop.f32.mrb[0].mxu0
        %3742 = vmatprep.mubr.f32.mxu0 0.0
        %3743 = vmatmul.mubr.f32.gmra.mrb[0].mxu0 %v3651
        %v3744 = vpop.f32.mrb[0].mxu0
        %v3745 = vadd.f32 %v3642, %v3744
        %v3746 = vpop.f32.mrb[0].mxu0
        %3747 = vmatprep.mubr.f32.mxu0 0.0
        %3748 = vmatmul.mubr.f32.gmra.mrb[0].mxu0 %v3654
        %v3749 = vpop.f32.mrb[0].mxu0
        %v3750 = vadd.f32 %v3642, %v3749
        %v3751 = vpop.f32.mrb[0].mxu0
        %3752 = vmatprep.mubr.f32.mxu0 0.0
        %3753 = vmatmul.mubr.f32.gmra.mrb[0].mxu0 %v3657
        %v3754 = vpop.f32.mrb[0].mxu0
        %v3755 = vadd.f32 %v3642, %v3754
        %v3756 = vpop.f32.mrb[0].mxu0
        %3757 = vmatprep.mubr.f32.mxu0 0.0
        %3758 = vmatmul.mubr.f32.gmra.mrb[0].mxu0 %v3660
        %v3759 = vpop.f32.mrb[0].mxu0
        %v3760 = vadd.f32 %v3642, %v3759
        %v3761 = vpop.f32.mrb[0].mxu0
        %3762 = vmatprep.mubr.f32.mxu0 0.0
        %3763 = vmatmul.mubr.f32.gmra.mrb[0].mxu0 %v3663
        %v3764 = vpop.f32.mrb[0].mxu0
        %v3765 = vadd.f32 %v3642, %v3764
        %v3766 = vpop.f32.mrb[0].mxu0
        %3767 = vmatprep.mubr.f32.mxu0 0.0
        %3768 = vmatmul.mubr.f32.gmra.mrb[0].mxu0 %v3666
        %v3769 = vpop.f32.mrb[0].mxu0
        %v3770 = vadd.f32 %v3642, %v3769
        %v3771 = vpop.f32.mrb[0].mxu0
        %3772 = vdwg.mxu0
        %v3773 = vmax.f32 %v3735, 0.0
        %v3774 = vmax.f32 %v3740, 0.0
        %v3775 = vmax.f32 %v3745, 0.0
        %v3776 = vmax.f32 %v3750, 0.0
        %v3777 = vmax.f32 %v3755, 0.0
        %v3778 = vmax.f32 %v3760, 0.0
        %v3779 = vmax.f32 %v3765, 0.0
        %v3780 = vmax.f32 %v3770, 0.0
        %v3781 = vlaneseq
        %v3782 = vshrl.u32 %v3781, 7
        %v3783 = vsub.s32 0, %v3782
        %v3784 = vrot.slane %v668, %v3783
        %v3785 = vmul.f32 %v3773, %v3784
        %v3786 = vmul.f32 %v3774, %v3784
        %v3787 = vmul.f32 %v3775, %v3784
        %v3788 = vmul.f32 %v3776, %v3784
        %v3789 = vmul.f32 %v3777, %v3784
        %v3790 = vmul.f32 %v3778, %v3784
        %v3791 = vmul.f32 %v3779, %v3784
        %v3792 = vmul.f32 %v3780, %v3784
        %v3793 = vsel %vm734, %v3785, 0.0
        %3794 = vadd.xlane.f32.xlu0 %v3793
        %v3795 = vpop.xlane.xlu0 %3794
        %v3796 = vsel %vm734, %v3786, 0.0
        %3797 = vadd.xlane.f32.xlu0 %v3796
        %v3798 = vpop.xlane.xlu0 %3797
        %v3799 = vsel %vm734, %v3787, 0.0
        %3800 = vadd.xlane.f32.xlu0 %v3799
        %v3801 = vpop.xlane.xlu0 %3800
        %v3802 = vsel %vm734, %v3788, 0.0
        %3803 = vadd.xlane.f32.xlu0 %v3802
        %v3804 = vpop.xlane.xlu0 %3803
        %v3805 = vsel %vm734, %v3789, 0.0
        %3806 = vadd.xlane.f32.xlu0 %v3805
        %v3807 = vpop.xlane.xlu0 %3806
        %v3808 = vsel %vm734, %v3790, 0.0
        %3809 = vadd.xlane.f32.xlu0 %v3808
        %v3810 = vpop.xlane.xlu0 %3809
        %v3811 = vsel %vm734, %v3791, 0.0
        %3812 = vadd.xlane.f32.xlu0 %v3811
        %v3813 = vpop.xlane.xlu0 %3812
        %v3814 = vsel %vm734, %v3792, 0.0
        %3815 = vadd.xlane.f32.xlu0 %v3814
        %v3816 = vpop.xlane.xlu0 %3815
        %v3817 = vsel %vm734, %v3773, 1.0
        %v3818 = vsel %vm734, %v3774, 1.0
        %v3819 = vsel %vm734, %v3775, 1.0
        %v3820 = vsel %vm734, %v3776, 1.0
        %v3821 = vsel %vm734, %v3777, 1.0
        %v3822 = vsel %vm734, %v3778, 1.0
        %v3823 = vsel %vm734, %v3779, 1.0
        %v3824 = vsel %vm734, %v3780, 1.0
        %v3825 = vlaneseq
        %v3826 = vshrl.u32 %v3825, 7
        %v3827 = vsub.s32 2, %v3826
        %v3828 = vrot.slane %v668, %v3827
        %v3829 = vmul.f32 %v3773, %v3828
        %v3830 = vmul.f32 %v3774, %v3828
        %v3831 = vmul.f32 %v3775, %v3828
        %v3832 = vmul.f32 %v3776, %v3828
        %v3833 = vmul.f32 %v3777, %v3828
        %v3834 = vmul.f32 %v3778, %v3828
        %v3835 = vmul.f32 %v3779, %v3828
        %v3836 = vmul.f32 %v3780, %v3828
        %v3837 = vadd.f32 %v3795, %v646
        %v3838 = vadd.f32 %v3798, %v647
        %v3839 = vadd.f32 %v3801, %v648
        %v3840 = vadd.f32 %v3804, %v649
        %v3841 = vadd.f32 %v3807, %v650
        %v3842 = vadd.f32 %v3810, %v651
        %v3843 = vadd.f32 %v3813, %v652
        %v3844 = vadd.f32 %v3816, %v653
        %3853 = vrot.lane.b32.xlu0 %v3837, 32
        %v3854 = vpop.permute.xlu0 %3853
        %3855 = vrot.lane.b32.xlu0 %v3838, 32
        %v3856 = vpop.permute.xlu0 %3855
        %3857 = vrot.lane.b32.xlu0 %v3839, 32
        %v3858 = vpop.permute.xlu0 %3857
        %3859 = vrot.lane.b32.xlu0 %v3840, 32
        %v3860 = vpop.permute.xlu0 %3859
        %3861 = vrot.lane.b32.xlu0 %v3841, 32
        %v3862 = vpop.permute.xlu0 %3861
        %3863 = vrot.lane.b32.xlu0 %v3842, 32
        %v3864 = vpop.permute.xlu0 %3863
        %3865 = vrot.lane.b32.xlu0 %v3843, 32
        %v3866 = vpop.permute.xlu0 %3865
        %3867 = vrot.lane.b32.xlu0 %v3844, 32
        %v3868 = vpop.permute.xlu0 %3867
        %v3877 = vsel %vm734, %v3829, %v3854
        %v3878 = vsel %vm734, %v3830, %v3856
        %v3879 = vsel %vm734, %v3831, %v3858
        %v3880 = vsel %vm734, %v3832, %v3860
        %v3881 = vsel %vm734, %v3833, %v3862
        %v3882 = vsel %vm734, %v3834, %v3864
        %v3883 = vsel %vm734, %v3835, %v3866
        %v3884 = vsel %vm734, %v3836, %v3868
        %v3886 = vsel %vm827, %v3817, 0
        %v3889 = vsel %vm827, %v3818, 0
        %v3892 = vsel %vm827, %v3877, 0
        %v3895 = vsel %vm827, %v3878, 0
        %3897 = vmatprep.subr.mxu0 0.0
        %3898 = vmatpush1.xpose.msra.mxu0 %v3892
        %3899 = vmatprep.subr.mxu0 0.0
        %3900 = vmatpush1.xpose.msra.mxu0 %v3895
        %3901 = vmatprep.subr.mxu0 0.0
        %3902 = vmatpush1.xpose.msra.mxu0 0.0
        %3903 = vmatprep.subr.mxu0 0.0
        %3904 = vmatpush1.xpose.msra.mxu0 0.0
        %3905 = vmatprep.subr.mxu0 0.0
        %3906 = vmatpush1.xpose.msra.mxu0 0.0
        %3907 = vmatprep.subr.mxu0 0.0
        %3908 = vmatpush1.xpose.msra.mxu0 0.0
        %3909 = vmatprep.subr.mxu0 0.0
        %3910 = vmatpush1.xpose.msra.mxu0 0.0
        %3911 = vmatprep.subr.mxu0 0.0
        %3912 = vmatpush1.xpose.msra.mxu0 0.0
        %3913 = vmatprep.subr.mxu0 0.0
        %3914 = vmatpush1.xpose.msra.mxu0 0.0
        %3915 = vmatprep.subr.mxu0 0.0
        %3916 = vmatpush1.xpose.msra.mxu0 0.0
        %3917 = vmatprep.subr.mxu0 0.0
        %3918 = vmatpush1.xpose.msra.mxu0 0.0
        %3919 = vmatprep.subr.mxu0 0.0
        %3920 = vmatpush1.xpose.msra.mxu0 0.0
        %3921 = vmatprep.subr.mxu0 0.0
        %3922 = vmatpush1.xpose.msra.mxu0 0.0
        %3923 = vmatprep.subr.mxu0 0.0
        %3924 = vmatpush1.xpose.msra.mxu0 0.0
        %3925 = vmatprep.subr.mxu0 0.0
        %3926 = vmatpush1.xpose.msra.mxu0 0.0
        %3927 = vmatprep.subr.mxu0 0.0
        %3928 = vmatpush1.xpose.msra.mxu0 0.0
        %3929 = vmatprep.subr.mxu0 0.0
        %3930 = vmatpush1.xpose.msra.mxu0 0.0
        %3931 = vmatprep.subr.mxu0 0.0
        %3932 = vmatpush1.xpose.msra.mxu0 0.0
        %3933 = vmatprep.subr.mxu0 0.0
        %3934 = vmatpush1.xpose.msra.mxu0 0.0
        %3935 = vmatprep.subr.mxu0 0.0
        %3936 = vmatpush1.xpose.msra.mxu0 0.0
        %3937 = vmatprep.subr.mxu0 0.0
        %3938 = vmatpush1.xpose.msra.mxu0 0.0
        %3939 = vmatprep.subr.mxu0 0.0
        %3940 = vmatpush1.xpose.msra.mxu0 0.0
        %3941 = vmatprep.subr.mxu0 0.0
        %3942 = vmatpush1.xpose.msra.mxu0 0.0
        %3943 = vmatprep.subr.mxu0 0.0
        %3944 = vmatpush1.xpose.msra.mxu0 0.0
        %3945 = vmatprep.subr.mxu0 0.0
        %3946 = vmatpush1.xpose.msra.mxu0 0.0
        %3947 = vmatprep.subr.mxu0 0.0
        %3948 = vmatpush1.xpose.msra.mxu0 0.0
        %3949 = vmatprep.subr.mxu0 0.0
        %3950 = vmatpush1.xpose.msra.mxu0 0.0
        %3951 = vmatprep.subr.mxu0 0.0
        %3952 = vmatpush1.xpose.msra.mxu0 0.0
        %3953 = vmatprep.subr.mxu0 0.0
        %3954 = vmatpush1.xpose.msra.mxu0 0.0
        %3955 = vmatprep.subr.mxu0 0.0
        %3956 = vmatpush1.xpose.msra.mxu0 0.0
        %3957 = vmatprep.subr.mxu0 0.0
        %3958 = vmatpush1.xpose.msra.mxu0 0.0
        %3959 = vmatprep.subr.mxu0 0.0
        %3960 = vmatpush1.xpose.msra.mxu0 0.0
        %3961 = vmatprep.mubr.f32.mxu0 0.0
        %3962 = vmatmul.mubr.f32.gmra.mrb[0].mxu0 %v3886
        %v3963 = vpop.f32.mrb[0].mxu0
        %v3964 = vadd.f32 0.0, %v3963
        %v3965 = vpop.f32.mrb[0].mxu0
        %3966 = vmatprep.mubr.f32.mxu0 0.0
        %3967 = vmatmul.mubr.f32.gmra.mrb[0].mxu0 %v3889
        %v3968 = vpop.f32.mrb[0].mxu0
        %v3969 = vadd.f32 0.0, %v3968
        %v3970 = vpop.f32.mrb[0].mxu0
        %3971 = vdwg.mxu0
        %v3973 = vsel %vm827, %v3819, 0
        %v3976 = vsel %vm827, %v3820, 0
        %v3979 = vsel %vm827, %v3879, 0
        %v3982 = vsel %vm827, %v3880, 0
        %3984 = vmatprep.subr.mxu0 0.0
        %3985 = vmatpush1.xpose.msra.mxu0 %v3979
        %3986 = vmatprep.subr.mxu0 0.0
        %3987 = vmatpush1.xpose.msra.mxu0 %v3982
        %3988 = vmatprep.subr.mxu0 0.0
        %3989 = vmatpush1.xpose.msra.mxu0 0.0
        %3990 = vmatprep.subr.mxu0 0.0
        %3991 = vmatpush1.xpose.msra.mxu0 0.0
        %3992 = vmatprep.subr.mxu0 0.0
        %3993 = vmatpush1.xpose.msra.mxu0 0.0
        %3994 = vmatprep.subr.mxu0 0.0
        %3995 = vmatpush1.xpose.msra.mxu0 0.0
        %3996 = vmatprep.subr.mxu0 0.0
        %3997 = vmatpush1.xpose.msra.mxu0 0.0
        %3998 = vmatprep.subr.mxu0 0.0
        %3999 = vmatpush1.xpose.msra.mxu0 0.0
        %4000 = vmatprep.subr.mxu0 0.0
        %4001 = vmatpush1.xpose.msra.mxu0 0.0
        %4002 = vmatprep.subr.mxu0 0.0
        %4003 = vmatpush1.xpose.msra.mxu0 0.0
        %4004 = vmatprep.subr.mxu0 0.0
        %4005 = vmatpush1.xpose.msra.mxu0 0.0
        %4006 = vmatprep.subr.mxu0 0.0
        %4007 = vmatpush1.xpose.msra.mxu0 0.0
        %4008 = vmatprep.subr.mxu0 0.0
        %4009 = vmatpush1.xpose.msra.mxu0 0.0
        %4010 = vmatprep.subr.mxu0 0.0
        %4011 = vmatpush1.xpose.msra.mxu0 0.0
        %4012 = vmatprep.subr.mxu0 0.0
        %4013 = vmatpush1.xpose.msra.mxu0 0.0
        %4014 = vmatprep.subr.mxu0 0.0
        %4015 = vmatpush1.xpose.msra.mxu0 0.0
        %4016 = vmatprep.subr.mxu0 0.0
        %4017 = vmatpush1.xpose.msra.mxu0 0.0
        %4018 = vmatprep.subr.mxu0 0.0
        %4019 = vmatpush1.xpose.msra.mxu0 0.0
        %4020 = vmatprep.subr.mxu0 0.0
        %4021 = vmatpush1.xpose.msra.mxu0 0.0
        %4022 = vmatprep.subr.mxu0 0.0
        %4023 = vmatpush1.xpose.msra.mxu0 0.0
        %4024 = vmatprep.subr.mxu0 0.0
        %4025 = vmatpush1.xpose.msra.mxu0 0.0
        %4026 = vmatprep.subr.mxu0 0.0
        %4027 = vmatpush1.xpose.msra.mxu0 0.0
        %4028 = vmatprep.subr.mxu0 0.0
        %4029 = vmatpush1.xpose.msra.mxu0 0.0
        %4030 = vmatprep.subr.mxu0 0.0
        %4031 = vmatpush1.xpose.msra.mxu0 0.0
        %4032 = vmatprep.subr.mxu0 0.0
        %4033 = vmatpush1.xpose.msra.mxu0 0.0
        %4034 = vmatprep.subr.mxu0 0.0
        %4035 = vmatpush1.xpose.msra.mxu0 0.0
        %4036 = vmatprep.subr.mxu0 0.0
        %4037 = vmatpush1.xpose.msra.mxu0 0.0
        %4038 = vmatprep.subr.mxu0 0.0
        %4039 = vmatpush1.xpose.msra.mxu0 0.0
        %4040 = vmatprep.subr.mxu0 0.0
        %4041 = vmatpush1.xpose.msra.mxu0 0.0
        %4042 = vmatprep.subr.mxu0 0.0
        %4043 = vmatpush1.xpose.msra.mxu0 0.0
        %4044 = vmatprep.subr.mxu0 0.0
        %4045 = vmatpush1.xpose.msra.mxu0 0.0
        %4046 = vmatprep.subr.mxu0 0.0
        %4047 = vmatpush1.xpose.msra.mxu0 0.0
        %4048 = vmatprep.mubr.f32.mxu0 0.0
        %4049 = vmatmul.mubr.f32.gmra.mrb[0].mxu0 %v3973
        %v4050 = vpop.f32.mrb[0].mxu0
        %v4051 = vadd.f32 0.0, %v4050
        %v4052 = vpop.f32.mrb[0].mxu0
        %4053 = vmatprep.mubr.f32.mxu0 0.0
        %4054 = vmatmul.mubr.f32.gmra.mrb[0].mxu0 %v3976
        %v4055 = vpop.f32.mrb[0].mxu0
        %v4056 = vadd.f32 0.0, %v4055
        %v4057 = vpop.f32.mrb[0].mxu0
        %4058 = vdwg.mxu0
        %v4060 = vsel %vm827, %v3821, 0
        %v4063 = vsel %vm827, %v3822, 0
        %v4066 = vsel %vm827, %v3881, 0
        %v4069 = vsel %vm827, %v3882, 0
        %4071 = vmatprep.subr.mxu0 0.0
        %4072 = vmatpush1.xpose.msra.mxu0 %v4066
        %4073 = vmatprep.subr.mxu0 0.0
        %4074 = vmatpush1.xpose.msra.mxu0 %v4069
        %4075 = vmatprep.subr.mxu0 0.0
        %4076 = vmatpush1.xpose.msra.mxu0 0.0
        %4077 = vmatprep.subr.mxu0 0.0
        %4078 = vmatpush1.xpose.msra.mxu0 0.0
        %4079 = vmatprep.subr.mxu0 0.0
        %4080 = vmatpush1.xpose.msra.mxu0 0.0
        %4081 = vmatprep.subr.mxu0 0.0
        %4082 = vmatpush1.xpose.msra.mxu0 0.0
        %4083 = vmatprep.subr.mxu0 0.0
        %4084 = vmatpush1.xpose.msra.mxu0 0.0
        %4085 = vmatprep.subr.mxu0 0.0
        %4086 = vmatpush1.xpose.msra.mxu0 0.0
        %4087 = vmatprep.subr.mxu0 0.0
        %4088 = vmatpush1.xpose.msra.mxu0 0.0
        %4089 = vmatprep.subr.mxu0 0.0
        %4090 = vmatpush1.xpose.msra.mxu0 0.0
        %4091 = vmatprep.subr.mxu0 0.0
        %4092 = vmatpush1.xpose.msra.mxu0 0.0
        %4093 = vmatprep.subr.mxu0 0.0
        %4094 = vmatpush1.xpose.msra.mxu0 0.0
        %4095 = vmatprep.subr.mxu0 0.0
        %4096 = vmatpush1.xpose.msra.mxu0 0.0
        %4097 = vmatprep.subr.mxu0 0.0
        %4098 = vmatpush1.xpose.msra.mxu0 0.0
        %4099 = vmatprep.subr.mxu0 0.0
        %4100 = vmatpush1.xpose.msra.mxu0 0.0
        %4101 = vmatprep.subr.mxu0 0.0
        %4102 = vmatpush1.xpose.msra.mxu0 0.0
        %4103 = vmatprep.subr.mxu0 0.0
        %4104 = vmatpush1.xpose.msra.mxu0 0.0
        %4105 = vmatprep.subr.mxu0 0.0
        %4106 = vmatpush1.xpose.msra.mxu0 0.0
        %4107 = vmatprep.subr.mxu0 0.0
        %4108 = vmatpush1.xpose.msra.mxu0 0.0
        %4109 = vmatprep.subr.mxu0 0.0
        %4110 = vmatpush1.xpose.msra.mxu0 0.0
        %4111 = vmatprep.subr.mxu0 0.0
        %4112 = vmatpush1.xpose.msra.mxu0 0.0
        %4113 = vmatprep.subr.mxu0 0.0
        %4114 = vmatpush1.xpose.msra.mxu0 0.0
        %4115 = vmatprep.subr.mxu0 0.0
        %4116 = vmatpush1.xpose.msra.mxu0 0.0
        %4117 = vmatprep.subr.mxu0 0.0
        %4118 = vmatpush1.xpose.msra.mxu0 0.0
        %4119 = vmatprep.subr.mxu0 0.0
        %4120 = vmatpush1.xpose.msra.mxu0 0.0
        %4121 = vmatprep.subr.mxu0 0.0
        %4122 = vmatpush1.xpose.msra.mxu0 0.0
        %4123 = vmatprep.subr.mxu0 0.0
        %4124 = vmatpush1.xpose.msra.mxu0 0.0
        %4125 = vmatprep.subr.mxu0 0.0
        %4126 = vmatpush1.xpose.msra.mxu0 0.0
        %4127 = vmatprep.subr.mxu0 0.0
        %4128 = vmatpush1.xpose.msra.mxu0 0.0
        %4129 = vmatprep.subr.mxu0 0.0
        %4130 = vmatpush1.xpose.msra.mxu0 0.0
        %4131 = vmatprep.subr.mxu0 0.0
        %4132 = vmatpush1.xpose.msra.mxu0 0.0
        %4133 = vmatprep.subr.mxu0 0.0
        %4134 = vmatpush1.xpose.msra.mxu0 0.0
        %4135 = vmatprep.mubr.f32.mxu0 0.0
        %4136 = vmatmul.mubr.f32.gmra.mrb[0].mxu0 %v4060
        %v4137 = vpop.f32.mrb[0].mxu0
        %v4138 = vadd.f32 0.0, %v4137
        %v4139 = vpop.f32.mrb[0].mxu0
        %4140 = vmatprep.mubr.f32.mxu0 0.0
        %4141 = vmatmul.mubr.f32.gmra.mrb[0].mxu0 %v4063
        %v4142 = vpop.f32.mrb[0].mxu0
        %v4143 = vadd.f32 0.0, %v4142
        %v4144 = vpop.f32.mrb[0].mxu0
        %4145 = vdwg.mxu0
        %v4147 = vsel %vm827, %v3823, 0
        %v4150 = vsel %vm827, %v3824, 0
        %v4153 = vsel %vm827, %v3883, 0
        %v4156 = vsel %vm827, %v3884, 0
        %4158 = vmatprep.subr.mxu0 0.0
        %4159 = vmatpush1.xpose.msra.mxu0 %v4153
        %4160 = vmatprep.subr.mxu0 0.0
        %4161 = vmatpush1.xpose.msra.mxu0 %v4156
        %4162 = vmatprep.subr.mxu0 0.0
        %4163 = vmatpush1.xpose.msra.mxu0 0.0
        %4164 = vmatprep.subr.mxu0 0.0
        %4165 = vmatpush1.xpose.msra.mxu0 0.0
        %4166 = vmatprep.subr.mxu0 0.0
        %4167 = vmatpush1.xpose.msra.mxu0 0.0
        %4168 = vmatprep.subr.mxu0 0.0
        %4169 = vmatpush1.xpose.msra.mxu0 0.0
        %4170 = vmatprep.subr.mxu0 0.0
        %4171 = vmatpush1.xpose.msra.mxu0 0.0
        %4172 = vmatprep.subr.mxu0 0.0
        %4173 = vmatpush1.xpose.msra.mxu0 0.0
        %4174 = vmatprep.subr.mxu0 0.0
        %4175 = vmatpush1.xpose.msra.mxu0 0.0
        %4176 = vmatprep.subr.mxu0 0.0
        %4177 = vmatpush1.xpose.msra.mxu0 0.0
        %4178 = vmatprep.subr.mxu0 0.0
        %4179 = vmatpush1.xpose.msra.mxu0 0.0
        %4180 = vmatprep.subr.mxu0 0.0
        %4181 = vmatpush1.xpose.msra.mxu0 0.0
        %4182 = vmatprep.subr.mxu0 0.0
        %4183 = vmatpush1.xpose.msra.mxu0 0.0
        %4184 = vmatprep.subr.mxu0 0.0
        %4185 = vmatpush1.xpose.msra.mxu0 0.0
        %4186 = vmatprep.subr.mxu0 0.0
        %4187 = vmatpush1.xpose.msra.mxu0 0.0
        %4188 = vmatprep.subr.mxu0 0.0
        %4189 = vmatpush1.xpose.msra.mxu0 0.0
        %4190 = vmatprep.subr.mxu0 0.0
        %4191 = vmatpush1.xpose.msra.mxu0 0.0
        %4192 = vmatprep.subr.mxu0 0.0
        %4193 = vmatpush1.xpose.msra.mxu0 0.0
        %4194 = vmatprep.subr.mxu0 0.0
        %4195 = vmatpush1.xpose.msra.mxu0 0.0
        %4196 = vmatprep.subr.mxu0 0.0
        %4197 = vmatpush1.xpose.msra.mxu0 0.0
        %4198 = vmatprep.subr.mxu0 0.0
        %4199 = vmatpush1.xpose.msra.mxu0 0.0
        %4200 = vmatprep.subr.mxu0 0.0
        %4201 = vmatpush1.xpose.msra.mxu0 0.0
        %4202 = vmatprep.subr.mxu0 0.0
        %4203 = vmatpush1.xpose.msra.mxu0 0.0
        %4204 = vmatprep.subr.mxu0 0.0
        %4205 = vmatpush1.xpose.msra.mxu0 0.0
        %4206 = vmatprep.subr.mxu0 0.0
        %4207 = vmatpush1.xpose.msra.mxu0 0.0
        %4208 = vmatprep.subr.mxu0 0.0
        %4209 = vmatpush1.xpose.msra.mxu0 0.0
        %4210 = vmatprep.subr.mxu0 0.0
        %4211 = vmatpush1.xpose.msra.mxu0 0.0
        %4212 = vmatprep.subr.mxu0 0.0
        %4213 = vmatpush1.xpose.msra.mxu0 0.0
        %4214 = vmatprep.subr.mxu0 0.0
        %4215 = vmatpush1.xpose.msra.mxu0 0.0
        %4216 = vmatprep.subr.mxu0 0.0
        %4217 = vmatpush1.xpose.msra.mxu0 0.0
        %4218 = vmatprep.subr.mxu0 0.0
        %4219 = vmatpush1.xpose.msra.mxu0 0.0
        %4220 = vmatprep.subr.mxu0 0.0
        %4221 = vmatpush1.xpose.msra.mxu0 0.0
        %4222 = vmatprep.mubr.f32.mxu0 0.0
        %4223 = vmatmul.mubr.f32.gmra.mrb[0].mxu0 %v4147
        %v4224 = vpop.f32.mrb[0].mxu0
        %v4225 = vadd.f32 0.0, %v4224
        %v4226 = vpop.f32.mrb[0].mxu0
        %4227 = vmatprep.mubr.f32.mxu0 0.0
        %4228 = vmatmul.mubr.f32.gmra.mrb[0].mxu0 %v4150
        %v4229 = vpop.f32.mrb[0].mxu0
        %v4230 = vadd.f32 0.0, %v4229
        %v4231 = vpop.f32.mrb[0].mxu0
        %4232 = vdwg.mxu0
        %v4233 = vsel %vm981, %v3964, -inf
        %4234 = vmax.xlane.f32.xlu0 %v4233
        %v4235 = vpop.xlane.xlu0 %4234
        %v4236 = vsel %vm981, %v3969, -inf
        %4237 = vmax.xlane.f32.xlu0 %v4236
        %v4238 = vpop.xlane.xlu0 %4237
        %v4239 = vsel %vm981, %v4051, -inf
        %4240 = vmax.xlane.f32.xlu0 %v4239
        %v4241 = vpop.xlane.xlu0 %4240
        %v4242 = vsel %vm981, %v4056, -inf
        %4243 = vmax.xlane.f32.xlu0 %v4242
        %v4244 = vpop.xlane.xlu0 %4243
        %v4245 = vsel %vm981, %v4138, -inf
        %4246 = vmax.xlane.f32.xlu0 %v4245
        %v4247 = vpop.xlane.xlu0 %4246
        %v4248 = vsel %vm981, %v4143, -inf
        %4249 = vmax.xlane.f32.xlu0 %v4248
        %v4250 = vpop.xlane.xlu0 %4249
        %v4251 = vsel %vm981, %v4225, -inf
        %4252 = vmax.xlane.f32.xlu0 %v4251
        %v4253 = vpop.xlane.xlu0 %4252
        %v4254 = vsel %vm981, %v4230, -inf
        %4255 = vmax.xlane.f32.xlu0 %v4254
        %v4256 = vpop.xlane.xlu0 %4255
        %v4257 = vsub.f32 %v3964, %v4235
        %v4258 = vsub.f32 %v3969, %v4238
        %v4259 = vsub.f32 %v4051, %v4241
        %v4260 = vsub.f32 %v4056, %v4244
        %v4261 = vsub.f32 %v4138, %v4247
        %v4262 = vsub.f32 %v4143, %v4250
        %v4263 = vsub.f32 %v4225, %v4253
        %v4264 = vsub.f32 %v4230, %v4256
        %v4265 = vmul.f32 %v4257, 1.442695
        %v4266 = vpow.pop %v4265
        %v4267 = vmul.f32 %v4258, 1.442695
        %v4268 = vpow.pop %v4267
        %v4269 = vmul.f32 %v4259, 1.442695
        %v4270 = vpow.pop %v4269
        %v4271 = vmul.f32 %v4260, 1.442695
        %v4272 = vpow.pop %v4271
        %v4273 = vmul.f32 %v4261, 1.442695
        %v4274 = vpow.pop %v4273
        %v4275 = vmul.f32 %v4262, 1.442695
        %v4276 = vpow.pop %v4275
        %v4277 = vmul.f32 %v4263, 1.442695
        %v4278 = vpow.pop %v4277
        %v4279 = vmul.f32 %v4264, 1.442695
        %v4280 = vpow.pop %v4279
        %v4281 = vsel %vm981, %v4266, 0.0
        %4282 = vadd.xlane.f32.xlu0 %v4281
        %v4283 = vpop.xlane.xlu0 %4282
        %v4284 = vsel %vm981, %v4268, 0.0
        %4285 = vadd.xlane.f32.xlu0 %v4284
        %v4286 = vpop.xlane.xlu0 %4285
        %v4287 = vsel %vm981, %v4270, 0.0
        %4288 = vadd.xlane.f32.xlu0 %v4287
        %v4289 = vpop.xlane.xlu0 %4288
        %v4290 = vsel %vm981, %v4272, 0.0
        %4291 = vadd.xlane.f32.xlu0 %v4290
        %v4292 = vpop.xlane.xlu0 %4291
        %v4293 = vsel %vm981, %v4274, 0.0
        %4294 = vadd.xlane.f32.xlu0 %v4293
        %v4295 = vpop.xlane.xlu0 %4294
        %v4296 = vsel %vm981, %v4276, 0.0
        %4297 = vadd.xlane.f32.xlu0 %v4296
        %v4298 = vpop.xlane.xlu0 %4297
        %v4299 = vsel %vm981, %v4278, 0.0
        %4300 = vadd.xlane.f32.xlu0 %v4299
        %v4301 = vpop.xlane.xlu0 %4300
        %v4302 = vsel %vm981, %v4280, 0.0
        %4303 = vadd.xlane.f32.xlu0 %v4302
        %v4304 = vpop.xlane.xlu0 %4303
        %v4305 = vrcp.pop %v4283
        %v4306 = vrcp.pop %v4286
        %v4307 = vrcp.pop %v4289
        %v4308 = vrcp.pop %v4292
        %v4309 = vrcp.pop %v4295
        %v4310 = vrcp.pop %v4298
        %v4311 = vrcp.pop %v4301
        %v4312 = vrcp.pop %v4304
        %v4313 = vmul.f32 %v4266, %v4305
        %v4314 = vmul.f32 %v4268, %v4306
        %v4315 = vmul.f32 %v4270, %v4307
        %v4316 = vmul.f32 %v4272, %v4308
        %v4317 = vmul.f32 %v4274, %v4309
        %v4318 = vmul.f32 %v4276, %v4310
        %v4319 = vmul.f32 %v4278, %v4311
        %v4320 = vmul.f32 %v4280, %v4312
        %v4322 = vsel %vm981, %v4313, 0
        %v4325 = vsel %vm981, %v4314, 0
        %4327 = vmatprep.subr.mxu0 0.0
        %4328 = vmatpush1.msra.mxu0 %v3773
        %4329 = vmatprep.subr.mxu0 0.0
        %4330 = vmatpush1.msra.mxu0 %v3774
        %4331 = vmatprep.subr.mxu0 0.0
        %4332 = vmatpush1.msra.mxu0 0.0
        %4333 = vmatprep.subr.mxu0 0.0
        %4334 = vmatpush1.msra.mxu0 0.0
        %4335 = vmatprep.subr.mxu0 0.0
        %4336 = vmatpush1.msra.mxu0 0.0
        %4337 = vmatprep.subr.mxu0 0.0
        %4338 = vmatpush1.msra.mxu0 0.0
        %4339 = vmatprep.subr.mxu0 0.0
        %4340 = vmatpush1.msra.mxu0 0.0
        %4341 = vmatprep.subr.mxu0 0.0
        %4342 = vmatpush1.msra.mxu0 0.0
        %4343 = vmatprep.subr.mxu0 0.0
        %4344 = vmatpush1.msra.mxu0 0.0
        %4345 = vmatprep.subr.mxu0 0.0
        %4346 = vmatpush1.msra.mxu0 0.0
        %4347 = vmatprep.subr.mxu0 0.0
        %4348 = vmatpush1.msra.mxu0 0.0
        %4349 = vmatprep.subr.mxu0 0.0
        %4350 = vmatpush1.msra.mxu0 0.0
        %4351 = vmatprep.subr.mxu0 0.0
        %4352 = vmatpush1.msra.mxu0 0.0
        %4353 = vmatprep.subr.mxu0 0.0
        %4354 = vmatpush1.msra.mxu0 0.0
        %4355 = vmatprep.subr.mxu0 0.0
        %4356 = vmatpush1.msra.mxu0 0.0
        %4357 = vmatprep.subr.mxu0 0.0
        %4358 = vmatpush1.msra.mxu0 0.0
        %4359 = vmatprep.subr.mxu0 0.0
        %4360 = vmatpush1.msra.mxu0 0.0
        %4361 = vmatprep.subr.mxu0 0.0
        %4362 = vmatpush1.msra.mxu0 0.0
        %4363 = vmatprep.subr.mxu0 0.0
        %4364 = vmatpush1.msra.mxu0 0.0
        %4365 = vmatprep.subr.mxu0 0.0
        %4366 = vmatpush1.msra.mxu0 0.0
        %4367 = vmatprep.subr.mxu0 0.0
        %4368 = vmatpush1.msra.mxu0 0.0
        %4369 = vmatprep.subr.mxu0 0.0
        %4370 = vmatpush1.msra.mxu0 0.0
        %4371 = vmatprep.subr.mxu0 0.0
        %4372 = vmatpush1.msra.mxu0 0.0
        %4373 = vmatprep.subr.mxu0 0.0
        %4374 = vmatpush1.msra.mxu0 0.0
        %4375 = vmatprep.subr.mxu0 0.0
        %4376 = vmatpush1.msra.mxu0 0.0
        %4377 = vmatprep.subr.mxu0 0.0
        %4378 = vmatpush1.msra.mxu0 0.0
        %4379 = vmatprep.subr.mxu0 0.0
        %4380 = vmatpush1.msra.mxu0 0.0
        %4381 = vmatprep.subr.mxu0 0.0
        %4382 = vmatpush1.msra.mxu0 0.0
        %4383 = vmatprep.subr.mxu0 0.0
        %4384 = vmatpush1.msra.mxu0 0.0
        %4385 = vmatprep.subr.mxu0 0.0
        %4386 = vmatpush1.msra.mxu0 0.0
        %4387 = vmatprep.subr.mxu0 0.0
        %4388 = vmatpush1.msra.mxu0 0.0
        %4389 = vmatprep.subr.mxu0 0.0
        %4390 = vmatpush1.msra.mxu0 0.0
        %4391 = vmatprep.mubr.f32.mxu0 0.0
        %4392 = vmatmul.mubr.f32.gmra.mrb[0].mxu0 %v4322
        %v4393 = vpop.f32.mrb[0].mxu0
        %v4394 = vadd.f32 0.0, %v4393
        %v4395 = vpop.f32.mrb[0].mxu0
        %4396 = vmatprep.mubr.f32.mxu0 0.0
        %4397 = vmatmul.mubr.f32.gmra.mrb[0].mxu0 %v4325
        %v4398 = vpop.f32.mrb[0].mxu0
        %v4399 = vadd.f32 0.0, %v4398
        %v4400 = vpop.f32.mrb[0].mxu0
        %4401 = vdwg.mxu0
        %v4403 = vsel %vm981, %v4315, 0
        %v4406 = vsel %vm981, %v4316, 0
        %4408 = vmatprep.subr.mxu0 0.0
        %4409 = vmatpush1.msra.mxu0 %v3775
        %4410 = vmatprep.subr.mxu0 0.0
        %4411 = vmatpush1.msra.mxu0 %v3776
        %4412 = vmatprep.subr.mxu0 0.0
        %4413 = vmatpush1.msra.mxu0 0.0
        %4414 = vmatprep.subr.mxu0 0.0
        %4415 = vmatpush1.msra.mxu0 0.0
        %4416 = vmatprep.subr.mxu0 0.0
        %4417 = vmatpush1.msra.mxu0 0.0
        %4418 = vmatprep.subr.mxu0 0.0
        %4419 = vmatpush1.msra.mxu0 0.0
        %4420 = vmatprep.subr.mxu0 0.0
        %4421 = vmatpush1.msra.mxu0 0.0
        %4422 = vmatprep.subr.mxu0 0.0
        %4423 = vmatpush1.msra.mxu0 0.0
        %4424 = vmatprep.subr.mxu0 0.0
        %4425 = vmatpush1.msra.mxu0 0.0
        %4426 = vmatprep.subr.mxu0 0.0
        %4427 = vmatpush1.msra.mxu0 0.0
        %4428 = vmatprep.subr.mxu0 0.0
        %4429 = vmatpush1.msra.mxu0 0.0
        %4430 = vmatprep.subr.mxu0 0.0
        %4431 = vmatpush1.msra.mxu0 0.0
        %4432 = vmatprep.subr.mxu0 0.0
        %4433 = vmatpush1.msra.mxu0 0.0
        %4434 = vmatprep.subr.mxu0 0.0
        %4435 = vmatpush1.msra.mxu0 0.0
        %4436 = vmatprep.subr.mxu0 0.0
        %4437 = vmatpush1.msra.mxu0 0.0
        %4438 = vmatprep.subr.mxu0 0.0
        %4439 = vmatpush1.msra.mxu0 0.0
        %4440 = vmatprep.subr.mxu0 0.0
        %4441 = vmatpush1.msra.mxu0 0.0
        %4442 = vmatprep.subr.mxu0 0.0
        %4443 = vmatpush1.msra.mxu0 0.0
        %4444 = vmatprep.subr.mxu0 0.0
        %4445 = vmatpush1.msra.mxu0 0.0
        %4446 = vmatprep.subr.mxu0 0.0
        %4447 = vmatpush1.msra.mxu0 0.0
        %4448 = vmatprep.subr.mxu0 0.0
        %4449 = vmatpush1.msra.mxu0 0.0
        %4450 = vmatprep.subr.mxu0 0.0
        %4451 = vmatpush1.msra.mxu0 0.0
        %4452 = vmatprep.subr.mxu0 0.0
        %4453 = vmatpush1.msra.mxu0 0.0
        %4454 = vmatprep.subr.mxu0 0.0
        %4455 = vmatpush1.msra.mxu0 0.0
        %4456 = vmatprep.subr.mxu0 0.0
        %4457 = vmatpush1.msra.mxu0 0.0
        %4458 = vmatprep.subr.mxu0 0.0
        %4459 = vmatpush1.msra.mxu0 0.0
        %4460 = vmatprep.subr.mxu0 0.0
        %4461 = vmatpush1.msra.mxu0 0.0
        %4462 = vmatprep.subr.mxu0 0.0
        %4463 = vmatpush1.msra.mxu0 0.0
        %4464 = vmatprep.subr.mxu0 0.0
        %4465 = vmatpush1.msra.mxu0 0.0
        %4466 = vmatprep.subr.mxu0 0.0
        %4467 = vmatpush1.msra.mxu0 0.0
        %4468 = vmatprep.subr.mxu0 0.0
        %4469 = vmatpush1.msra.mxu0 0.0
        %4470 = vmatprep.subr.mxu0 0.0
        %4471 = vmatpush1.msra.mxu0 0.0
        %4472 = vmatprep.mubr.f32.mxu0 0.0
        %4473 = vmatmul.mubr.f32.gmra.mrb[0].mxu0 %v4403
        %v4474 = vpop.f32.mrb[0].mxu0
        %v4475 = vadd.f32 0.0, %v4474
        %v4476 = vpop.f32.mrb[0].mxu0
        %4477 = vmatprep.mubr.f32.mxu0 0.0
        %4478 = vmatmul.mubr.f32.gmra.mrb[0].mxu0 %v4406
        %v4479 = vpop.f32.mrb[0].mxu0
        %v4480 = vadd.f32 0.0, %v4479
        %v4481 = vpop.f32.mrb[0].mxu0
        %4482 = vdwg.mxu0
        %v4484 = vsel %vm981, %v4317, 0
        %v4487 = vsel %vm981, %v4318, 0
        %4489 = vmatprep.subr.mxu0 0.0
        %4490 = vmatpush1.msra.mxu0 %v3777
        %4491 = vmatprep.subr.mxu0 0.0
        %4492 = vmatpush1.msra.mxu0 %v3778
        %4493 = vmatprep.subr.mxu0 0.0
        %4494 = vmatpush1.msra.mxu0 0.0
        %4495 = vmatprep.subr.mxu0 0.0
        %4496 = vmatpush1.msra.mxu0 0.0
        %4497 = vmatprep.subr.mxu0 0.0
        %4498 = vmatpush1.msra.mxu0 0.0
        %4499 = vmatprep.subr.mxu0 0.0
        %4500 = vmatpush1.msra.mxu0 0.0
        %4501 = vmatprep.subr.mxu0 0.0
        %4502 = vmatpush1.msra.mxu0 0.0
        %4503 = vmatprep.subr.mxu0 0.0
        %4504 = vmatpush1.msra.mxu0 0.0
        %4505 = vmatprep.subr.mxu0 0.0
        %4506 = vmatpush1.msra.mxu0 0.0
        %4507 = vmatprep.subr.mxu0 0.0
        %4508 = vmatpush1.msra.mxu0 0.0
        %4509 = vmatprep.subr.mxu0 0.0
        %4510 = vmatpush1.msra.mxu0 0.0
        %4511 = vmatprep.subr.mxu0 0.0
        %4512 = vmatpush1.msra.mxu0 0.0
        %4513 = vmatprep.subr.mxu0 0.0
        %4514 = vmatpush1.msra.mxu0 0.0
        %4515 = vmatprep.subr.mxu0 0.0
        %4516 = vmatpush1.msra.mxu0 0.0
        %4517 = vmatprep.subr.mxu0 0.0
        %4518 = vmatpush1.msra.mxu0 0.0
        %4519 = vmatprep.subr.mxu0 0.0
        %4520 = vmatpush1.msra.mxu0 0.0
        %4521 = vmatprep.subr.mxu0 0.0
        %4522 = vmatpush1.msra.mxu0 0.0
        %4523 = vmatprep.subr.mxu0 0.0
        %4524 = vmatpush1.msra.mxu0 0.0
        %4525 = vmatprep.subr.mxu0 0.0
        %4526 = vmatpush1.msra.mxu0 0.0
        %4527 = vmatprep.subr.mxu0 0.0
        %4528 = vmatpush1.msra.mxu0 0.0
        %4529 = vmatprep.subr.mxu0 0.0
        %4530 = vmatpush1.msra.mxu0 0.0
        %4531 = vmatprep.subr.mxu0 0.0
        %4532 = vmatpush1.msra.mxu0 0.0
        %4533 = vmatprep.subr.mxu0 0.0
        %4534 = vmatpush1.msra.mxu0 0.0
        %4535 = vmatprep.subr.mxu0 0.0
        %4536 = vmatpush1.msra.mxu0 0.0
        %4537 = vmatprep.subr.mxu0 0.0
        %4538 = vmatpush1.msra.mxu0 0.0
        %4539 = vmatprep.subr.mxu0 0.0
        %4540 = vmatpush1.msra.mxu0 0.0
        %4541 = vmatprep.subr.mxu0 0.0
        %4542 = vmatpush1.msra.mxu0 0.0
        %4543 = vmatprep.subr.mxu0 0.0
        %4544 = vmatpush1.msra.mxu0 0.0
        %4545 = vmatprep.subr.mxu0 0.0
        %4546 = vmatpush1.msra.mxu0 0.0
        %4547 = vmatprep.subr.mxu0 0.0
        %4548 = vmatpush1.msra.mxu0 0.0
        %4549 = vmatprep.subr.mxu0 0.0
        %4550 = vmatpush1.msra.mxu0 0.0
        %4551 = vmatprep.subr.mxu0 0.0
        %4552 = vmatpush1.msra.mxu0 0.0
        %4553 = vmatprep.mubr.f32.mxu0 0.0
        %4554 = vmatmul.mubr.f32.gmra.mrb[0].mxu0 %v4484
        %v4555 = vpop.f32.mrb[0].mxu0
        %v4556 = vadd.f32 0.0, %v4555
        %v4557 = vpop.f32.mrb[0].mxu0
        %4558 = vmatprep.mubr.f32.mxu0 0.0
        %4559 = vmatmul.mubr.f32.gmra.mrb[0].mxu0 %v4487
        %v4560 = vpop.f32.mrb[0].mxu0
        %v4561 = vadd.f32 0.0, %v4560
        %v4562 = vpop.f32.mrb[0].mxu0
        %4563 = vdwg.mxu0
        %v4565 = vsel %vm981, %v4319, 0
        %v4568 = vsel %vm981, %v4320, 0
        %4570 = vmatprep.subr.mxu0 0.0
        %4571 = vmatpush1.msra.mxu0 %v3779
        %4572 = vmatprep.subr.mxu0 0.0
        %4573 = vmatpush1.msra.mxu0 %v3780
        %4574 = vmatprep.subr.mxu0 0.0
        %4575 = vmatpush1.msra.mxu0 0.0
        %4576 = vmatprep.subr.mxu0 0.0
        %4577 = vmatpush1.msra.mxu0 0.0
        %4578 = vmatprep.subr.mxu0 0.0
        %4579 = vmatpush1.msra.mxu0 0.0
        %4580 = vmatprep.subr.mxu0 0.0
        %4581 = vmatpush1.msra.mxu0 0.0
        %4582 = vmatprep.subr.mxu0 0.0
        %4583 = vmatpush1.msra.mxu0 0.0
        %4584 = vmatprep.subr.mxu0 0.0
        %4585 = vmatpush1.msra.mxu0 0.0
        %4586 = vmatprep.subr.mxu0 0.0
        %4587 = vmatpush1.msra.mxu0 0.0
        %4588 = vmatprep.subr.mxu0 0.0
        %4589 = vmatpush1.msra.mxu0 0.0
        %4590 = vmatprep.subr.mxu0 0.0
        %4591 = vmatpush1.msra.mxu0 0.0
        %4592 = vmatprep.subr.mxu0 0.0
        %4593 = vmatpush1.msra.mxu0 0.0
        %4594 = vmatprep.subr.mxu0 0.0
        %4595 = vmatpush1.msra.mxu0 0.0
        %4596 = vmatprep.subr.mxu0 0.0
        %4597 = vmatpush1.msra.mxu0 0.0
        %4598 = vmatprep.subr.mxu0 0.0
        %4599 = vmatpush1.msra.mxu0 0.0
        %4600 = vmatprep.subr.mxu0 0.0
        %4601 = vmatpush1.msra.mxu0 0.0
        %4602 = vmatprep.subr.mxu0 0.0
        %4603 = vmatpush1.msra.mxu0 0.0
        %4604 = vmatprep.subr.mxu0 0.0
        %4605 = vmatpush1.msra.mxu0 0.0
        %4606 = vmatprep.subr.mxu0 0.0
        %4607 = vmatpush1.msra.mxu0 0.0
        %4608 = vmatprep.subr.mxu0 0.0
        %4609 = vmatpush1.msra.mxu0 0.0
        %4610 = vmatprep.subr.mxu0 0.0
        %4611 = vmatpush1.msra.mxu0 0.0
        %4612 = vmatprep.subr.mxu0 0.0
        %4613 = vmatpush1.msra.mxu0 0.0
        %4614 = vmatprep.subr.mxu0 0.0
        %4615 = vmatpush1.msra.mxu0 0.0
        %4616 = vmatprep.subr.mxu0 0.0
        %4617 = vmatpush1.msra.mxu0 0.0
        %4618 = vmatprep.subr.mxu0 0.0
        %4619 = vmatpush1.msra.mxu0 0.0
        %4620 = vmatprep.subr.mxu0 0.0
        %4621 = vmatpush1.msra.mxu0 0.0
        %4622 = vmatprep.subr.mxu0 0.0
        %4623 = vmatpush1.msra.mxu0 0.0
        %4624 = vmatprep.subr.mxu0 0.0
        %4625 = vmatpush1.msra.mxu0 0.0
        %4626 = vmatprep.subr.mxu0 0.0
        %4627 = vmatpush1.msra.mxu0 0.0
        %4628 = vmatprep.subr.mxu0 0.0
        %4629 = vmatpush1.msra.mxu0 0.0
        %4630 = vmatprep.subr.mxu0 0.0
        %4631 = vmatpush1.msra.mxu0 0.0
        %4632 = vmatprep.subr.mxu0 0.0
        %4633 = vmatpush1.msra.mxu0 0.0
        %4634 = vmatprep.mubr.f32.mxu0 0.0
        %4635 = vmatmul.mubr.f32.gmra.mrb[0].mxu0 %v4565
        %v4636 = vpop.f32.mrb[0].mxu0
        %v4637 = vadd.f32 0.0, %v4636
        %v4638 = vpop.f32.mrb[0].mxu0
        %4639 = vmatprep.mubr.f32.mxu0 0.0
        %4640 = vmatmul.mubr.f32.gmra.mrb[0].mxu0 %v4568
        %v4641 = vpop.f32.mrb[0].mxu0
        %v4642 = vadd.f32 0.0, %v4641
        %v4643 = vpop.f32.mrb[0].mxu0
        %4644 = vdwg.mxu0
        %v4645 = vmul.f32 %v3773, %v4394
        %v4646 = vmul.f32 %v3774, %v4399
        %v4647 = vmul.f32 %v3775, %v4475
        %v4648 = vmul.f32 %v3776, %v4480
        %v4649 = vmul.f32 %v3777, %v4556
        %v4650 = vmul.f32 %v3778, %v4561
        %v4651 = vmul.f32 %v3779, %v4637
        %v4652 = vmul.f32 %v3780, %v4642
        %4661 = vrot.lane.b32.xlu0 %v4394, 32
        %v4662 = vpop.permute.xlu0 %4661
        %4663 = vrot.lane.b32.xlu0 %v4399, 32
        %v4664 = vpop.permute.xlu0 %4663
        %4665 = vrot.lane.b32.xlu0 %v4475, 32
        %v4666 = vpop.permute.xlu0 %4665
        %4667 = vrot.lane.b32.xlu0 %v4480, 32
        %v4668 = vpop.permute.xlu0 %4667
        %4669 = vrot.lane.b32.xlu0 %v4556, 32
        %v4670 = vpop.permute.xlu0 %4669
        %4671 = vrot.lane.b32.xlu0 %v4561, 32
        %v4672 = vpop.permute.xlu0 %4671
        %4673 = vrot.lane.b32.xlu0 %v4637, 32
        %v4674 = vpop.permute.xlu0 %4673
        %4675 = vrot.lane.b32.xlu0 %v4642, 32
        %v4676 = vpop.permute.xlu0 %4675
        %4693 = vrot.lane.b32.xlu0 %v4645, 64
        %v4694 = vpop.permute.xlu0 %4693
        %4695 = vrot.lane.b32.xlu0 %v4646, 64
        %v4696 = vpop.permute.xlu0 %4695
        %4697 = vrot.lane.b32.xlu0 %v4647, 64
        %v4698 = vpop.permute.xlu0 %4697
        %4699 = vrot.lane.b32.xlu0 %v4648, 64
        %v4700 = vpop.permute.xlu0 %4699
        %4701 = vrot.lane.b32.xlu0 %v4649, 64
        %v4702 = vpop.permute.xlu0 %4701
        %4703 = vrot.lane.b32.xlu0 %v4650, 64
        %v4704 = vpop.permute.xlu0 %4703
        %4705 = vrot.lane.b32.xlu0 %v4651, 64
        %v4706 = vpop.permute.xlu0 %4705
        %4707 = vrot.lane.b32.xlu0 %v4652, 64
        %v4708 = vpop.permute.xlu0 %4707
        %v4717 = vsel %vm734, %v3773, %v4662
        %v4718 = vsel %vm734, %v3774, %v4664
        %v4719 = vsel %vm734, %v3775, %v4666
        %v4720 = vsel %vm734, %v3776, %v4668
        %v4721 = vsel %vm734, %v3777, %v4670
        %v4722 = vsel %vm734, %v3778, %v4672
        %v4723 = vsel %vm734, %v3779, %v4674
        %v4724 = vsel %vm734, %v3780, %v4676
        %v4725 = vsel %vm1354, %v4717, %v4694
        %v4726 = vsel %vm1354, %v4718, %v4696
        %v4727 = vsel %vm1354, %v4719, %v4698
        %v4728 = vsel %vm1354, %v4720, %v4700
        %v4729 = vsel %vm1354, %v4721, %v4702
        %v4730 = vsel %vm1354, %v4722, %v4704
        %v4731 = vsel %vm1354, %v4723, %v4706
        %v4732 = vsel %vm1354, %v4724, %v4708
        %v4734 = vlaneseq
        %v4735 = vshrl.u32 %v4734, 7
        %v4736 = vsub.s32 0, %v4735
        %v4737 = vrot.slane %v721, %v4736
        %v4740 = vsel %vm1578, %v4725, 0
        %v4743 = vsel %vm1578, %v4726, 0
        %v4746 = vsel %vm1578, %v4727, 0
        %v4749 = vsel %vm1578, %v4728, 0
        %v4752 = vsel %vm1578, %v4729, 0
        %v4755 = vsel %vm1578, %v4730, 0
        %v4758 = vsel %vm1578, %v4731, 0
        %v4761 = vsel %vm1578, %v4732, 0
        %4763 = vmatprep.subr.mxu0 0.0
        %4764 = vmatpush1.msra.mxu0 %v706
        %4765 = vmatprep.subr.mxu0 0.0
        %4766 = vmatpush1.msra.mxu0 %v707
        %4767 = vmatprep.subr.mxu0 0.0
        %4768 = vmatpush1.msra.mxu0 %v708
        %4769 = vmatprep.subr.mxu0 0.0
        %4770 = vmatpush1.msra.mxu0 %v709
        %4771 = vmatprep.subr.mxu0 0.0
        %4772 = vmatpush1.msra.mxu0 %v710
        %4773 = vmatprep.subr.mxu0 0.0
        %4774 = vmatpush1.msra.mxu0 %v711
        %4775 = vmatprep.subr.mxu0 0.0
        %4776 = vmatpush1.msra.mxu0 %v712
        %4777 = vmatprep.subr.mxu0 0.0
        %4778 = vmatpush1.msra.mxu0 %v713
        %4779 = vmatprep.subr.mxu0 0.0
        %4780 = vmatpush1.msra.mxu0 %v714
        %4781 = vmatprep.subr.mxu0 0.0
        %4782 = vmatpush1.msra.mxu0 %v715
        %4783 = vmatprep.subr.mxu0 0.0
        %4784 = vmatpush1.msra.mxu0 %v716
        %4785 = vmatprep.subr.mxu0 0.0
        %4786 = vmatpush1.msra.mxu0 %v717
        %4787 = vmatprep.subr.mxu0 0.0
        %4788 = vmatpush1.msra.mxu0 0.0
        %4789 = vmatprep.subr.mxu0 0.0
        %4790 = vmatpush1.msra.mxu0 0.0
        %4791 = vmatprep.subr.mxu0 0.0
        %4792 = vmatpush1.msra.mxu0 0.0
        %4793 = vmatprep.subr.mxu0 0.0
        %4794 = vmatpush1.msra.mxu0 0.0
        %4795 = vmatprep.subr.mxu0 0.0
        %4796 = vmatpush1.msra.mxu0 0.0
        %4797 = vmatprep.subr.mxu0 0.0
        %4798 = vmatpush1.msra.mxu0 0.0
        %4799 = vmatprep.subr.mxu0 0.0
        %4800 = vmatpush1.msra.mxu0 0.0
        %4801 = vmatprep.subr.mxu0 0.0
        %4802 = vmatpush1.msra.mxu0 0.0
        %4803 = vmatprep.subr.mxu0 0.0
        %4804 = vmatpush1.msra.mxu0 0.0
        %4805 = vmatprep.subr.mxu0 0.0
        %4806 = vmatpush1.msra.mxu0 0.0
        %4807 = vmatprep.subr.mxu0 0.0
        %4808 = vmatpush1.msra.mxu0 0.0
        %4809 = vmatprep.subr.mxu0 0.0
        %4810 = vmatpush1.msra.mxu0 0.0
        %4811 = vmatprep.subr.mxu0 0.0
        %4812 = vmatpush1.msra.mxu0 0.0
        %4813 = vmatprep.subr.mxu0 0.0
        %4814 = vmatpush1.msra.mxu0 0.0
        %4815 = vmatprep.subr.mxu0 0.0
        %4816 = vmatpush1.msra.mxu0 0.0
        %4817 = vmatprep.subr.mxu0 0.0
        %4818 = vmatpush1.msra.mxu0 0.0
        %4819 = vmatprep.subr.mxu0 0.0
        %4820 = vmatpush1.msra.mxu0 0.0
        %4821 = vmatprep.subr.mxu0 0.0
        %4822 = vmatpush1.msra.mxu0 0.0
        %4823 = vmatprep.subr.mxu0 0.0
        %4824 = vmatpush1.msra.mxu0 0.0
        %4825 = vmatprep.subr.mxu0 0.0
        %4826 = vmatpush1.msra.mxu0 0.0
        %4827 = vmatprep.mubr.f32.mxu0 0.0
        %4828 = vmatmul.mubr.f32.gmra.mrb[0].mxu0 %v4740
        %v4829 = vpop.f32.mrb[0].mxu0
        %v4830 = vadd.f32 %v4737, %v4829
        %v4831 = vpop.f32.mrb[0].mxu0
        %4832 = vmatprep.mubr.f32.mxu0 0.0
        %4833 = vmatmul.mubr.f32.gmra.mrb[0].mxu0 %v4743
        %v4834 = vpop.f32.mrb[0].mxu0
        %v4835 = vadd.f32 %v4737, %v4834
        %v4836 = vpop.f32.mrb[0].mxu0
        %4837 = vmatprep.mubr.f32.mxu0 0.0
        %4838 = vmatmul.mubr.f32.gmra.mrb[0].mxu0 %v4746
        %v4839 = vpop.f32.mrb[0].mxu0
        %v4840 = vadd.f32 %v4737, %v4839
        %v4841 = vpop.f32.mrb[0].mxu0
        %4842 = vmatprep.mubr.f32.mxu0 0.0
        %4843 = vmatmul.mubr.f32.gmra.mrb[0].mxu0 %v4749
        %v4844 = vpop.f32.mrb[0].mxu0
        %v4845 = vadd.f32 %v4737, %v4844
        %v4846 = vpop.f32.mrb[0].mxu0
        %4847 = vmatprep.mubr.f32.mxu0 0.0
        %4848 = vmatmul.mubr.f32.gmra.mrb[0].mxu0 %v4752
        %v4849 = vpop.f32.mrb[0].mxu0
        %v4850 = vadd.f32 %v4737, %v4849
        %v4851 = vpop.f32.mrb[0].mxu0
        %4852 = vmatprep.mubr.f32.mxu0 0.0
        %4853 = vmatmul.mubr.f32.gmra.mrb[0].mxu0 %v4755
        %v4854 = vpop.f32.mrb[0].mxu0
        %v4855 = vadd.f32 %v4737, %v4854
        %v4856 = vpop.f32.mrb[0].mxu0
        %4857 = vmatprep.mubr.f32.mxu0 0.0
        %4858 = vmatmul.mubr.f32.gmra.mrb[0].mxu0 %v4758
        %v4859 = vpop.f32.mrb[0].mxu0
        %v4860 = vadd.f32 %v4737, %v4859
        %v4861 = vpop.f32.mrb[0].mxu0
        %4862 = vmatprep.mubr.f32.mxu0 0.0
        %4863 = vmatmul.mubr.f32.gmra.mrb[0].mxu0 %v4761
        %v4864 = vpop.f32.mrb[0].mxu0
        %v4865 = vadd.f32 %v4737, %v4864
        %v4866 = vpop.f32.mrb[0].mxu0
        %4867 = vdwg.mxu0
        %v4868 = vmax.f32 %v4830, 0.0
        %v4869 = vmax.f32 %v4835, 0.0
        %v4870 = vmax.f32 %v4840, 0.0
        %v4871 = vmax.f32 %v4845, 0.0
        %v4872 = vmax.f32 %v4850, 0.0
        %v4873 = vmax.f32 %v4855, 0.0
        %v4874 = vmax.f32 %v4860, 0.0
        %v4875 = vmax.f32 %v4865, 0.0
        %v4876 = vsel %vm734, %v4868, -inf
        %v4877 = vsel %vm734, %v4869, -inf
        %v4878 = vmax.f32 %v4876, %v4877
        %v4879 = vrot.slane %v4878, 4
        %v4880 = vmax.f32 %v4878, %v4879
        %v4881 = vrot.slane %v4880, 2
        %v4882 = vmax.f32 %v4880, %v4881
        %v4883 = vrot.slane %v4882, 1
        %v4884 = vmax.f32 %v4882, %v4883
        %v4885 = vsel %vm734, %v4870, -inf
        %v4886 = vsel %vm734, %v4871, -inf
        %v4887 = vmax.f32 %v4885, %v4886
        %v4888 = vrot.slane %v4887, 4
        %v4889 = vmax.f32 %v4887, %v4888
        %v4890 = vrot.slane %v4889, 2
        %v4891 = vmax.f32 %v4889, %v4890
        %v4892 = vrot.slane %v4891, 1
        %v4893 = vmax.f32 %v4891, %v4892
        %v4894 = vsel %vm734, %v4872, -inf
        %v4895 = vsel %vm734, %v4873, -inf
        %v4896 = vmax.f32 %v4894, %v4895
        %v4897 = vrot.slane %v4896, 4
        %v4898 = vmax.f32 %v4896, %v4897
        %v4899 = vrot.slane %v4898, 2
        %v4900 = vmax.f32 %v4898, %v4899
        %v4901 = vrot.slane %v4900, 1
        %v4902 = vmax.f32 %v4900, %v4901
        %v4903 = vsel %vm734, %v4874, -inf
        %v4904 = vsel %vm734, %v4875, -inf
        %v4905 = vmax.f32 %v4903, %v4904
        %v4906 = vrot.slane %v4905, 4
        %v4907 = vmax.f32 %v4905, %v4906
        %v4908 = vrot.slane %v4907, 2
        %v4909 = vmax.f32 %v4907, %v4908
        %v4910 = vrot.slane %v4909, 1
        %v4911 = vmax.f32 %v4909, %v4910
        %v4916 = vsel %vm1875, %v4893, %v4884
        %v4917 = vsel %vm1877, %v4902, %v4916
        %v4918 = vsel %vm1879, %v4911, %v4917
        %vm4920 = vcmask 257024
        %4921 = vst.msk [vmem:[%s613] sm:$0xf] %vm4920, %v4918
        %s4922 = sand.u32 %s438, 1
        %s4923 = scalar_lea.sflag [#allocation3], %s4922
        %s4924 = sand.u32 %s438, 1
        %s4925 = smul.addr %s4924, 4
        %s4926 = scalar_lea.vmem [#allocation2], %s4925
        // Predicated region
        $region93: #{option_compare_cell.1} parent=91 // pred_check
          %p4927 = pneg %p448
        $region94: #{option_compare_cell.1} parent=91 // pred_check_branch
          %4929 = sbr.rel (%p4927) target = $region96
        $region95: #{option_compare_cell.1} parent=91 // pred_region
          %s4931 = ssub.s32 64, 64
          %4932 = vsyncadd %s4923, %s4931
          %s4933 = smul.addr %s32, 64
          %s4934 = scalar_lea.hbm %s18, %s4933
          %s4936 = sshll.u32 %s4926, 4
          %s4937 = int_to_ptr.vmem [resolvable:$true] %s4936
          %4939 = dma.vmem_to_hbm [thread:$0]  %s4937, 64, %s4934, %s4923
        $region96: #{option_compare_cell.1} parent=91 // pred_fallthru
          _
      $region92: #{option_compare_cell.1} parent=5 // pred_fallthru
        _
      %p4940 = scmp.le.s32.totalorder 2, %s27
      // Predicated region
      $region97: #{option_compare_cell.1} parent=5 // pred_check
        %p4941 = pneg %p4940
      $region98: #{option_compare_cell.1} parent=5 // pred_check_branch
        %4943 = sbr.rel (%p4941) target = $region100
      $region99: #{option_compare_cell.1} parent=5 // pred_region
        %s4944 = ssub.s32 %s27, 2
        // Predicated region
        $region101: #{option_compare_cell.1} parent=99 // pred_check
          %p4945 = pneg %p454
        $region102: #{option_compare_cell.1} parent=99 // pred_check_branch
          %4947 = sbr.rel (%p4945) target = $region104
        $region103: #{option_compare_cell.1} parent=99 // pred_region
          %s4948 = sand.u32 %s439, 1
          %s4949 = scalar_lea.sflag [#allocation3], %s4948
          %s4950 = sand.u32 %s439, 1
          %s4951 = smul.addr %s4950, 4
          %s4952 = scalar_lea.vmem [#allocation2], %s4951
          %4953 = dma.done %s4949, 64
        $region104: #{option_compare_cell.1} parent=99 // pred_fallthru
          _
      $region100: #{option_compare_cell.1} parent=5 // pred_fallthru
        _
    $region6: #{option_compare_cell.1} parent=1 // loop_footer
      %s31 = sadd.s32 1, %s27
    $region7: #{option_compare_cell.1} parent=1 // loop_footer_branch
      %26 = sbr.rel target = $region3
    $region8: #{option_compare_cell.1} parent=1 // loop_exit
      _
    %4954 = vsyncpa [#allocation3], 1
    %s4955 = scalar_lea.sflag [#allocation3], 1
    %4956 = vsyncpa %s4955, 1

</llo_original>
